<compile_context>
chip_gen: v6e
topology: v6e:2x2x1
jax: 0.10.0
libtpu: 0.0.40
codegen_flags: <defaults>
</compile_context>

<pallas_src>
import functools

import jax
import jax.numpy as jnp
from jax.experimental import pallas as pl
from jax.experimental.pallas import tpu as pltpu


def _round_up(x, m):
    return ((x + m - 1) // m) * m


def _pick_tile(dim, candidates=(512, 256, 128)):
    for c in candidates:
        if dim % c == 0:
            return c
    return dim  # fall back to the full (unblocked) extent


# ---------------------------------------------------------------------------
# Kernel 1: full 2-layer LSTM recurrence in a single invocation.
# ---------------------------------------------------------------------------
def _lstm_seq_kernel(x_ref, w0_ref, b0_ref, w1_ref, b1_ref, hout_ref,
                     xin0_ref, xin1_ref):
    """x_ref:    (T, Bp, Ep)        compute dtype (bf16 or f32)
       w0_ref:   (Ep+Hp, 4*Hp)      fused [Wih0; Whh0], gate stride Hp
       b0_ref:   (1, 4*Hp)          combined b_ih + b_hh (f32)
       w1_ref:   (2*Hp, 4*Hp)       fused [Wih1; Whh1]
       b1_ref:   (1, 4*Hp)
       hout_ref: (T, Bp, Hp)        per-step top-layer hidden states
       xin0_ref: (Bp, Ep+Hp) VMEM   scratch slab for [x_t, h0]
       xin1_ref: (Bp, 2*Hp)  VMEM   scratch slab for [h0, h1]
    """
    T = x_ref.shape[0]
    Bp = x_ref.shape[1]
    Ep = x_ref.shape[2]
    Hp = b0_ref.shape[1] // 4

    # Hoisted once (not per time step): weights and biases.
    w0 = w0_ref[...]
    w1 = w1_ref[...]
    b0 = b0_ref[...]
    b1 = b1_ref[...]

    def gates_to_hc(gates, c_prev):
        # PyTorch gate order [i, f, g, o]; slices are 128-lane aligned (Hp%128==0).
        i = jax.nn.sigmoid(gates[:, 0 * Hp:1 * Hp])
        f = jax.nn.sigmoid(gates[:, 1 * Hp:2 * Hp])
        g = jnp.tanh(gates[:, 2 * Hp:3 * Hp])
        o = jax.nn.sigmoid(gates[:, 3 * Hp:4 * Hp])
        c_new = f * c_prev + i * g
        h_new = o * jnp.tanh(c_new)
        return h_new, c_new

    zeros_bh = jnp.zeros((Bp, Hp), jnp.float32)

    def step(t, carry):
        h0, c0, h1, c1 = carry

        # Layer 0: fused single matmul over K = Ep + Hp.
        xin0_ref[:, :Ep] = x_ref[t]
        xin0_ref[:, Ep:] = h0.astype(xin0_ref.dtype)
        g0 = jnp.dot(xin0_ref[...], w0, preferred_element_type=jnp.float32) + b0
        h0, c0 = gates_to_hc(g0, c0)

        # TODO(synk): inter-layer LSTM dropout + self.dropout are identity
        # (eval-mode forward); training-mode dropout masks are not implemented.

        # Layer 1.
        xin1_ref[:, :Hp] = h0.astype(xin1_ref.dtype)
        xin1_ref[:, Hp:] = h1.astype(xin1_ref.dtype)
        g1 = jnp.dot(xin1_ref[...], w1, preferred_element_type=jnp.float32) + b1
        h1, c1 = gates_to_hc(g1, c1)

        hout_ref[t] = h1.astype(hout_ref.dtype)
        return (h0, c0, h1, c1)

    jax.lax.fori_loop(0, T, step, (zeros_bh, zeros_bh, zeros_bh, zeros_bh),
                      unroll=True)


# ---------------------------------------------------------------------------
# Kernel 2: hoisted output projection  (T*Bp, Hp) @ (Hp, Vp) + b.
# ---------------------------------------------------------------------------
def _fc_kernel(h_ref, w_ref, b_ref, o_ref):
    o_ref[...] = (jnp.dot(h_ref[...], w_ref[...],
                          preferred_element_type=jnp.float32)
                  + b_ref[...]).astype(o_ref.dtype)


# ---------------------------------------------------------------------------
# Parameter padding / fusion (gate stride H -> Hp, [Wih; Whh] fusion).
# ---------------------------------------------------------------------------
def _pad_gate_mat(w, rows_p, H, Hp, dtype):
    rows = w.shape[0]
    w4 = w.reshape(rows, 4, H)
    w4 = jnp.pad(w4, ((0, rows_p - rows), (0, 0), (0, Hp - H)))
    return w4.reshape(rows_p, 4 * Hp).astype(dtype)


def _pad_gate_bias(b, H, Hp):
    b4 = b.reshape(4, H)
    b4 = jnp.pad(b4, ((0, 0), (0, Hp - H)))
    return b4.reshape(1, 4 * Hp).astype(jnp.float32)


# ---------------------------------------------------------------------------
# Wrapper: DecoderRNN.forward(features, captions)
# ---------------------------------------------------------------------------
def decoder_rnn_forward(features, captions, params, compute_dtype=jnp.bfloat16):
    """features: (B, E) f32; captions: (B, Lc) int32 -> logits (B, Lc, V) f32."""
    B, E = features.shape
    H = params["whh0"].shape[0]
    V = params["wfc"].shape[1]

    # ---- glue: embedding lookup + concat (batch_first) -> time-major ----
    caps = captions[:, :-1]                                        # (B, Lc-1)
    emb = jnp.take(params["embedding"], caps, axis=0)              # (B, Lc-1, E)
    x_bte = jnp.concatenate([features[:, None, :], emb], axis=1)   # (B, T, E)
    T = x_bte.shape[1]
    x_tbe = jnp.transpose(x_bte, (1, 0, 2)).astype(jnp.float32)    # (T, B, E)

    # ---- padding to TPU-friendly shapes ----
    Bp = _round_up(max(B, 8), 8)
    Ep = _round_up(E, 128)
    Hp = _round_up(H, 128)
    Vp = _round_up(V, 128)

    x_p = jnp.pad(x_tbe, ((0, 0), (0, Bp - B), (0, Ep - E))).astype(compute_dtype)

    # Fused + padded LSTM weights (zero padding keeps padded lanes exactly 0).
    w0 = jnp.concatenate(
        [_pad_gate_mat(params["wih0"], Ep, H, Hp, compute_dtype),
         _pad_gate_mat(params["whh0"], Hp, H, Hp, compute_dtype)], axis=0)
    w1 = jnp.concatenate(
        [_pad_gate_mat(params["wih1"], Hp, H, Hp, compute_dtype),
         _pad_gate_mat(params["whh1"], Hp, H, Hp, compute_dtype)], axis=0)
    b0 = _pad_gate_bias(params["b0"], H, Hp)
    b1 = _pad_gate_bias(params["b1"], H, Hp)
    wfc_p = jnp.pad(params["wfc"], ((0, Hp - H), (0, Vp - V))).astype(compute_dtype)
    bfc_p = jnp.pad(params["bfc"], ((0, 0), (0, Vp - V))).astype(jnp.float32)

    # ---- Pallas call 1: the recurrence (single invocation, loop inside) ----
    hout = pl.pallas_call(
        _lstm_seq_kernel,
        out_shape=jax.ShapeDtypeStruct((T, Bp, Hp), compute_dtype),
        grid_spec=pltpu.PrefetchScalarGridSpec(
            num_scalar_prefetch=0,
            grid=(1,),
            in_specs=[
                pl.BlockSpec((T, Bp, Ep), lambda i: (0, 0, 0)),       # x slab
                pl.BlockSpec((Ep + Hp, 4 * Hp), lambda i: (0, 0)),    # W0 fused
                pl.BlockSpec((1, 4 * Hp), lambda i: (0, 0)),          # b0
                pl.BlockSpec((2 * Hp, 4 * Hp), lambda i: (0, 0)),     # W1 fused
                pl.BlockSpec((1, 4 * Hp), lambda i: (0, 0)),          # b1
            ],
            out_specs=pl.BlockSpec((T, Bp, Hp), lambda i: (0, 0, 0)),
            scratch_shapes=[
                pltpu.VMEM((Bp, Ep + Hp), compute_dtype),  # [x_t, h0] slab
                pltpu.VMEM((Bp, 2 * Hp), compute_dtype),   # [h0, h1] slab
            ],
        ),
        compiler_params=pltpu.CompilerParams(
            dimension_semantics=("arbitrary",),  # sequential recurrence
        ),
    )(x_p, w0, b0, w1, b1)

    # ---- Pallas call 2: hoisted, batched fc projection ----
    Mp = T * Bp
    h_flat = hout.reshape(Mp, Hp)
    TM = _pick_tile(Mp)
    TN = _pick_tile(Vp)
    # TODO(synk): for very large H/V, additionally tile K and set
    # pltpu.CompilerParams(vmem_limit_bytes=...) to stay within v7x's 64 MiB.
    logits_p = pl.pallas_call(
        _fc_kernel,
        out_shape=jax.ShapeDtypeStruct((Mp, Vp), jnp.float32),
        grid_spec=pltpu.PrefetchScalarGridSpec(
            num_scalar_prefetch=0,
            grid=(Mp // TM, Vp // TN),
            in_specs=[
                pl.BlockSpec((TM, Hp), lambda i, j: (i, 0)),
                pl.BlockSpec((Hp, TN), lambda i, j: (0, j)),
                pl.BlockSpec((1, TN), lambda i, j: (0, j)),
            ],
            out_specs=pl.BlockSpec((TM, TN), lambda i, j: (i, j)),
        ),
        compiler_params=pltpu.CompilerParams(
            dimension_semantics=("parallel", "parallel"),
        ),
    )(h_flat, wfc_p, bfc_p)

    # ---- un-pad and return batch_first (B, T, V) ----
    logits = logits_p.reshape(T, Bp, Vp)[:, :B, :V]
    return jnp.transpose(logits, (1, 0, 2))


# ---------------------------------------------------------------------------
# Parameter init mirroring DecoderRNN.__init__ / init_weights (eval forward).
# ---------------------------------------------------------------------------
def init_params(key, embed_size, hidden_size, vocab_size):
    E, H, V = embed_size, hidden_size, vocab_size
    ks = jax.random.split(key, 8)
    s = 1.0 / jnp.sqrt(H)  # PyTorch LSTM default uniform scale

    def u(k, shape):
        return jax.random.uniform(k, shape, jnp.float32, -s, s)

    embedding = jax.random.normal(ks[0], (V, E), jnp.float32)

    # LSTM weights stored pre-transposed: (in, 4H), gate order [i, f, g, o].
    wih0 = u(ks[1], (E, 4 * H))
    whh0 = u(ks[2], (H, 4 * H))
    wih1 = u(ks[3], (H, 4 * H))
    whh1 = u(ks[4], (H, 4 * H))

    # Combined biases; init_weights sets forget-gate slice of BOTH b_ih and
    # b_hh to 1.0 -> combined forget bias 2.0.
    def make_bias(k):
        kih, khh = jax.random.split(k)
        b_ih = u(kih, (4 * H,)).at[H:2 * H].set(1.0)
        b_hh = u(khh, (4 * H,)).at[H:2 * H].set(1.0)
        return (b_ih + b_hh).reshape(1, 4 * H)

    b0 = make_bias(ks[5])
    b1 = make_bias(ks[6])

    # fc: xavier_normal_ weight (V, H) stored transposed as (H, V); bias 0.01.
    xav_std = jnp.sqrt(2.0 / (H + V))
    wfc = (xav_std * jax.random.normal(ks[7], (V, H), jnp.float32)).T
    bfc = jnp.full((1, V), 0.01, jnp.float32)

    return dict(embedding=embedding,
                wih0=wih0, whh0=whh0, b0=b0,
                wih1=wih1, whh1=whh1, b1=b1,
                wfc=wfc, bfc=bfc)


def reference_forward(features, captions, params):
    """Pure-JAX f32 reference of the same eval-mode forward."""
    caps = captions[:, :-1]
    emb = jnp.take(params["embedding"], caps, axis=0)
    x = jnp.concatenate([features[:, None, :], emb], axis=1)  # (B, T, E)
    B, T, _ = x.shape
    H = params["whh0"].shape[0]

    def cell(xt, h, c, wih, whh, b):
        gates = xt @ wih + h @ whh + b
        i = jax.nn.sigmoid(gates[:, 0 * H:1 * H])
        f = jax.nn.sigmoid(gates[:, 1 * H:2 * H])
        g = jnp.tanh(gates[:, 2 * H:3 * H])
        o = jax.nn.sigmoid(gates[:, 3 * H:4 * H])
        c = f * c + i * g
        h = o * jnp.tanh(c)
        return h, c

    h0 = c0 = h1 = c1 = jnp.zeros((B, H), jnp.float32)
    outs = []
    for t in range(T):
        h0, c0 = cell(x[:, t], h0, c0, params["wih0"], params["whh0"], params["b0"])
        h1, c1 = cell(h0, h1, c1, params["wih1"], params["whh1"], params["b1"])
        outs.append(h1 @ params["wfc"] + params["bfc"])
    return jnp.stack(outs, axis=1)


if __name__ == "__main__":
    B, E, H, V, Lc = 2, 32, 32, 64, 8  # small, forward-consistent shapes

    key = jax.random.PRNGKey(0)
    k_params, k_feat, k_cap = jax.random.split(key, 3)

    params = init_params(k_params, E, H, V)
    features = jax.random.normal(k_feat, (B, E), jnp.float32)
    captions = jax.random.randint(k_cap, (B, Lc), 0, V, jnp.int32)

    ref = reference_forward(features, captions, params)

    # f32 compute path: exact-semantics check.
    fwd_f32 = jax.jit(functools.partial(decoder_rnn_forward, params=params,
                                        compute_dtype=jnp.float32))
    out_f32 = fwd_f32(features, captions)
    jax.block_until_ready(out_f32)
    assert out_f32.shape == (B, Lc, V), out_f32.shape
    assert jnp.allclose(out_f32, ref, atol=1e-4, rtol=1e-4), "f32 mismatch vs reference"

    # bf16 matmul path (default fast path): looser tolerance.
    fwd_bf16 = jax.jit(functools.partial(decoder_rnn_forward, params=params,
                                         compute_dtype=jnp.bfloat16))
    out_bf16 = fwd_bf16(features, captions)
    jax.block_until_ready(out_bf16)
    assert out_bf16.shape == (B, Lc, V), out_bf16.shape
    assert jnp.allclose(out_bf16, ref, atol=3e-2, rtol=3e-2), "bf16 mismatch vs reference"

    print("KERNEL_OK")
</pallas_src>

<mosaic_0001>
module attributes {stable_mosaic.version = 11 : i64} {
  func.func @_fc_kernel(%arg0: i32, %arg1: i32, %arg2: memref<64x128xf32, #tpu.memory_space<vmem>>, %arg3: memref<128x128xf32, #tpu.memory_space<vmem>>, %arg4: memref<1x128xf32, #tpu.memory_space<vmem>>, %arg5: memref<64x128xf32, #tpu.memory_space<vmem>>) attributes {dimension_semantics = [#tpu.dimension_semantics<parallel>, #tpu.dimension_semantics<parallel>], iteration_bounds = array<i64: 1, 1>, scalar_prefetch = 0 : i64, scratch_operands = 0 : i64, tpu.core_type = #tpu.core_type<tc>, window_params = [{transform_indices = @transform_0, window_bounds = array<i64: 64, 128>}, {transform_indices = @transform_1, window_bounds = array<i64: 128, 128>}, {transform_indices = @transform_2, window_bounds = array<i64: 1, 128>}, {transform_indices = @transform_3, window_bounds = array<i64: 64, 128>}]} {
    %c0 = arith.constant 0 : index
    %c0_0 = arith.constant 0 : index
    %0 = vector.load %arg2[%c0, %c0_0] : memref<64x128xf32, #tpu.memory_space<vmem>>, vector<64x128xf32>
    %c0_1 = arith.constant 0 : index
    %c0_2 = arith.constant 0 : index
    %1 = vector.load %arg3[%c0_1, %c0_2] : memref<128x128xf32, #tpu.memory_space<vmem>>, vector<128x128xf32>
    %cst = arith.constant dense<0.000000e+00> : vector<64x128xf32>
    %2 = tpu.matmul %0, %1, %cst {dimension_numbers = #tpu.dot_dimension_numbers<[1], [0], [0], [1], [0, 0, 1, 1], [], []>} : vector<64x128xf32>, vector<128x128xf32>, vector<64x128xf32> -> vector<64x128xf32>
    %c0_3 = arith.constant 0 : index
    %c0_4 = arith.constant 0 : index
    %3 = vector.load %arg4[%c0_3, %c0_4] : memref<1x128xf32, #tpu.memory_space<vmem>>, vector<1x128xf32>
    %4 = vector.broadcast %3 : vector<1x128xf32> to vector<64x128xf32>
    %5 = arith.addf %2, %4 : vector<64x128xf32>
    %c0_5 = arith.constant 0 : index
    %c0_6 = arith.constant 0 : index
    %6 = vector.load %arg5[%c0_5, %c0_6] : memref<64x128xf32, #tpu.memory_space<vmem>>, vector<64x128xf32>
    tpu.vector_store %arg5[%c0_5, %c0_6], %5 {strides = array<i32>} : memref<64x128xf32, #tpu.memory_space<vmem>>, vector<64x128xf32>,
    return
  }
  func.func @transform_0(%arg0: i32, %arg1: i32) -> (i32, i32) {
    %c0_i32 = arith.constant 0 : i32
    %c0_i32_0 = arith.constant 0 : i32
    return %arg0, %c0_i32 : i32, i32
  }
  func.func @transform_1(%arg0: i32, %arg1: i32) -> (i32, i32) {
    %c0_i32 = arith.constant 0 : i32
    %c0_i32_0 = arith.constant 0 : i32
    return %c0_i32, %arg1 : i32, i32
  }
  func.func @transform_2(%arg0: i32, %arg1: i32) -> (i32, i32) {
    %c0_i32 = arith.constant 0 : i32
    %c0_i32_0 = arith.constant 0 : i32
    return %c0_i32, %arg1 : i32, i32
  }
  func.func @transform_3(%arg0: i32, %arg1: i32) -> (i32, i32) {
    %c0_i32 = arith.constant 0 : i32
    return %arg0, %arg1 : i32, i32
  }
}

module attributes {stable_mosaic.version = 11 : i64} {
  func.func @_lstm_seq_kernel(%arg0: i32, %arg1: memref<8x8x128xf32, #tpu.memory_space<vmem>>, %arg2: memref<256x512xf32, #tpu.memory_space<vmem>>, %arg3: memref<1x512xf32, #tpu.memory_space<vmem>>, %arg4: memref<256x512xf32, #tpu.memory_space<vmem>>, %arg5: memref<1x512xf32, #tpu.memory_space<vmem>>, %arg6: memref<8x8x128xf32, #tpu.memory_space<vmem>>, %arg7: memref<8x256xf32, #tpu.memory_space<vmem>>, %arg8: memref<8x256xf32, #tpu.memory_space<vmem>>) attributes {dimension_semantics = [#tpu.dimension_semantics<arbitrary>], iteration_bounds = array<i64: 1>, scalar_prefetch = 0 : i64, scratch_operands = 2 : i64, tpu.core_type = #tpu.core_type<tc>, window_params = [{pipeline_mode = #tpu.pipeline_mode<synchronous>, transform_indices = @transform_0, window_bounds = array<i64: 8, 8, 128>}, {pipeline_mode = #tpu.pipeline_mode<synchronous>, transform_indices = @transform_1, window_bounds = array<i64: 256, 512>}, {pipeline_mode = #tpu.pipeline_mode<synchronous>, transform_indices = @transform_2, window_bounds = array<i64: 1, 512>}, {pipeline_mode = #tpu.pipeline_mode<synchronous>, transform_indices = @transform_3, window_bounds = array<i64: 256, 512>}, {pipeline_mode = #tpu.pipeline_mode<synchronous>, transform_indices = @transform_4, window_bounds = array<i64: 1, 512>}, {pipeline_mode = #tpu.pipeline_mode<synchronous>, transform_indices = @transform_5, window_bounds = array<i64: 8, 8, 128>}]} {
    %c0 = arith.constant 0 : index
    %c0_0 = arith.constant 0 : index
    %0 = vector.load %arg2[%c0, %c0_0] : memref<256x512xf32, #tpu.memory_space<vmem>>, vector<256x512xf32>
    %c0_1 = arith.constant 0 : index
    %c0_2 = arith.constant 0 : index
    %1 = vector.load %arg4[%c0_1, %c0_2] : memref<256x512xf32, #tpu.memory_space<vmem>>, vector<256x512xf32>
    %c0_3 = arith.constant 0 : index
    %c0_4 = arith.constant 0 : index
    %2 = vector.load %arg3[%c0_3, %c0_4] : memref<1x512xf32, #tpu.memory_space<vmem>>, vector<1x512xf32>
    %c0_5 = arith.constant 0 : index
    %c0_6 = arith.constant 0 : index
    %3 = vector.load %arg5[%c0_5, %c0_6] : memref<1x512xf32, #tpu.memory_space<vmem>>, vector<1x512xf32>
    %cst = arith.constant 0.000000e+00 : f32
    %4 = vector.broadcast %cst : f32 to vector<8x128xf32>
    %c0_i32 = arith.constant 0 : i32
    %5 = arith.index_cast %c0_i32 : i32 to index
    %c0_7 = arith.constant 0 : index
    %c0_8 = arith.constant 0 : index
    %6 = vector.load %arg1[%5, %c0_7, %c0_8] : memref<8x8x128xf32, #tpu.memory_space<vmem>>, vector<1x8x128xf32>
    %7 = vector.shape_cast %6 : vector<1x8x128xf32> to vector<8x128xf32>
    %c0_9 = arith.constant 0 : index
    %c0_10 = arith.constant 0 : index
    %8 = vector.load %arg7[%c0_9, %c0_10] : memref<8x256xf32, #tpu.memory_space<vmem>>, vector<8x128xf32>
    tpu.vector_store %arg7[%c0_9, %c0_10], %7 {strides = array<i32>} : memref<8x256xf32, #tpu.memory_space<vmem>>, vector<8x128xf32>,
    %c0_11 = arith.constant 0 : index
    %c128 = arith.constant 128 : index
    %9 = vector.load %arg7[%c0_11, %c128] : memref<8x256xf32, #tpu.memory_space<vmem>>, vector<8x128xf32>
    tpu.vector_store %arg7[%c0_11, %c128], %4 {strides = array<i32>} : memref<8x256xf32, #tpu.memory_space<vmem>>, vector<8x128xf32>,
    %c0_12 = arith.constant 0 : index
    %c0_13 = arith.constant 0 : index
    %10 = vector.load %arg7[%c0_12, %c0_13] : memref<8x256xf32, #tpu.memory_space<vmem>>, vector<8x256xf32>
    %cst_14 = arith.constant dense<0.000000e+00> : vector<8x512xf32>
    %11 = tpu.matmul %10, %0, %cst_14 {dimension_numbers = #tpu.dot_dimension_numbers<[1], [0], [0], [1], [0, 0, 1, 1], [], []>} : vector<8x256xf32>, vector<256x512xf32>, vector<8x512xf32> -> vector<8x512xf32>
    %12 = vector.broadcast %2 : vector<1x512xf32> to vector<8x512xf32>
    %13 = arith.addf %11, %12 : vector<8x512xf32>
    %14 = vector.extract_strided_slice %13 {offsets = [0, 0], sizes = [8, 128], strides = [1, 1]} : vector<8x512xf32> to vector<8x128xf32>
    %15 = arith.negf %14 : vector<8x128xf32>
    %16 = math.exp %15 : vector<8x128xf32>
    %cst_15 = arith.constant 1.000000e+00 : f32
    %17 = vector.broadcast %cst_15 : f32 to vector<8x128xf32>
    %18 = arith.addf %17, %16 : vector<8x128xf32>
    %19 = arith.divf %17, %18 : vector<8x128xf32>
    %20 = vector.extract_strided_slice %13 {offsets = [0, 128], sizes = [8, 128], strides = [1, 1]} : vector<8x512xf32> to vector<8x128xf32>
    %21 = arith.negf %20 : vector<8x128xf32>
    %22 = math.exp %21 : vector<8x128xf32>
    %cst_16 = arith.constant 1.000000e+00 : f32
    %23 = vector.broadcast %cst_16 : f32 to vector<8x128xf32>
    %24 = arith.addf %23, %22 : vector<8x128xf32>
    %25 = arith.divf %23, %24 : vector<8x128xf32>
    %26 = vector.extract_strided_slice %13 {offsets = [0, 256], sizes = [8, 128], strides = [1, 1]} : vector<8x512xf32> to vector<8x128xf32>
    %27 = math.tanh %26 : vector<8x128xf32>
    %28 = vector.extract_strided_slice %13 {offsets = [0, 384], sizes = [8, 128], strides = [1, 1]} : vector<8x512xf32> to vector<8x128xf32>
    %29 = arith.negf %28 : vector<8x128xf32>
    %30 = math.exp %29 : vector<8x128xf32>
    %cst_17 = arith.constant 1.000000e+00 : f32
    %31 = vector.broadcast %cst_17 : f32 to vector<8x128xf32>
    %32 = arith.addf %31, %30 : vector<8x128xf32>
    %33 = arith.divf %31, %32 : vector<8x128xf32>
    %34 = arith.mulf %25, %4 : vector<8x128xf32>
    %35 = arith.mulf %19, %27 : vector<8x128xf32>
    %36 = arith.addf %34, %35 : vector<8x128xf32>
    %37 = math.tanh %36 : vector<8x128xf32>
    %38 = arith.mulf %33, %37 : vector<8x128xf32>
    %c0_18 = arith.constant 0 : index
    %c0_19 = arith.constant 0 : index
    %39 = vector.load %arg8[%c0_18, %c0_19] : memref<8x256xf32, #tpu.memory_space<vmem>>, vector<8x128xf32>
    tpu.vector_store %arg8[%c0_18, %c0_19], %38 {strides = array<i32>} : memref<8x256xf32, #tpu.memory_space<vmem>>, vector<8x128xf32>,
    %c0_20 = arith.constant 0 : index
    %c128_21 = arith.constant 128 : index
    %40 = vector.load %arg8[%c0_20, %c128_21] : memref<8x256xf32, #tpu.memory_space<vmem>>, vector<8x128xf32>
    tpu.vector_store %arg8[%c0_20, %c128_21], %4 {strides = array<i32>} : memref<8x256xf32, #tpu.memory_space<vmem>>, vector<8x128xf32>,
    %c0_22 = arith.constant 0 : index
    %c0_23 = arith.constant 0 : index
    %41 = vector.load %arg8[%c0_22, %c0_23] : memref<8x256xf32, #tpu.memory_space<vmem>>, vector<8x256xf32>
    %cst_24 = arith.constant dense<0.000000e+00> : vector<8x512xf32>
    %42 = tpu.matmul %41, %1, %cst_24 {dimension_numbers = #tpu.dot_dimension_numbers<[1], [0], [0], [1], [0, 0, 1, 1], [], []>} : vector<8x256xf32>, vector<256x512xf32>, vector<8x512xf32> -> vector<8x512xf32>
    %43 = vector.broadcast %3 : vector<1x512xf32> to vector<8x512xf32>
    %44 = arith.addf %42, %43 : vector<8x512xf32>
    %45 = vector.extract_strided_slice %44 {offsets = [0, 0], sizes = [8, 128], strides = [1, 1]} : vector<8x512xf32> to vector<8x128xf32>
    %46 = arith.negf %45 : vector<8x128xf32>
    %47 = math.exp %46 : vector<8x128xf32>
    %cst_25 = arith.constant 1.000000e+00 : f32
    %48 = vector.broadcast %cst_25 : f32 to vector<8x128xf32>
    %49 = arith.addf %48, %47 : vector<8x128xf32>
    %50 = arith.divf %48, %49 : vector<8x128xf32>
    %51 = vector.extract_strided_slice %44 {offsets = [0, 128], sizes = [8, 128], strides = [1, 1]} : vector<8x512xf32> to vector<8x128xf32>
    %52 = arith.negf %51 : vector<8x128xf32>
    %53 = math.exp %52 : vector<8x128xf32>
    %cst_26 = arith.constant 1.000000e+00 : f32
    %54 = vector.broadcast %cst_26 : f32 to vector<8x128xf32>
    %55 = arith.addf %54, %53 : vector<8x128xf32>
    %56 = arith.divf %54, %55 : vector<8x128xf32>
    %57 = vector.extract_strided_slice %44 {offsets = [0, 256], sizes = [8, 128], strides = [1, 1]} : vector<8x512xf32> to vector<8x128xf32>
    %58 = math.tanh %57 : vector<8x128xf32>
    %59 = vector.extract_strided_slice %44 {offsets = [0, 384], sizes = [8, 128], strides = [1, 1]} : vector<8x512xf32> to vector<8x128xf32>
    %60 = arith.negf %59 : vector<8x128xf32>
    %61 = math.exp %60 : vector<8x128xf32>
    %cst_27 = arith.constant 1.000000e+00 : f32
    %62 = vector.broadcast %cst_27 : f32 to vector<8x128xf32>
    %63 = arith.addf %62, %61 : vector<8x128xf32>
    %64 = arith.divf %62, %63 : vector<8x128xf32>
    %65 = arith.mulf %56, %4 : vector<8x128xf32>
    %66 = arith.mulf %50, %58 : vector<8x128xf32>
    %67 = arith.addf %65, %66 : vector<8x128xf32>
    %68 = math.tanh %67 : vector<8x128xf32>
    %69 = arith.mulf %64, %68 : vector<8x128xf32>
    %70 = arith.index_cast %c0_i32 : i32 to index
    %c0_28 = arith.constant 0 : index
    %c0_29 = arith.constant 0 : index
    %71 = vector.load %arg6[%70, %c0_28, %c0_29] : memref<8x8x128xf32, #tpu.memory_space<vmem>>, vector<1x8x128xf32>
    %72 = vector.shape_cast %71 : vector<1x8x128xf32> to vector<8x128xf32>
    %73 = vector.shape_cast %69 : vector<8x128xf32> to vector<1x8x128xf32>
    tpu.vector_store %arg6[%70, %c0_28, %c0_29], %73 {strides = array<i32>} : memref<8x8x128xf32, #tpu.memory_space<vmem>>, vector<1x8x128xf32>,
    %c1_i32 = arith.constant 1 : i32
    %74 = arith.index_cast %c1_i32 : i32 to index
    %c0_30 = arith.constant 0 : index
    %c0_31 = arith.constant 0 : index
    %75 = vector.load %arg1[%74, %c0_30, %c0_31] : memref<8x8x128xf32, #tpu.memory_space<vmem>>, vector<1x8x128xf32>
    %76 = vector.shape_cast %75 : vector<1x8x128xf32> to vector<8x128xf32>
    %c0_32 = arith.constant 0 : index
    %c0_33 = arith.constant 0 : index
    %77 = vector.load %arg7[%c0_32, %c0_33] : memref<8x256xf32, #tpu.memory_space<vmem>>, vector<8x128xf32>
    tpu.vector_store %arg7[%c0_32, %c0_33], %76 {strides = array<i32>} : memref<8x256xf32, #tpu.memory_space<vmem>>, vector<8x128xf32>,
    %c0_34 = arith.constant 0 : index
    %c128_35 = arith.constant 128 : index
    %78 = vector.load %arg7[%c0_34, %c128_35] : memref<8x256xf32, #tpu.memory_space<vmem>>, vector<8x128xf32>
    tpu.vector_store %arg7[%c0_34, %c128_35], %38 {strides = array<i32>} : memref<8x256xf32, #tpu.memory_space<vmem>>, vector<8x128xf32>,
    %c0_36 = arith.constant 0 : index
    %c0_37 = arith.constant 0 : index
    %79 = vector.load %arg7[%c0_36, %c0_37] : memref<8x256xf32, #tpu.memory_space<vmem>>, vector<8x256xf32>
    %cst_38 = arith.constant dense<0.000000e+00> : vector<8x512xf32>
    %80 = tpu.matmul %79, %0, %cst_38 {dimension_numbers = #tpu.dot_dimension_numbers<[1], [0], [0], [1], [0, 0, 1, 1], [], []>} : vector<8x256xf32>, vector<256x512xf32>, vector<8x512xf32> -> vector<8x512xf32>
    %81 = vector.broadcast %2 : vector<1x512xf32> to vector<8x512xf32>
    %82 = arith.addf %80, %81 : vector<8x512xf32>
    %83 = vector.extract_strided_slice %82 {offsets = [0, 0], sizes = [8, 128], strides = [1, 1]} : vector<8x512xf32> to vector<8x128xf32>
    %84 = arith.negf %83 : vector<8x128xf32>
    %85 = math.exp %84 : vector<8x128xf32>
    %cst_39 = arith.constant 1.000000e+00 : f32
    %86 = vector.broadcast %cst_39 : f32 to vector<8x128xf32>
    %87 = arith.addf %86, %85 : vector<8x128xf32>
    %88 = arith.divf %86, %87 : vector<8x128xf32>
    %89 = vector.extract_strided_slice %82 {offsets = [0, 128], sizes = [8, 128], strides = [1, 1]} : vector<8x512xf32> to vector<8x128xf32>
    %90 = arith.negf %89 : vector<8x128xf32>
    %91 = math.exp %90 : vector<8x128xf32>
    %cst_40 = arith.constant 1.000000e+00 : f32
    %92 = vector.broadcast %cst_40 : f32 to vector<8x128xf32>
    %93 = arith.addf %92, %91 : vector<8x128xf32>
    %94 = arith.divf %92, %93 : vector<8x128xf32>
    %95 = vector.extract_strided_slice %82 {offsets = [0, 256], sizes = [8, 128], strides = [1, 1]} : vector<8x512xf32> to vector<8x128xf32>
    %96 = math.tanh %95 : vector<8x128xf32>
    %97 = vector.extract_strided_slice %82 {offsets = [0, 384], sizes = [8, 128], strides = [1, 1]} : vector<8x512xf32> to vector<8x128xf32>
    %98 = arith.negf %97 : vector<8x128xf32>
    %99 = math.exp %98 : vector<8x128xf32>
    %cst_41 = arith.constant 1.000000e+00 : f32
    %100 = vector.broadcast %cst_41 : f32 to vector<8x128xf32>
    %101 = arith.addf %100, %99 : vector<8x128xf32>
    %102 = arith.divf %100, %101 : vector<8x128xf32>
    %103 = arith.mulf %94, %36 : vector<8x128xf32>
    %104 = arith.mulf %88, %96 : vector<8x128xf32>
    %105 = arith.addf %103, %104 : vector<8x128xf32>
    %106 = math.tanh %105 : vector<8x128xf32>
    %107 = arith.mulf %102, %106 : vector<8x128xf32>
    %c0_42 = arith.constant 0 : index
    %c0_43 = arith.constant 0 : index
    %108 = vector.load %arg8[%c0_42, %c0_43] : memref<8x256xf32, #tpu.memory_space<vmem>>, vector<8x128xf32>
    tpu.vector_store %arg8[%c0_42, %c0_43], %107 {strides = array<i32>} : memref<8x256xf32, #tpu.memory_space<vmem>>, vector<8x128xf32>,
    %c0_44 = arith.constant 0 : index
    %c128_45 = arith.constant 128 : index
    %109 = vector.load %arg8[%c0_44, %c128_45] : memref<8x256xf32, #tpu.memory_space<vmem>>, vector<8x128xf32>
    tpu.vector_store %arg8[%c0_44, %c128_45], %69 {strides = array<i32>} : memref<8x256xf32, #tpu.memory_space<vmem>>, vector<8x128xf32>,
    %c0_46 = arith.constant 0 : index
    %c0_47 = arith.constant 0 : index
    %110 = vector.load %arg8[%c0_46, %c0_47] : memref<8x256xf32, #tpu.memory_space<vmem>>, vector<8x256xf32>
    %cst_48 = arith.constant dense<0.000000e+00> : vector<8x512xf32>
    %111 = tpu.matmul %110, %1, %cst_48 {dimension_numbers = #tpu.dot_dimension_numbers<[1], [0], [0], [1], [0, 0, 1, 1], [], []>} : vector<8x256xf32>, vector<256x512xf32>, vector<8x512xf32> -> vector<8x512xf32>
    %112 = vector.broadcast %3 : vector<1x512xf32> to vector<8x512xf32>
    %113 = arith.addf %111, %112 : vector<8x512xf32>
    %114 = vector.extract_strided_slice %113 {offsets = [0, 0], sizes = [8, 128], strides = [1, 1]} : vector<8x512xf32> to vector<8x128xf32>
    %115 = arith.negf %114 : vector<8x128xf32>
    %116 = math.exp %115 : vector<8x128xf32>
    %cst_49 = arith.constant 1.000000e+00 : f32
    %117 = vector.broadcast %cst_49 : f32 to vector<8x128xf32>
    %118 = arith.addf %117, %116 : vector<8x128xf32>
    %119 = arith.divf %117, %118 : vector<8x128xf32>
    %120 = vector.extract_strided_slice %113 {offsets = [0, 128], sizes = [8, 128], strides = [1, 1]} : vector<8x512xf32> to vector<8x128xf32>
    %121 = arith.negf %120 : vector<8x128xf32>
    %122 = math.exp %121 : vector<8x128xf32>
    %cst_50 = arith.constant 1.000000e+00 : f32
    %123 = vector.broadcast %cst_50 : f32 to vector<8x128xf32>
    %124 = arith.addf %123, %122 : vector<8x128xf32>
    %125 = arith.divf %123, %124 : vector<8x128xf32>
    %126 = vector.extract_strided_slice %113 {offsets = [0, 256], sizes = [8, 128], strides = [1, 1]} : vector<8x512xf32> to vector<8x128xf32>
    %127 = math.tanh %126 : vector<8x128xf32>
    %128 = vector.extract_strided_slice %113 {offsets = [0, 384], sizes = [8, 128], strides = [1, 1]} : vector<8x512xf32> to vector<8x128xf32>
    %129 = arith.negf %128 : vector<8x128xf32>
    %130 = math.exp %129 : vector<8x128xf32>
    %cst_51 = arith.constant 1.000000e+00 : f32
    %131 = vector.broadcast %cst_51 : f32 to vector<8x128xf32>
    %132 = arith.addf %131, %130 : vector<8x128xf32>
    %133 = arith.divf %131, %132 : vector<8x128xf32>
    %134 = arith.mulf %125, %67 : vector<8x128xf32>
    %135 = arith.mulf %119, %127 : vector<8x128xf32>
    %136 = arith.addf %134, %135 : vector<8x128xf32>
    %137 = math.tanh %136 : vector<8x128xf32>
    %138 = arith.mulf %133, %137 : vector<8x128xf32>
    %139 = arith.index_cast %c1_i32 : i32 to index
    %c0_52 = arith.constant 0 : index
    %c0_53 = arith.constant 0 : index
    %140 = vector.load %arg6[%139, %c0_52, %c0_53] : memref<8x8x128xf32, #tpu.memory_space<vmem>>, vector<1x8x128xf32>
    %141 = vector.shape_cast %140 : vector<1x8x128xf32> to vector<8x128xf32>
    %142 = vector.shape_cast %138 : vector<8x128xf32> to vector<1x8x128xf32>
    tpu.vector_store %arg6[%139, %c0_52, %c0_53], %142 {strides = array<i32>} : memref<8x8x128xf32, #tpu.memory_space<vmem>>, vector<1x8x128xf32>,
    %c2_i32 = arith.constant 2 : i32
    %143 = arith.index_cast %c2_i32 : i32 to index
    %c0_54 = arith.constant 0 : index
    %c0_55 = arith.constant 0 : index
    %144 = vector.load %arg1[%143, %c0_54, %c0_55] : memref<8x8x128xf32, #tpu.memory_space<vmem>>, vector<1x8x128xf32>
    %145 = vector.shape_cast %144 : vector<1x8x128xf32> to vector<8x128xf32>
    %c0_56 = arith.constant 0 : index
    %c0_57 = arith.constant 0 : index
    %146 = vector.load %arg7[%c0_56, %c0_57] : memref<8x256xf32, #tpu.memory_space<vmem>>, vector<8x128xf32>
    tpu.vector_store %arg7[%c0_56, %c0_57], %145 {strides = array<i32>} : memref<8x256xf32, #tpu.memory_space<vmem>>, vector<8x128xf32>,
    %c0_58 = arith.constant 0 : index
    %c128_59 = arith.constant 128 : index
    %147 = vector.load %arg7[%c0_58, %c128_59] : memref<8x256xf32, #tpu.memory_space<vmem>>, vector<8x128xf32>
    tpu.vector_store %arg7[%c0_58, %c128_59], %107 {strides = array<i32>} : memref<8x256xf32, #tpu.memory_space<vmem>>, vector<8x128xf32>,
    %c0_60 = arith.constant 0 : index
    %c0_61 = arith.constant 0 : index
    %148 = vector.load %arg7[%c0_60, %c0_61] : memref<8x256xf32, #tpu.memory_space<vmem>>, vector<8x256xf32>
    %cst_62 = arith.constant dense<0.000000e+00> : vector<8x512xf32>
    %149 = tpu.matmul %148, %0, %cst_62 {dimension_numbers = #tpu.dot_dimension_numbers<[1], [0], [0], [1], [0, 0, 1, 1], [], []>} : vector<8x256xf32>, vector<256x512xf32>, vector<8x512xf32> -> vector<8x512xf32>
    %150 = vector.broadcast %2 : vector<1x512xf32> to vector<8x512xf32>
    %151 = arith.addf %149, %150 : vector<8x512xf32>
    %152 = vector.extract_strided_slice %151 {offsets = [0, 0], sizes = [8, 128], strides = [1, 1]} : vector<8x512xf32> to vector<8x128xf32>
    %153 = arith.negf %152 : vector<8x128xf32>
    %154 = math.exp %153 : vector<8x128xf32>
    %cst_63 = arith.constant 1.000000e+00 : f32
    %155 = vector.broadcast %cst_63 : f32 to vector<8x128xf32>
    %156 = arith.addf %155, %154 : vector<8x128xf32>
    %157 = arith.divf %155, %156 : vector<8x128xf32>
    %158 = vector.extract_strided_slice %151 {offsets = [0, 128], sizes = [8, 128], strides = [1, 1]} : vector<8x512xf32> to vector<8x128xf32>
    %159 = arith.negf %158 : vector<8x128xf32>
    %160 = math.exp %159 : vector<8x128xf32>
    %cst_64 = arith.constant 1.000000e+00 : f32
    %161 = vector.broadcast %cst_64 : f32 to vector<8x128xf32>
    %162 = arith.addf %161, %160 : vector<8x128xf32>
    %163 = arith.divf %161, %162 : vector<8x128xf32>
    %164 = vector.extract_strided_slice %151 {offsets = [0, 256], sizes = [8, 128], strides = [1, 1]} : vector<8x512xf32> to vector<8x128xf32>
    %165 = math.tanh %164 : vector<8x128xf32>
    %166 = vector.extract_strided_slice %151 {offsets = [0, 384], sizes = [8, 128], strides = [1, 1]} : vector<8x512xf32> to vector<8x128xf32>
    %167 = arith.negf %166 : vector<8x128xf32>
    %168 = math.exp %167 : vector<8x128xf32>
    %cst_65 = arith.constant 1.000000e+00 : f32
    %169 = vector.broadcast %cst_65 : f32 to vector<8x128xf32>
    %170 = arith.addf %169, %168 : vector<8x128xf32>
    %171 = arith.divf %169, %170 : vector<8x128xf32>
    %172 = arith.mulf %163, %105 : vector<8x128xf32>
    %173 = arith.mulf %157, %165 : vector<8x128xf32>
    %174 = arith.addf %172, %173 : vector<8x128xf32>
    %175 = math.tanh %174 : vector<8x128xf32>
    %176 = arith.mulf %171, %175 : vector<8x128xf32>
    %c0_66 = arith.constant 0 : index
    %c0_67 = arith.constant 0 : index
    %177 = vector.load %arg8[%c0_66, %c0_67] : memref<8x256xf32, #tpu.memory_space<vmem>>, vector<8x128xf32>
    tpu.vector_store %arg8[%c0_66, %c0_67], %176 {strides = array<i32>} : memref<8x256xf32, #tpu.memory_space<vmem>>, vector<8x128xf32>,
    %c0_68 = arith.constant 0 : index
    %c128_69 = arith.constant 128 : index
    %178 = vector.load %arg8[%c0_68, %c128_69] : memref<8x256xf32, #tpu.memory_space<vmem>>, vector<8x128xf32>
    tpu.vector_store %arg8[%c0_68, %c128_69], %138 {strides = array<i32>} : memref<8x256xf32, #tpu.memory_space<vmem>>, vector<8x128xf32>,
    %c0_70 = arith.constant 0 : index
    %c0_71 = arith.constant 0 : index
    %179 = vector.load %arg8[%c0_70, %c0_71] : memref<8x256xf32, #tpu.memory_space<vmem>>, vector<8x256xf32>
    %cst_72 = arith.constant dense<0.000000e+00> : vector<8x512xf32>
    %180 = tpu.matmul %179, %1, %cst_72 {dimension_numbers = #tpu.dot_dimension_numbers<[1], [0], [0], [1], [0, 0, 1, 1], [], []>} : vector<8x256xf32>, vector<256x512xf32>, vector<8x512xf32> -> vector<8x512xf32>
    %181 = vector.broadcast %3 : vector<1x512xf32> to vector<8x512xf32>
    %182 = arith.addf %180, %181 : vector<8x512xf32>
    %183 = vector.extract_strided_slice %182 {offsets = [0, 0], sizes = [8, 128], strides = [1, 1]} : vector<8x512xf32> to vector<8x128xf32>
    %184 = arith.negf %183 : vector<8x128xf32>
    %185 = math.exp %184 : vector<8x128xf32>
    %cst_73 = arith.constant 1.000000e+00 : f32
    %186 = vector.broadcast %cst_73 : f32 to vector<8x128xf32>
    %187 = arith.addf %186, %185 : vector<8x128xf32>
    %188 = arith.divf %186, %187 : vector<8x128xf32>
    %189 = vector.extract_strided_slice %182 {offsets = [0, 128], sizes = [8, 128], strides = [1, 1]} : vector<8x512xf32> to vector<8x128xf32>
    %190 = arith.negf %189 : vector<8x128xf32>
    %191 = math.exp %190 : vector<8x128xf32>
    %cst_74 = arith.constant 1.000000e+00 : f32
    %192 = vector.broadcast %cst_74 : f32 to vector<8x128xf32>
    %193 = arith.addf %192, %191 : vector<8x128xf32>
    %194 = arith.divf %192, %193 : vector<8x128xf32>
    %195 = vector.extract_strided_slice %182 {offsets = [0, 256], sizes = [8, 128], strides = [1, 1]} : vector<8x512xf32> to vector<8x128xf32>
    %196 = math.tanh %195 : vector<8x128xf32>
    %197 = vector.extract_strided_slice %182 {offsets = [0, 384], sizes = [8, 128], strides = [1, 1]} : vector<8x512xf32> to vector<8x128xf32>
    %198 = arith.negf %197 : vector<8x128xf32>
    %199 = math.exp %198 : vector<8x128xf32>
    %cst_75 = arith.constant 1.000000e+00 : f32
    %200 = vector.broadcast %cst_75 : f32 to vector<8x128xf32>
    %201 = arith.addf %200, %199 : vector<8x128xf32>
    %202 = arith.divf %200, %201 : vector<8x128xf32>
    %203 = arith.mulf %194, %136 : vector<8x128xf32>
    %204 = arith.mulf %188, %196 : vector<8x128xf32>
    %205 = arith.addf %203, %204 : vector<8x128xf32>
    %206 = math.tanh %205 : vector<8x128xf32>
    %207 = arith.mulf %202, %206 : vector<8x128xf32>
    %208 = arith.index_cast %c2_i32 : i32 to index
    %c0_76 = arith.constant 0 : index
    %c0_77 = arith.constant 0 : index
    %209 = vector.load %arg6[%208, %c0_76, %c0_77] : memref<8x8x128xf32, #tpu.memory_space<vmem>>, vector<1x8x128xf32>
    %210 = vector.shape_cast %209 : vector<1x8x128xf32> to vector<8x128xf32>
    %211 = vector.shape_cast %207 : vector<8x128xf32> to vector<1x8x128xf32>
    tpu.vector_store %arg6[%208, %c0_76, %c0_77], %211 {strides = array<i32>} : memref<8x8x128xf32, #tpu.memory_space<vmem>>, vector<1x8x128xf32>,
    %c3_i32 = arith.constant 3 : i32
    %212 = arith.index_cast %c3_i32 : i32 to index
    %c0_78 = arith.constant 0 : index
    %c0_79 = arith.constant 0 : index
    %213 = vector.load %arg1[%212, %c0_78, %c0_79] : memref<8x8x128xf32, #tpu.memory_space<vmem>>, vector<1x8x128xf32>
    %214 = vector.shape_cast %213 : vector<1x8x128xf32> to vector<8x128xf32>
    %c0_80 = arith.constant 0 : index
    %c0_81 = arith.constant 0 : index
    %215 = vector.load %arg7[%c0_80, %c0_81] : memref<8x256xf32, #tpu.memory_space<vmem>>, vector<8x128xf32>
    tpu.vector_store %arg7[%c0_80, %c0_81], %214 {strides = array<i32>} : memref<8x256xf32, #tpu.memory_space<vmem>>, vector<8x128xf32>,
    %c0_82 = arith.constant 0 : index
    %c128_83 = arith.constant 128 : index
    %216 = vector.load %arg7[%c0_82, %c128_83] : memref<8x256xf32, #tpu.memory_space<vmem>>, vector<8x128xf32>
    tpu.vector_store %arg7[%c0_82, %c128_83], %176 {strides = array<i32>} : memref<8x256xf32, #tpu.memory_space<vmem>>, vector<8x128xf32>,
    %c0_84 = arith.constant 0 : index
    %c0_85 = arith.constant 0 : index
    %217 = vector.load %arg7[%c0_84, %c0_85] : memref<8x256xf32, #tpu.memory_space<vmem>>, vector<8x256xf32>
    %cst_86 = arith.constant dense<0.000000e+00> : vector<8x512xf32>
    %218 = tpu.matmul %217, %0, %cst_86 {dimension_numbers = #tpu.dot_dimension_numbers<[1], [0], [0], [1], [0, 0, 1, 1], [], []>} : vector<8x256xf32>, vector<256x512xf32>, vector<8x512xf32> -> vector<8x512xf32>
    %219 = vector.broadcast %2 : vector<1x512xf32> to vector<8x512xf32>
    %220 = arith.addf %218, %219 : vector<8x512xf32>
    %221 = vector.extract_strided_slice %220 {offsets = [0, 0], sizes = [8, 128], strides = [1, 1]} : vector<8x512xf32> to vector<8x128xf32>
    %222 = arith.negf %221 : vector<8x128xf32>
    %223 = math.exp %222 : vector<8x128xf32>
    %cst_87 = arith.constant 1.000000e+00 : f32
    %224 = vector.broadcast %cst_87 : f32 to vector<8x128xf32>
    %225 = arith.addf %224, %223 : vector<8x128xf32>
    %226 = arith.divf %224, %225 : vector<8x128xf32>
    %227 = vector.extract_strided_slice %220 {offsets = [0, 128], sizes = [8, 128], strides = [1, 1]} : vector<8x512xf32> to vector<8x128xf32>
    %228 = arith.negf %227 : vector<8x128xf32>
    %229 = math.exp %228 : vector<8x128xf32>
    %cst_88 = arith.constant 1.000000e+00 : f32
    %230 = vector.broadcast %cst_88 : f32 to vector<8x128xf32>
    %231 = arith.addf %230, %229 : vector<8x128xf32>
    %232 = arith.divf %230, %231 : vector<8x128xf32>
    %233 = vector.extract_strided_slice %220 {offsets = [0, 256], sizes = [8, 128], strides = [1, 1]} : vector<8x512xf32> to vector<8x128xf32>
    %234 = math.tanh %233 : vector<8x128xf32>
    %235 = vector.extract_strided_slice %220 {offsets = [0, 384], sizes = [8, 128], strides = [1, 1]} : vector<8x512xf32> to vector<8x128xf32>
    %236 = arith.negf %235 : vector<8x128xf32>
    %237 = math.exp %236 : vector<8x128xf32>
    %cst_89 = arith.constant 1.000000e+00 : f32
    %238 = vector.broadcast %cst_89 : f32 to vector<8x128xf32>
    %239 = arith.addf %238, %237 : vector<8x128xf32>
    %240 = arith.divf %238, %239 : vector<8x128xf32>
    %241 = arith.mulf %232, %174 : vector<8x128xf32>
    %242 = arith.mulf %226, %234 : vector<8x128xf32>
    %243 = arith.addf %241, %242 : vector<8x128xf32>
    %244 = math.tanh %243 : vector<8x128xf32>
    %245 = arith.mulf %240, %244 : vector<8x128xf32>
    %c0_90 = arith.constant 0 : index
    %c0_91 = arith.constant 0 : index
    %246 = vector.load %arg8[%c0_90, %c0_91] : memref<8x256xf32, #tpu.memory_space<vmem>>, vector<8x128xf32>
    tpu.vector_store %arg8[%c0_90, %c0_91], %245 {strides = array<i32>} : memref<8x256xf32, #tpu.memory_space<vmem>>, vector<8x128xf32>,
    %c0_92 = arith.constant 0 : index
    %c128_93 = arith.constant 128 : index
    %247 = vector.load %arg8[%c0_92, %c128_93] : memref<8x256xf32, #tpu.memory_space<vmem>>, vector<8x128xf32>
    tpu.vector_store %arg8[%c0_92, %c128_93], %207 {strides = array<i32>} : memref<8x256xf32, #tpu.memory_space<vmem>>, vector<8x128xf32>,
    %c0_94 = arith.constant 0 : index
    %c0_95 = arith.constant 0 : index
    %248 = vector.load %arg8[%c0_94, %c0_95] : memref<8x256xf32, #tpu.memory_space<vmem>>, vector<8x256xf32>
    %cst_96 = arith.constant dense<0.000000e+00> : vector<8x512xf32>
    %249 = tpu.matmul %248, %1, %cst_96 {dimension_numbers = #tpu.dot_dimension_numbers<[1], [0], [0], [1], [0, 0, 1, 1], [], []>} : vector<8x256xf32>, vector<256x512xf32>, vector<8x512xf32> -> vector<8x512xf32>
    %250 = vector.broadcast %3 : vector<1x512xf32> to vector<8x512xf32>
    %251 = arith.addf %249, %250 : vector<8x512xf32>
    %252 = vector.extract_strided_slice %251 {offsets = [0, 0], sizes = [8, 128], strides = [1, 1]} : vector<8x512xf32> to vector<8x128xf32>
    %253 = arith.negf %252 : vector<8x128xf32>
    %254 = math.exp %253 : vector<8x128xf32>
    %cst_97 = arith.constant 1.000000e+00 : f32
    %255 = vector.broadcast %cst_97 : f32 to vector<8x128xf32>
    %256 = arith.addf %255, %254 : vector<8x128xf32>
    %257 = arith.divf %255, %256 : vector<8x128xf32>
    %258 = vector.extract_strided_slice %251 {offsets = [0, 128], sizes = [8, 128], strides = [1, 1]} : vector<8x512xf32> to vector<8x128xf32>
    %259 = arith.negf %258 : vector<8x128xf32>
    %260 = math.exp %259 : vector<8x128xf32>
    %cst_98 = arith.constant 1.000000e+00 : f32
    %261 = vector.broadcast %cst_98 : f32 to vector<8x128xf32>
    %262 = arith.addf %261, %260 : vector<8x128xf32>
    %263 = arith.divf %261, %262 : vector<8x128xf32>
    %264 = vector.extract_strided_slice %251 {offsets = [0, 256], sizes = [8, 128], strides = [1, 1]} : vector<8x512xf32> to vector<8x128xf32>
    %265 = math.tanh %264 : vector<8x128xf32>
    %266 = vector.extract_strided_slice %251 {offsets = [0, 384], sizes = [8, 128], strides = [1, 1]} : vector<8x512xf32> to vector<8x128xf32>
    %267 = arith.negf %266 : vector<8x128xf32>
    %268 = math.exp %267 : vector<8x128xf32>
    %cst_99 = arith.constant 1.000000e+00 : f32
    %269 = vector.broadcast %cst_99 : f32 to vector<8x128xf32>
    %270 = arith.addf %269, %268 : vector<8x128xf32>
    %271 = arith.divf %269, %270 : vector<8x128xf32>
    %272 = arith.mulf %263, %205 : vector<8x128xf32>
    %273 = arith.mulf %257, %265 : vector<8x128xf32>
    %274 = arith.addf %272, %273 : vector<8x128xf32>
    %275 = math.tanh %274 : vector<8x128xf32>
    %276 = arith.mulf %271, %275 : vector<8x128xf32>
    %277 = arith.index_cast %c3_i32 : i32 to index
    %c0_100 = arith.constant 0 : index
    %c0_101 = arith.constant 0 : index
    %278 = vector.load %arg6[%277, %c0_100, %c0_101] : memref<8x8x128xf32, #tpu.memory_space<vmem>>, vector<1x8x128xf32>
    %279 = vector.shape_cast %278 : vector<1x8x128xf32> to vector<8x128xf32>
    %280 = vector.shape_cast %276 : vector<8x128xf32> to vector<1x8x128xf32>
    tpu.vector_store %arg6[%277, %c0_100, %c0_101], %280 {strides = array<i32>} : memref<8x8x128xf32, #tpu.memory_space<vmem>>, vector<1x8x128xf32>,
    %c4_i32 = arith.constant 4 : i32
    %281 = arith.index_cast %c4_i32 : i32 to index
    %c0_102 = arith.constant 0 : index
    %c0_103 = arith.constant 0 : index
    %282 = vector.load %arg1[%281, %c0_102, %c0_103] : memref<8x8x128xf32, #tpu.memory_space<vmem>>, vector<1x8x128xf32>
    %283 = vector.shape_cast %282 : vector<1x8x128xf32> to vector<8x128xf32>
    %c0_104 = arith.constant 0 : index
    %c0_105 = arith.constant 0 : index
    %284 = vector.load %arg7[%c0_104, %c0_105] : memref<8x256xf32, #tpu.memory_space<vmem>>, vector<8x128xf32>
    tpu.vector_store %arg7[%c0_104, %c0_105], %283 {strides = array<i32>} : memref<8x256xf32, #tpu.memory_space<vmem>>, vector<8x128xf32>,
    %c0_106 = arith.constant 0 : index
    %c128_107 = arith.constant 128 : index
    %285 = vector.load %arg7[%c0_106, %c128_107] : memref<8x256xf32, #tpu.memory_space<vmem>>, vector<8x128xf32>
    tpu.vector_store %arg7[%c0_106, %c128_107], %245 {strides = array<i32>} : memref<8x256xf32, #tpu.memory_space<vmem>>, vector<8x128xf32>,
    %c0_108 = arith.constant 0 : index
    %c0_109 = arith.constant 0 : index
    %286 = vector.load %arg7[%c0_108, %c0_109] : memref<8x256xf32, #tpu.memory_space<vmem>>, vector<8x256xf32>
    %cst_110 = arith.constant dense<0.000000e+00> : vector<8x512xf32>
    %287 = tpu.matmul %286, %0, %cst_110 {dimension_numbers = #tpu.dot_dimension_numbers<[1], [0], [0], [1], [0, 0, 1, 1], [], []>} : vector<8x256xf32>, vector<256x512xf32>, vector<8x512xf32> -> vector<8x512xf32>
    %288 = vector.broadcast %2 : vector<1x512xf32> to vector<8x512xf32>
    %289 = arith.addf %287, %288 : vector<8x512xf32>
    %290 = vector.extract_strided_slice %289 {offsets = [0, 0], sizes = [8, 128], strides = [1, 1]} : vector<8x512xf32> to vector<8x128xf32>
    %291 = arith.negf %290 : vector<8x128xf32>
    %292 = math.exp %291 : vector<8x128xf32>
    %cst_111 = arith.constant 1.000000e+00 : f32
    %293 = vector.broadcast %cst_111 : f32 to vector<8x128xf32>
    %294 = arith.addf %293, %292 : vector<8x128xf32>
    %295 = arith.divf %293, %294 : vector<8x128xf32>
    %296 = vector.extract_strided_slice %289 {offsets = [0, 128], sizes = [8, 128], strides = [1, 1]} : vector<8x512xf32> to vector<8x128xf32>
    %297 = arith.negf %296 : vector<8x128xf32>
    %298 = math.exp %297 : vector<8x128xf32>
    %cst_112 = arith.constant 1.000000e+00 : f32
    %299 = vector.broadcast %cst_112 : f32 to vector<8x128xf32>
    %300 = arith.addf %299, %298 : vector<8x128xf32>
    %301 = arith.divf %299, %300 : vector<8x128xf32>
    %302 = vector.extract_strided_slice %289 {offsets = [0, 256], sizes = [8, 128], strides = [1, 1]} : vector<8x512xf32> to vector<8x128xf32>
    %303 = math.tanh %302 : vector<8x128xf32>
    %304 = vector.extract_strided_slice %289 {offsets = [0, 384], sizes = [8, 128], strides = [1, 1]} : vector<8x512xf32> to vector<8x128xf32>
    %305 = arith.negf %304 : vector<8x128xf32>
    %306 = math.exp %305 : vector<8x128xf32>
    %cst_113 = arith.constant 1.000000e+00 : f32
    %307 = vector.broadcast %cst_113 : f32 to vector<8x128xf32>
    %308 = arith.addf %307, %306 : vector<8x128xf32>
    %309 = arith.divf %307, %308 : vector<8x128xf32>
    %310 = arith.mulf %301, %243 : vector<8x128xf32>
    %311 = arith.mulf %295, %303 : vector<8x128xf32>
    %312 = arith.addf %310, %311 : vector<8x128xf32>
    %313 = math.tanh %312 : vector<8x128xf32>
    %314 = arith.mulf %309, %313 : vector<8x128xf32>
    %c0_114 = arith.constant 0 : index
    %c0_115 = arith.constant 0 : index
    %315 = vector.load %arg8[%c0_114, %c0_115] : memref<8x256xf32, #tpu.memory_space<vmem>>, vector<8x128xf32>
    tpu.vector_store %arg8[%c0_114, %c0_115], %314 {strides = array<i32>} : memref<8x256xf32, #tpu.memory_space<vmem>>, vector<8x128xf32>,
    %c0_116 = arith.constant 0 : index
    %c128_117 = arith.constant 128 : index
    %316 = vector.load %arg8[%c0_116, %c128_117] : memref<8x256xf32, #tpu.memory_space<vmem>>, vector<8x128xf32>
    tpu.vector_store %arg8[%c0_116, %c128_117], %276 {strides = array<i32>} : memref<8x256xf32, #tpu.memory_space<vmem>>, vector<8x128xf32>,
    %c0_118 = arith.constant 0 : index
    %c0_119 = arith.constant 0 : index
    %317 = vector.load %arg8[%c0_118, %c0_119] : memref<8x256xf32, #tpu.memory_space<vmem>>, vector<8x256xf32>
    %cst_120 = arith.constant dense<0.000000e+00> : vector<8x512xf32>
    %318 = tpu.matmul %317, %1, %cst_120 {dimension_numbers = #tpu.dot_dimension_numbers<[1], [0], [0], [1], [0, 0, 1, 1], [], []>} : vector<8x256xf32>, vector<256x512xf32>, vector<8x512xf32> -> vector<8x512xf32>
    %319 = vector.broadcast %3 : vector<1x512xf32> to vector<8x512xf32>
    %320 = arith.addf %318, %319 : vector<8x512xf32>
    %321 = vector.extract_strided_slice %320 {offsets = [0, 0], sizes = [8, 128], strides = [1, 1]} : vector<8x512xf32> to vector<8x128xf32>
    %322 = arith.negf %321 : vector<8x128xf32>
    %323 = math.exp %322 : vector<8x128xf32>
    %cst_121 = arith.constant 1.000000e+00 : f32
    %324 = vector.broadcast %cst_121 : f32 to vector<8x128xf32>
    %325 = arith.addf %324, %323 : vector<8x128xf32>
    %326 = arith.divf %324, %325 : vector<8x128xf32>
    %327 = vector.extract_strided_slice %320 {offsets = [0, 128], sizes = [8, 128], strides = [1, 1]} : vector<8x512xf32> to vector<8x128xf32>
    %328 = arith.negf %327 : vector<8x128xf32>
    %329 = math.exp %328 : vector<8x128xf32>
    %cst_122 = arith.constant 1.000000e+00 : f32
    %330 = vector.broadcast %cst_122 : f32 to vector<8x128xf32>
    %331 = arith.addf %330, %329 : vector<8x128xf32>
    %332 = arith.divf %330, %331 : vector<8x128xf32>
    %333 = vector.extract_strided_slice %320 {offsets = [0, 256], sizes = [8, 128], strides = [1, 1]} : vector<8x512xf32> to vector<8x128xf32>
    %334 = math.tanh %333 : vector<8x128xf32>
    %335 = vector.extract_strided_slice %320 {offsets = [0, 384], sizes = [8, 128], strides = [1, 1]} : vector<8x512xf32> to vector<8x128xf32>
    %336 = arith.negf %335 : vector<8x128xf32>
    %337 = math.exp %336 : vector<8x128xf32>
    %cst_123 = arith.constant 1.000000e+00 : f32
    %338 = vector.broadcast %cst_123 : f32 to vector<8x128xf32>
    %339 = arith.addf %338, %337 : vector<8x128xf32>
    %340 = arith.divf %338, %339 : vector<8x128xf32>
    %341 = arith.mulf %332, %274 : vector<8x128xf32>
    %342 = arith.mulf %326, %334 : vector<8x128xf32>
    %343 = arith.addf %341, %342 : vector<8x128xf32>
    %344 = math.tanh %343 : vector<8x128xf32>
    %345 = arith.mulf %340, %344 : vector<8x128xf32>
    %346 = arith.index_cast %c4_i32 : i32 to index
    %c0_124 = arith.constant 0 : index
    %c0_125 = arith.constant 0 : index
    %347 = vector.load %arg6[%346, %c0_124, %c0_125] : memref<8x8x128xf32, #tpu.memory_space<vmem>>, vector<1x8x128xf32>
    %348 = vector.shape_cast %347 : vector<1x8x128xf32> to vector<8x128xf32>
    %349 = vector.shape_cast %345 : vector<8x128xf32> to vector<1x8x128xf32>
    tpu.vector_store %arg6[%346, %c0_124, %c0_125], %349 {strides = array<i32>} : memref<8x8x128xf32, #tpu.memory_space<vmem>>, vector<1x8x128xf32>,
    %c5_i32 = arith.constant 5 : i32
    %350 = arith.index_cast %c5_i32 : i32 to index
    %c0_126 = arith.constant 0 : index
    %c0_127 = arith.constant 0 : index
    %351 = vector.load %arg1[%350, %c0_126, %c0_127] : memref<8x8x128xf32, #tpu.memory_space<vmem>>, vector<1x8x128xf32>
    %352 = vector.shape_cast %351 : vector<1x8x128xf32> to vector<8x128xf32>
    %c0_128 = arith.constant 0 : index
    %c0_129 = arith.constant 0 : index
    %353 = vector.load %arg7[%c0_128, %c0_129] : memref<8x256xf32, #tpu.memory_space<vmem>>, vector<8x128xf32>
    tpu.vector_store %arg7[%c0_128, %c0_129], %352 {strides = array<i32>} : memref<8x256xf32, #tpu.memory_space<vmem>>, vector<8x128xf32>,
    %c0_130 = arith.constant 0 : index
    %c128_131 = arith.constant 128 : index
    %354 = vector.load %arg7[%c0_130, %c128_131] : memref<8x256xf32, #tpu.memory_space<vmem>>, vector<8x128xf32>
    tpu.vector_store %arg7[%c0_130, %c128_131], %314 {strides = array<i32>} : memref<8x256xf32, #tpu.memory_space<vmem>>, vector<8x128xf32>,
    %c0_132 = arith.constant 0 : index
    %c0_133 = arith.constant 0 : index
    %355 = vector.load %arg7[%c0_132, %c0_133] : memref<8x256xf32, #tpu.memory_space<vmem>>, vector<8x256xf32>
    %cst_134 = arith.constant dense<0.000000e+00> : vector<8x512xf32>
    %356 = tpu.matmul %355, %0, %cst_134 {dimension_numbers = #tpu.dot_dimension_numbers<[1], [0], [0], [1], [0, 0, 1, 1], [], []>} : vector<8x256xf32>, vector<256x512xf32>, vector<8x512xf32> -> vector<8x512xf32>
    %357 = vector.broadcast %2 : vector<1x512xf32> to vector<8x512xf32>
    %358 = arith.addf %356, %357 : vector<8x512xf32>
    %359 = vector.extract_strided_slice %358 {offsets = [0, 0], sizes = [8, 128], strides = [1, 1]} : vector<8x512xf32> to vector<8x128xf32>
    %360 = arith.negf %359 : vector<8x128xf32>
    %361 = math.exp %360 : vector<8x128xf32>
    %cst_135 = arith.constant 1.000000e+00 : f32
    %362 = vector.broadcast %cst_135 : f32 to vector<8x128xf32>
    %363 = arith.addf %362, %361 : vector<8x128xf32>
    %364 = arith.divf %362, %363 : vector<8x128xf32>
    %365 = vector.extract_strided_slice %358 {offsets = [0, 128], sizes = [8, 128], strides = [1, 1]} : vector<8x512xf32> to vector<8x128xf32>
    %366 = arith.negf %365 : vector<8x128xf32>
    %367 = math.exp %366 : vector<8x128xf32>
    %cst_136 = arith.constant 1.000000e+00 : f32
    %368 = vector.broadcast %cst_136 : f32 to vector<8x128xf32>
    %369 = arith.addf %368, %367 : vector<8x128xf32>
    %370 = arith.divf %368, %369 : vector<8x128xf32>
    %371 = vector.extract_strided_slice %358 {offsets = [0, 256], sizes = [8, 128], strides = [1, 1]} : vector<8x512xf32> to vector<8x128xf32>
    %372 = math.tanh %371 : vector<8x128xf32>
    %373 = vector.extract_strided_slice %358 {offsets = [0, 384], sizes = [8, 128], strides = [1, 1]} : vector<8x512xf32> to vector<8x128xf32>
    %374 = arith.negf %373 : vector<8x128xf32>
    %375 = math.exp %374 : vector<8x128xf32>
    %cst_137 = arith.constant 1.000000e+00 : f32
    %376 = vector.broadcast %cst_137 : f32 to vector<8x128xf32>
    %377 = arith.addf %376, %375 : vector<8x128xf32>
    %378 = arith.divf %376, %377 : vector<8x128xf32>
    %379 = arith.mulf %370, %312 : vector<8x128xf32>
    %380 = arith.mulf %364, %372 : vector<8x128xf32>
    %381 = arith.addf %379, %380 : vector<8x128xf32>
    %382 = math.tanh %381 : vector<8x128xf32>
    %383 = arith.mulf %378, %382 : vector<8x128xf32>
    %c0_138 = arith.constant 0 : index
    %c0_139 = arith.constant 0 : index
    %384 = vector.load %arg8[%c0_138, %c0_139] : memref<8x256xf32, #tpu.memory_space<vmem>>, vector<8x128xf32>
    tpu.vector_store %arg8[%c0_138, %c0_139], %383 {strides = array<i32>} : memref<8x256xf32, #tpu.memory_space<vmem>>, vector<8x128xf32>,
    %c0_140 = arith.constant 0 : index
    %c128_141 = arith.constant 128 : index
    %385 = vector.load %arg8[%c0_140, %c128_141] : memref<8x256xf32, #tpu.memory_space<vmem>>, vector<8x128xf32>
    tpu.vector_store %arg8[%c0_140, %c128_141], %345 {strides = array<i32>} : memref<8x256xf32, #tpu.memory_space<vmem>>, vector<8x128xf32>,
    %c0_142 = arith.constant 0 : index
    %c0_143 = arith.constant 0 : index
    %386 = vector.load %arg8[%c0_142, %c0_143] : memref<8x256xf32, #tpu.memory_space<vmem>>, vector<8x256xf32>
    %cst_144 = arith.constant dense<0.000000e+00> : vector<8x512xf32>
    %387 = tpu.matmul %386, %1, %cst_144 {dimension_numbers = #tpu.dot_dimension_numbers<[1], [0], [0], [1], [0, 0, 1, 1], [], []>} : vector<8x256xf32>, vector<256x512xf32>, vector<8x512xf32> -> vector<8x512xf32>
    %388 = vector.broadcast %3 : vector<1x512xf32> to vector<8x512xf32>
    %389 = arith.addf %387, %388 : vector<8x512xf32>
    %390 = vector.extract_strided_slice %389 {offsets = [0, 0], sizes = [8, 128], strides = [1, 1]} : vector<8x512xf32> to vector<8x128xf32>
    %391 = arith.negf %390 : vector<8x128xf32>
    %392 = math.exp %391 : vector<8x128xf32>
    %cst_145 = arith.constant 1.000000e+00 : f32
    %393 = vector.broadcast %cst_145 : f32 to vector<8x128xf32>
    %394 = arith.addf %393, %392 : vector<8x128xf32>
    %395 = arith.divf %393, %394 : vector<8x128xf32>
    %396 = vector.extract_strided_slice %389 {offsets = [0, 128], sizes = [8, 128], strides = [1, 1]} : vector<8x512xf32> to vector<8x128xf32>
    %397 = arith.negf %396 : vector<8x128xf32>
    %398 = math.exp %397 : vector<8x128xf32>
    %cst_146 = arith.constant 1.000000e+00 : f32
    %399 = vector.broadcast %cst_146 : f32 to vector<8x128xf32>
    %400 = arith.addf %399, %398 : vector<8x128xf32>
    %401 = arith.divf %399, %400 : vector<8x128xf32>
    %402 = vector.extract_strided_slice %389 {offsets = [0, 256], sizes = [8, 128], strides = [1, 1]} : vector<8x512xf32> to vector<8x128xf32>
    %403 = math.tanh %402 : vector<8x128xf32>
    %404 = vector.extract_strided_slice %389 {offsets = [0, 384], sizes = [8, 128], strides = [1, 1]} : vector<8x512xf32> to vector<8x128xf32>
    %405 = arith.negf %404 : vector<8x128xf32>
    %406 = math.exp %405 : vector<8x128xf32>
    %cst_147 = arith.constant 1.000000e+00 : f32
    %407 = vector.broadcast %cst_147 : f32 to vector<8x128xf32>
    %408 = arith.addf %407, %406 : vector<8x128xf32>
    %409 = arith.divf %407, %408 : vector<8x128xf32>
    %410 = arith.mulf %401, %343 : vector<8x128xf32>
    %411 = arith.mulf %395, %403 : vector<8x128xf32>
    %412 = arith.addf %410, %411 : vector<8x128xf32>
    %413 = math.tanh %412 : vector<8x128xf32>
    %414 = arith.mulf %409, %413 : vector<8x128xf32>
    %415 = arith.index_cast %c5_i32 : i32 to index
    %c0_148 = arith.constant 0 : index
    %c0_149 = arith.constant 0 : index
    %416 = vector.load %arg6[%415, %c0_148, %c0_149] : memref<8x8x128xf32, #tpu.memory_space<vmem>>, vector<1x8x128xf32>
    %417 = vector.shape_cast %416 : vector<1x8x128xf32> to vector<8x128xf32>
    %418 = vector.shape_cast %414 : vector<8x128xf32> to vector<1x8x128xf32>
    tpu.vector_store %arg6[%415, %c0_148, %c0_149], %418 {strides = array<i32>} : memref<8x8x128xf32, #tpu.memory_space<vmem>>, vector<1x8x128xf32>,
    %c6_i32 = arith.constant 6 : i32
    %419 = arith.index_cast %c6_i32 : i32 to index
    %c0_150 = arith.constant 0 : index
    %c0_151 = arith.constant 0 : index
    %420 = vector.load %arg1[%419, %c0_150, %c0_151] : memref<8x8x128xf32, #tpu.memory_space<vmem>>, vector<1x8x128xf32>
    %421 = vector.shape_cast %420 : vector<1x8x128xf32> to vector<8x128xf32>
    %c0_152 = arith.constant 0 : index
    %c0_153 = arith.constant 0 : index
    %422 = vector.load %arg7[%c0_152, %c0_153] : memref<8x256xf32, #tpu.memory_space<vmem>>, vector<8x128xf32>
    tpu.vector_store %arg7[%c0_152, %c0_153], %421 {strides = array<i32>} : memref<8x256xf32, #tpu.memory_space<vmem>>, vector<8x128xf32>,
    %c0_154 = arith.constant 0 : index
    %c128_155 = arith.constant 128 : index
    %423 = vector.load %arg7[%c0_154, %c128_155] : memref<8x256xf32, #tpu.memory_space<vmem>>, vector<8x128xf32>
    tpu.vector_store %arg7[%c0_154, %c128_155], %383 {strides = array<i32>} : memref<8x256xf32, #tpu.memory_space<vmem>>, vector<8x128xf32>,
    %c0_156 = arith.constant 0 : index
    %c0_157 = arith.constant 0 : index
    %424 = vector.load %arg7[%c0_156, %c0_157] : memref<8x256xf32, #tpu.memory_space<vmem>>, vector<8x256xf32>
    %cst_158 = arith.constant dense<0.000000e+00> : vector<8x512xf32>
    %425 = tpu.matmul %424, %0, %cst_158 {dimension_numbers = #tpu.dot_dimension_numbers<[1], [0], [0], [1], [0, 0, 1, 1], [], []>} : vector<8x256xf32>, vector<256x512xf32>, vector<8x512xf32> -> vector<8x512xf32>
    %426 = vector.broadcast %2 : vector<1x512xf32> to vector<8x512xf32>
    %427 = arith.addf %425, %426 : vector<8x512xf32>
    %428 = vector.extract_strided_slice %427 {offsets = [0, 0], sizes = [8, 128], strides = [1, 1]} : vector<8x512xf32> to vector<8x128xf32>
    %429 = arith.negf %428 : vector<8x128xf32>
    %430 = math.exp %429 : vector<8x128xf32>
    %cst_159 = arith.constant 1.000000e+00 : f32
    %431 = vector.broadcast %cst_159 : f32 to vector<8x128xf32>
    %432 = arith.addf %431, %430 : vector<8x128xf32>
    %433 = arith.divf %431, %432 : vector<8x128xf32>
    %434 = vector.extract_strided_slice %427 {offsets = [0, 128], sizes = [8, 128], strides = [1, 1]} : vector<8x512xf32> to vector<8x128xf32>
    %435 = arith.negf %434 : vector<8x128xf32>
    %436 = math.exp %435 : vector<8x128xf32>
    %cst_160 = arith.constant 1.000000e+00 : f32
    %437 = vector.broadcast %cst_160 : f32 to vector<8x128xf32>
    %438 = arith.addf %437, %436 : vector<8x128xf32>
    %439 = arith.divf %437, %438 : vector<8x128xf32>
    %440 = vector.extract_strided_slice %427 {offsets = [0, 256], sizes = [8, 128], strides = [1, 1]} : vector<8x512xf32> to vector<8x128xf32>
    %441 = math.tanh %440 : vector<8x128xf32>
    %442 = vector.extract_strided_slice %427 {offsets = [0, 384], sizes = [8, 128], strides = [1, 1]} : vector<8x512xf32> to vector<8x128xf32>
    %443 = arith.negf %442 : vector<8x128xf32>
    %444 = math.exp %443 : vector<8x128xf32>
    %cst_161 = arith.constant 1.000000e+00 : f32
    %445 = vector.broadcast %cst_161 : f32 to vector<8x128xf32>
    %446 = arith.addf %445, %444 : vector<8x128xf32>
    %447 = arith.divf %445, %446 : vector<8x128xf32>
    %448 = arith.mulf %439, %381 : vector<8x128xf32>
    %449 = arith.mulf %433, %441 : vector<8x128xf32>
    %450 = arith.addf %448, %449 : vector<8x128xf32>
    %451 = math.tanh %450 : vector<8x128xf32>
    %452 = arith.mulf %447, %451 : vector<8x128xf32>
    %c0_162 = arith.constant 0 : index
    %c0_163 = arith.constant 0 : index
    %453 = vector.load %arg8[%c0_162, %c0_163] : memref<8x256xf32, #tpu.memory_space<vmem>>, vector<8x128xf32>
    tpu.vector_store %arg8[%c0_162, %c0_163], %452 {strides = array<i32>} : memref<8x256xf32, #tpu.memory_space<vmem>>, vector<8x128xf32>,
    %c0_164 = arith.constant 0 : index
    %c128_165 = arith.constant 128 : index
    %454 = vector.load %arg8[%c0_164, %c128_165] : memref<8x256xf32, #tpu.memory_space<vmem>>, vector<8x128xf32>
    tpu.vector_store %arg8[%c0_164, %c128_165], %414 {strides = array<i32>} : memref<8x256xf32, #tpu.memory_space<vmem>>, vector<8x128xf32>,
    %c0_166 = arith.constant 0 : index
    %c0_167 = arith.constant 0 : index
    %455 = vector.load %arg8[%c0_166, %c0_167] : memref<8x256xf32, #tpu.memory_space<vmem>>, vector<8x256xf32>
    %cst_168 = arith.constant dense<0.000000e+00> : vector<8x512xf32>
    %456 = tpu.matmul %455, %1, %cst_168 {dimension_numbers = #tpu.dot_dimension_numbers<[1], [0], [0], [1], [0, 0, 1, 1], [], []>} : vector<8x256xf32>, vector<256x512xf32>, vector<8x512xf32> -> vector<8x512xf32>
    %457 = vector.broadcast %3 : vector<1x512xf32> to vector<8x512xf32>
    %458 = arith.addf %456, %457 : vector<8x512xf32>
    %459 = vector.extract_strided_slice %458 {offsets = [0, 0], sizes = [8, 128], strides = [1, 1]} : vector<8x512xf32> to vector<8x128xf32>
    %460 = arith.negf %459 : vector<8x128xf32>
    %461 = math.exp %460 : vector<8x128xf32>
    %cst_169 = arith.constant 1.000000e+00 : f32
    %462 = vector.broadcast %cst_169 : f32 to vector<8x128xf32>
    %463 = arith.addf %462, %461 : vector<8x128xf32>
    %464 = arith.divf %462, %463 : vector<8x128xf32>
    %465 = vector.extract_strided_slice %458 {offsets = [0, 128], sizes = [8, 128], strides = [1, 1]} : vector<8x512xf32> to vector<8x128xf32>
    %466 = arith.negf %465 : vector<8x128xf32>
    %467 = math.exp %466 : vector<8x128xf32>
    %cst_170 = arith.constant 1.000000e+00 : f32
    %468 = vector.broadcast %cst_170 : f32 to vector<8x128xf32>
    %469 = arith.addf %468, %467 : vector<8x128xf32>
    %470 = arith.divf %468, %469 : vector<8x128xf32>
    %471 = vector.extract_strided_slice %458 {offsets = [0, 256], sizes = [8, 128], strides = [1, 1]} : vector<8x512xf32> to vector<8x128xf32>
    %472 = math.tanh %471 : vector<8x128xf32>
    %473 = vector.extract_strided_slice %458 {offsets = [0, 384], sizes = [8, 128], strides = [1, 1]} : vector<8x512xf32> to vector<8x128xf32>
    %474 = arith.negf %473 : vector<8x128xf32>
    %475 = math.exp %474 : vector<8x128xf32>
    %cst_171 = arith.constant 1.000000e+00 : f32
    %476 = vector.broadcast %cst_171 : f32 to vector<8x128xf32>
    %477 = arith.addf %476, %475 : vector<8x128xf32>
    %478 = arith.divf %476, %477 : vector<8x128xf32>
    %479 = arith.mulf %470, %412 : vector<8x128xf32>
    %480 = arith.mulf %464, %472 : vector<8x128xf32>
    %481 = arith.addf %479, %480 : vector<8x128xf32>
    %482 = math.tanh %481 : vector<8x128xf32>
    %483 = arith.mulf %478, %482 : vector<8x128xf32>
    %484 = arith.index_cast %c6_i32 : i32 to index
    %c0_172 = arith.constant 0 : index
    %c0_173 = arith.constant 0 : index
    %485 = vector.load %arg6[%484, %c0_172, %c0_173] : memref<8x8x128xf32, #tpu.memory_space<vmem>>, vector<1x8x128xf32>
    %486 = vector.shape_cast %485 : vector<1x8x128xf32> to vector<8x128xf32>
    %487 = vector.shape_cast %483 : vector<8x128xf32> to vector<1x8x128xf32>
    tpu.vector_store %arg6[%484, %c0_172, %c0_173], %487 {strides = array<i32>} : memref<8x8x128xf32, #tpu.memory_space<vmem>>, vector<1x8x128xf32>,
    %c7_i32 = arith.constant 7 : i32
    %488 = arith.index_cast %c7_i32 : i32 to index
    %c0_174 = arith.constant 0 : index
    %c0_175 = arith.constant 0 : index
    %489 = vector.load %arg1[%488, %c0_174, %c0_175] : memref<8x8x128xf32, #tpu.memory_space<vmem>>, vector<1x8x128xf32>
    %490 = vector.shape_cast %489 : vector<1x8x128xf32> to vector<8x128xf32>
    %c0_176 = arith.constant 0 : index
    %c0_177 = arith.constant 0 : index
    %491 = vector.load %arg7[%c0_176, %c0_177] : memref<8x256xf32, #tpu.memory_space<vmem>>, vector<8x128xf32>
    tpu.vector_store %arg7[%c0_176, %c0_177], %490 {strides = array<i32>} : memref<8x256xf32, #tpu.memory_space<vmem>>, vector<8x128xf32>,
    %c0_178 = arith.constant 0 : index
    %c128_179 = arith.constant 128 : index
    %492 = vector.load %arg7[%c0_178, %c128_179] : memref<8x256xf32, #tpu.memory_space<vmem>>, vector<8x128xf32>
    tpu.vector_store %arg7[%c0_178, %c128_179], %452 {strides = array<i32>} : memref<8x256xf32, #tpu.memory_space<vmem>>, vector<8x128xf32>,
    %c0_180 = arith.constant 0 : index
    %c0_181 = arith.constant 0 : index
    %493 = vector.load %arg7[%c0_180, %c0_181] : memref<8x256xf32, #tpu.memory_space<vmem>>, vector<8x256xf32>
    %cst_182 = arith.constant dense<0.000000e+00> : vector<8x512xf32>
    %494 = tpu.matmul %493, %0, %cst_182 {dimension_numbers = #tpu.dot_dimension_numbers<[1], [0], [0], [1], [0, 0, 1, 1], [], []>} : vector<8x256xf32>, vector<256x512xf32>, vector<8x512xf32> -> vector<8x512xf32>
    %495 = vector.broadcast %2 : vector<1x512xf32> to vector<8x512xf32>
    %496 = arith.addf %494, %495 : vector<8x512xf32>
    %497 = vector.extract_strided_slice %496 {offsets = [0, 0], sizes = [8, 128], strides = [1, 1]} : vector<8x512xf32> to vector<8x128xf32>
    %498 = arith.negf %497 : vector<8x128xf32>
    %499 = math.exp %498 : vector<8x128xf32>
    %cst_183 = arith.constant 1.000000e+00 : f32
    %500 = vector.broadcast %cst_183 : f32 to vector<8x128xf32>
    %501 = arith.addf %500, %499 : vector<8x128xf32>
    %502 = arith.divf %500, %501 : vector<8x128xf32>
    %503 = vector.extract_strided_slice %496 {offsets = [0, 128], sizes = [8, 128], strides = [1, 1]} : vector<8x512xf32> to vector<8x128xf32>
    %504 = arith.negf %503 : vector<8x128xf32>
    %505 = math.exp %504 : vector<8x128xf32>
    %cst_184 = arith.constant 1.000000e+00 : f32
    %506 = vector.broadcast %cst_184 : f32 to vector<8x128xf32>
    %507 = arith.addf %506, %505 : vector<8x128xf32>
    %508 = arith.divf %506, %507 : vector<8x128xf32>
    %509 = vector.extract_strided_slice %496 {offsets = [0, 256], sizes = [8, 128], strides = [1, 1]} : vector<8x512xf32> to vector<8x128xf32>
    %510 = math.tanh %509 : vector<8x128xf32>
    %511 = vector.extract_strided_slice %496 {offsets = [0, 384], sizes = [8, 128], strides = [1, 1]} : vector<8x512xf32> to vector<8x128xf32>
    %512 = arith.negf %511 : vector<8x128xf32>
    %513 = math.exp %512 : vector<8x128xf32>
    %cst_185 = arith.constant 1.000000e+00 : f32
    %514 = vector.broadcast %cst_185 : f32 to vector<8x128xf32>
    %515 = arith.addf %514, %513 : vector<8x128xf32>
    %516 = arith.divf %514, %515 : vector<8x128xf32>
    %517 = arith.mulf %508, %450 : vector<8x128xf32>
    %518 = arith.mulf %502, %510 : vector<8x128xf32>
    %519 = arith.addf %517, %518 : vector<8x128xf32>
    %520 = math.tanh %519 : vector<8x128xf32>
    %521 = arith.mulf %516, %520 : vector<8x128xf32>
    %c0_186 = arith.constant 0 : index
    %c0_187 = arith.constant 0 : index
    %522 = vector.load %arg8[%c0_186, %c0_187] : memref<8x256xf32, #tpu.memory_space<vmem>>, vector<8x128xf32>
    tpu.vector_store %arg8[%c0_186, %c0_187], %521 {strides = array<i32>} : memref<8x256xf32, #tpu.memory_space<vmem>>, vector<8x128xf32>,
    %c0_188 = arith.constant 0 : index
    %c128_189 = arith.constant 128 : index
    %523 = vector.load %arg8[%c0_188, %c128_189] : memref<8x256xf32, #tpu.memory_space<vmem>>, vector<8x128xf32>
    tpu.vector_store %arg8[%c0_188, %c128_189], %483 {strides = array<i32>} : memref<8x256xf32, #tpu.memory_space<vmem>>, vector<8x128xf32>,
    %c0_190 = arith.constant 0 : index
    %c0_191 = arith.constant 0 : index
    %524 = vector.load %arg8[%c0_190, %c0_191] : memref<8x256xf32, #tpu.memory_space<vmem>>, vector<8x256xf32>
    %cst_192 = arith.constant dense<0.000000e+00> : vector<8x512xf32>
    %525 = tpu.matmul %524, %1, %cst_192 {dimension_numbers = #tpu.dot_dimension_numbers<[1], [0], [0], [1], [0, 0, 1, 1], [], []>} : vector<8x256xf32>, vector<256x512xf32>, vector<8x512xf32> -> vector<8x512xf32>
    %526 = vector.broadcast %3 : vector<1x512xf32> to vector<8x512xf32>
    %527 = arith.addf %525, %526 : vector<8x512xf32>
    %528 = vector.extract_strided_slice %527 {offsets = [0, 0], sizes = [8, 128], strides = [1, 1]} : vector<8x512xf32> to vector<8x128xf32>
    %529 = arith.negf %528 : vector<8x128xf32>
    %530 = math.exp %529 : vector<8x128xf32>
    %cst_193 = arith.constant 1.000000e+00 : f32
    %531 = vector.broadcast %cst_193 : f32 to vector<8x128xf32>
    %532 = arith.addf %531, %530 : vector<8x128xf32>
    %533 = arith.divf %531, %532 : vector<8x128xf32>
    %534 = vector.extract_strided_slice %527 {offsets = [0, 128], sizes = [8, 128], strides = [1, 1]} : vector<8x512xf32> to vector<8x128xf32>
    %535 = arith.negf %534 : vector<8x128xf32>
    %536 = math.exp %535 : vector<8x128xf32>
    %cst_194 = arith.constant 1.000000e+00 : f32
    %537 = vector.broadcast %cst_194 : f32 to vector<8x128xf32>
    %538 = arith.addf %537, %536 : vector<8x128xf32>
    %539 = arith.divf %537, %538 : vector<8x128xf32>
    %540 = vector.extract_strided_slice %527 {offsets = [0, 256], sizes = [8, 128], strides = [1, 1]} : vector<8x512xf32> to vector<8x128xf32>
    %541 = math.tanh %540 : vector<8x128xf32>
    %542 = vector.extract_strided_slice %527 {offsets = [0, 384], sizes = [8, 128], strides = [1, 1]} : vector<8x512xf32> to vector<8x128xf32>
    %543 = arith.negf %542 : vector<8x128xf32>
    %544 = math.exp %543 : vector<8x128xf32>
    %cst_195 = arith.constant 1.000000e+00 : f32
    %545 = vector.broadcast %cst_195 : f32 to vector<8x128xf32>
    %546 = arith.addf %545, %544 : vector<8x128xf32>
    %547 = arith.divf %545, %546 : vector<8x128xf32>
    %548 = arith.mulf %539, %481 : vector<8x128xf32>
    %549 = arith.mulf %533, %541 : vector<8x128xf32>
    %550 = arith.addf %548, %549 : vector<8x128xf32>
    %551 = math.tanh %550 : vector<8x128xf32>
    %552 = arith.mulf %547, %551 : vector<8x128xf32>
    %553 = arith.index_cast %c7_i32 : i32 to index
    %c0_196 = arith.constant 0 : index
    %c0_197 = arith.constant 0 : index
    %554 = vector.load %arg6[%553, %c0_196, %c0_197] : memref<8x8x128xf32, #tpu.memory_space<vmem>>, vector<1x8x128xf32>
    %555 = vector.shape_cast %554 : vector<1x8x128xf32> to vector<8x128xf32>
    %556 = vector.shape_cast %552 : vector<8x128xf32> to vector<1x8x128xf32>
    tpu.vector_store %arg6[%553, %c0_196, %c0_197], %556 {strides = array<i32>} : memref<8x8x128xf32, #tpu.memory_space<vmem>>, vector<1x8x128xf32>,
    %c8_i32 = arith.constant 8 : i32
    return
  }
  func.func @transform_0(%arg0: i32) -> (i32, i32, i32) {
    %c0_i32 = arith.constant 0 : i32
    %c0_i32_0 = arith.constant 0 : i32
    %c0_i32_1 = arith.constant 0 : i32
    %c0_i32_2 = arith.constant 0 : i32
    return %c0_i32, %c0_i32_0, %c0_i32_1 : i32, i32, i32
  }
  func.func @transform_1(%arg0: i32) -> (i32, i32) {
    %c0_i32 = arith.constant 0 : i32
    %c0_i32_0 = arith.constant 0 : i32
    %c0_i32_1 = arith.constant 0 : i32
    return %c0_i32, %c0_i32_0 : i32, i32
  }
  func.func @transform_2(%arg0: i32) -> (i32, i32) {
    %c0_i32 = arith.constant 0 : i32
    %c0_i32_0 = arith.constant 0 : i32
    %c0_i32_1 = arith.constant 0 : i32
    return %c0_i32, %c0_i32_0 : i32, i32
  }
  func.func @transform_3(%arg0: i32) -> (i32, i32) {
    %c0_i32 = arith.constant 0 : i32
    %c0_i32_0 = arith.constant 0 : i32
    %c0_i32_1 = arith.constant 0 : i32
    return %c0_i32, %c0_i32_0 : i32, i32
  }
  func.func @transform_4(%arg0: i32) -> (i32, i32) {
    %c0_i32 = arith.constant 0 : i32
    %c0_i32_0 = arith.constant 0 : i32
    %c0_i32_1 = arith.constant 0 : i32
    return %c0_i32, %c0_i32_0 : i32, i32
  }
  func.func @transform_5(%arg0: i32) -> (i32, i32, i32) {
    %c0_i32 = arith.constant 0 : i32
    %c0_i32_0 = arith.constant 0 : i32
    %c0_i32_1 = arith.constant 0 : i32
    %c0_i32_2 = arith.constant 0 : i32
    return %c0_i32, %c0_i32_0, %c0_i32_1 : i32, i32, i32
  }
}

</mosaic_0001>

<llo_original>
// kernel: decoder_rnn_forward.3
$region0: #{decoder_rnn_forward.3}
  #allocation0 [shape = 'u32[]', space=smem, size = 0x4, offset = 0x4, fixed_abs, tag = 'smem constant byte address 0x4 - core index']
  #allocation1 [shape = 'u32[144,128]{1,0:T(1,128)}', space=vmem, size = 0x12000, scoped, tag = 'internal scratch']
  %s0 = inlined_call_operand.vmem [shape: f32[64,128], index: 0, kind: input, shape index: {}]
  %s1 = inlined_call_operand.vmem [shape: f32[128,128], index: 1, kind: input, shape index: {}]
  %s2 = inlined_call_operand.vmem [shape: f32[1,128], index: 2, kind: input, shape index: {}]
  %s3 = inlined_call_operand.vmem [shape: f32[64,128], index: 3, kind: output, shape index: {}]
  %s4 = sld [smem:[#allocation0]]
  $region22: #{decoder_rnn_forward.3} parent=0
    _
  %s6 = ssub.s32 1, %s4
  %s7 = scalar_select 0, %s6, %s4
  // Predicated region
  $region2: #{decoder_rnn_forward.3} parent=0 // pred_check
    _
  $region3: #{decoder_rnn_forward.3} parent=0 // pred_check_branch
    %9 = sbr.rel (0) target = $region5
  $region4: #{decoder_rnn_forward.3} parent=0 // pred_region
    _
  $region5: #{decoder_rnn_forward.3} parent=0 // pred_fallthru
    _
  // Predicated region
  $region6: #{decoder_rnn_forward.3} parent=0 // pred_check
    _
  $region7: #{decoder_rnn_forward.3} parent=0 // pred_check_branch
    %11 = sbr.rel (0) target = $region9
  $region8: #{decoder_rnn_forward.3} parent=0 // pred_region
    _
  $region9: #{decoder_rnn_forward.3} parent=0 // pred_fallthru
    _
  // Predicated region
  $region10: #{decoder_rnn_forward.3} parent=0 // pred_check
    _
  $region11: #{decoder_rnn_forward.3} parent=0 // pred_check_branch
    %13 = sbr.rel (0) target = $region13
  $region12: #{decoder_rnn_forward.3} parent=0 // pred_region
    _
  $region13: #{decoder_rnn_forward.3} parent=0 // pred_fallthru
    _
  %v14 = vld [vmem:[%s0] sm:$0xff]
  %v15 = vld [vmem:[%s0 + $0x8] sm:$0xff]
  %v16 = vld [vmem:[%s0 + $0x10] sm:$0xff]
  %v17 = vld [vmem:[%s0 + $0x18] sm:$0xff]
  %v18 = vld [vmem:[%s0 + $0x20] sm:$0xff]
  %v19 = vld [vmem:[%s0 + $0x28] sm:$0xff]
  %v20 = vld [vmem:[%s0 + $0x30] sm:$0xff]
  %v21 = vld [vmem:[%s0 + $0x38] sm:$0xff]
  %v22 = vld [vmem:[%s1] sm:$0xff]
  %v23 = vld [vmem:[%s1 + $0x8] sm:$0xff]
  %v24 = vld [vmem:[%s1 + $0x10] sm:$0xff]
  %v25 = vld [vmem:[%s1 + $0x18] sm:$0xff]
  %v26 = vld [vmem:[%s1 + $0x20] sm:$0xff]
  %v27 = vld [vmem:[%s1 + $0x28] sm:$0xff]
  %v28 = vld [vmem:[%s1 + $0x30] sm:$0xff]
  %v29 = vld [vmem:[%s1 + $0x38] sm:$0xff]
  %v30 = vld [vmem:[%s1 + $0x40] sm:$0xff]
  %v31 = vld [vmem:[%s1 + $0x48] sm:$0xff]
  %v32 = vld [vmem:[%s1 + $0x50] sm:$0xff]
  %v33 = vld [vmem:[%s1 + $0x58] sm:$0xff]
  %v34 = vld [vmem:[%s1 + $0x60] sm:$0xff]
  %v35 = vld [vmem:[%s1 + $0x68] sm:$0xff]
  %v36 = vld [vmem:[%s1 + $0x70] sm:$0xff]
  %v37 = vld [vmem:[%s1 + $0x78] sm:$0xff]
  %v38 = vld [vmem:[%s2] sm:$0x1]
  %v40 = vlaneseq
  %v41 = vshrl.u32 %v40, 7
  %v42 = vsub.s32 0, %v41
  %v43 = vrot.slane %v38, %v42
  %45 = vmatprep.subr.mxu0 0.0
  %46 = vmatpush1.msra.mxu0 %v37
  %47 = vmatprep.subr.mxu0 0.0
  %48 = vmatpush1.msra.mxu0 %v36
  %49 = vmatprep.subr.mxu0 0.0
  %50 = vmatpush1.msra.mxu0 %v35
  %51 = vmatprep.subr.mxu0 0.0
  %52 = vmatpush1.msra.mxu0 %v34
  %53 = vmatprep.subr.mxu0 0.0
  %54 = vmatpush1.msra.mxu0 %v33
  %55 = vmatprep.subr.mxu0 0.0
  %56 = vmatpush1.msra.mxu0 %v32
  %57 = vmatprep.subr.mxu0 0.0
  %58 = vmatpush1.msra.mxu0 %v31
  %59 = vmatprep.subr.mxu0 0.0
  %60 = vmatpush1.msra.mxu0 %v30
  %61 = vmatprep.subr.mxu0 0.0
  %62 = vmatpush1.msra.mxu0 %v29
  %63 = vmatprep.subr.mxu0 0.0
  %64 = vmatpush1.msra.mxu0 %v28
  %65 = vmatprep.subr.mxu0 0.0
  %66 = vmatpush1.msra.mxu0 %v27
  %67 = vmatprep.subr.mxu0 0.0
  %68 = vmatpush1.msra.mxu0 %v26
  %69 = vmatprep.subr.mxu0 0.0
  %70 = vmatpush1.msra.mxu0 %v25
  %71 = vmatprep.subr.mxu0 0.0
  %72 = vmatpush1.msra.mxu0 %v24
  %73 = vmatprep.subr.mxu0 0.0
  %74 = vmatpush1.msra.mxu0 %v23
  %75 = vmatprep.subr.mxu0 0.0
  %76 = vmatpush1.msra.mxu0 %v22
  %77 = vmatprep.subr.mxu0 0.0
  %78 = vmatpush2.msra.mxu0 0.0
  %79 = vmatprep.subr.mxu0 0.0
  %80 = vmatpush2.msra.mxu0 0.0
  %81 = vmatprep.subr.mxu0 0.0
  %82 = vmatpush2.msra.mxu0 0.0
  %83 = vmatprep.subr.mxu0 0.0
  %84 = vmatpush2.msra.mxu0 0.0
  %85 = vmatprep.subr.mxu0 0.0
  %86 = vmatpush2.msra.mxu0 0.0
  %87 = vmatprep.subr.mxu0 0.0
  %88 = vmatpush2.msra.mxu0 0.0
  %89 = vmatprep.subr.mxu0 0.0
  %90 = vmatpush2.msra.mxu0 0.0
  %91 = vmatprep.subr.mxu0 0.0
  %92 = vmatpush2.msra.mxu0 0.0
  %93 = vmatprep.subr.mxu0 0.0
  %94 = vmatpush2.msra.mxu0 0.0
  %95 = vmatprep.subr.mxu0 0.0
  %96 = vmatpush2.msra.mxu0 0.0
  %97 = vmatprep.subr.mxu0 0.0
  %98 = vmatpush2.msra.mxu0 0.0
  %99 = vmatprep.subr.mxu0 0.0
  %100 = vmatpush2.msra.mxu0 0.0
  %101 = vmatprep.subr.mxu0 0.0
  %102 = vmatpush2.msra.mxu0 0.0
  %103 = vmatprep.subr.mxu0 0.0
  %104 = vmatpush2.msra.mxu0 0.0
  %105 = vmatprep.subr.mxu0 0.0
  %106 = vmatpush2.msra.mxu0 0.0
  %107 = vmatprep.subr.mxu0 0.0
  %108 = vmatpush2.msra.mxu0 0.0
  %109 = vmatprep.mubr.f32.mxu0 0.0
  %110 = vmatmul.mubr.f32.gmra.mxu0 %v14
  %v111 = vpop.f32.mrf.mxu0
  %v112 = vadd.f32 %v43, %v111
  %v113 = vpop.f32.mrf.mxu0
  %114 = vmatprep.mubr.f32.mxu0 0.0
  %115 = vmatmul.mubr.f32.gmra.mxu0 %v15
  %v116 = vpop.f32.mrf.mxu0
  %v117 = vadd.f32 %v43, %v116
  %v118 = vpop.f32.mrf.mxu0
  %119 = vmatprep.mubr.f32.mxu0 0.0
  %120 = vmatmul.mubr.f32.gmra.mxu0 %v16
  %v121 = vpop.f32.mrf.mxu0
  %v122 = vadd.f32 %v43, %v121
  %v123 = vpop.f32.mrf.mxu0
  %124 = vmatprep.mubr.f32.mxu0 0.0
  %125 = vmatmul.mubr.f32.gmra.mxu0 %v17
  %v126 = vpop.f32.mrf.mxu0
  %v127 = vadd.f32 %v43, %v126
  %v128 = vpop.f32.mrf.mxu0
  %129 = vmatprep.mubr.f32.mxu0 0.0
  %130 = vmatmul.mubr.f32.gmra.mxu0 %v18
  %v131 = vpop.f32.mrf.mxu0
  %v132 = vadd.f32 %v43, %v131
  %v133 = vpop.f32.mrf.mxu0
  %134 = vmatprep.mubr.f32.mxu0 0.0
  %135 = vmatmul.mubr.f32.gmra.mxu0 %v19
  %v136 = vpop.f32.mrf.mxu0
  %v137 = vadd.f32 %v43, %v136
  %v138 = vpop.f32.mrf.mxu0
  %139 = vmatprep.mubr.f32.mxu0 0.0
  %140 = vmatmul.mubr.f32.gmra.mxu0 %v20
  %v141 = vpop.f32.mrf.mxu0
  %v142 = vadd.f32 %v43, %v141
  %v143 = vpop.f32.mrf.mxu0
  %144 = vmatprep.mubr.f32.mxu0 0.0
  %145 = vmatmul.mubr.f32.gmra.mxu0 %v21
  %v146 = vpop.f32.mrf.mxu0
  %v147 = vadd.f32 %v43, %v146
  %v148 = vpop.f32.mrf.mxu0
  %149 = vdwg.mxu0
  %150 = vst [vmem:[%s3] sm:$0xff] %v112
  %151 = vst [vmem:[%s3 + $0x8] sm:$0xff] %v117
  %152 = vst [vmem:[%s3 + $0x10] sm:$0xff] %v122
  %153 = vst [vmem:[%s3 + $0x18] sm:$0xff] %v127
  %154 = vst [vmem:[%s3 + $0x20] sm:$0xff] %v132
  %155 = vst [vmem:[%s3 + $0x28] sm:$0xff] %v137
  %156 = vst [vmem:[%s3 + $0x30] sm:$0xff] %v142
  %157 = vst [vmem:[%s3 + $0x38] sm:$0xff] %v147
  // Predicated region
  $region14: #{decoder_rnn_forward.3} parent=0 // pred_check
    _
  $region15: #{decoder_rnn_forward.3} parent=0 // pred_check_branch
    %159 = sbr.rel (0) target = $region17
  $region16: #{decoder_rnn_forward.3} parent=0 // pred_region
    _
  $region17: #{decoder_rnn_forward.3} parent=0 // pred_fallthru
    _
  // Predicated region
  $region18: #{decoder_rnn_forward.3} parent=0 // pred_check
    _
  $region19: #{decoder_rnn_forward.3} parent=0 // pred_check_branch
    %161 = sbr.rel (0) target = $region21
  $region20: #{decoder_rnn_forward.3} parent=0 // pred_region
    _
  $region21: #{decoder_rnn_forward.3} parent=0 // pred_fallthru
    _

// kernel: decoder_rnn_forward.2
$region0: #{decoder_rnn_forward.2}
  #allocation0 [shape = 'u32[]', space=smem, size = 0x4, offset = 0x4, fixed_abs, tag = 'smem constant byte address 0x4 - core index']
  #allocation1 [shape = 'u32[144,128]{1,0:T(1,128)}', space=vmem, size = 0x12000, scoped, tag = 'internal scratch']
  #allocation2 [shape = 'f32[8,256]{1,0:T(8,128)}', space=vmem, size = 0x2000, scoped, tag = 'scratch operand']
  #allocation3 [shape = 'f32[8,256]{1,0:T(8,128)}', space=vmem, size = 0x2000, scoped, tag = 'scratch operand']
  %s0 = inlined_call_operand.vmem [shape: f32[8,8,128], index: 0, kind: input, shape index: {}]
  %s1 = inlined_call_operand.hbm [shape: f32[256,512], index: 1, kind: input, shape index: {}]
  %s2 = inlined_call_operand.vmem [shape: f32[1,512], index: 2, kind: input, shape index: {}]
  %s3 = inlined_call_operand.hbm [shape: f32[256,512], index: 3, kind: input, shape index: {}]
  %s4 = inlined_call_operand.vmem [shape: f32[1,512], index: 4, kind: input, shape index: {}]
  %s5 = inlined_call_operand.vmem [shape: f32[8,8,128], index: 5, kind: output, shape index: {}]
  %s6 = sld [smem:[#allocation0]]
  $region38: #{decoder_rnn_forward.2} parent=0
    _
  %s8 = ssub.s32 1, %s6
  %s9 = scalar_select 0, %s8, %s6
  $region1: #{decoder_rnn_forward.2} parent=0
    #allocation4 [shape = 'u8[524288]{0}', space=vmem, size = 0x80000, scoped, tag = 'input window, operand 1, single buffered']
    #allocation5 [shape = 's32[1]{0}', space=sflag, size = 0x4, scoped, tag = 'scoped memory for decoder_rnn_forward.2']
    #allocation6 [shape = 'u8[524288]{0}', space=vmem, size = 0x80000, scoped, tag = 'input window, operand 3, single buffered']
    #allocation7 [shape = 's32[1]{0}', space=sflag, size = 0x4, scoped, tag = 'scoped memory for decoder_rnn_forward.2']
    %10 = vsyncpa [#allocation5], 0
    %11 = vsyncpa [#allocation7], 0
    // Predicated region
    $region2: #{decoder_rnn_forward.2} parent=1 // pred_check
      _
    $region3: #{decoder_rnn_forward.2} parent=1 // pred_check_branch
      %13 = sbr.rel (0) target = $region5
    $region4: #{decoder_rnn_forward.2} parent=1 // pred_region
      _
    $region5: #{decoder_rnn_forward.2} parent=1 // pred_fallthru
      _
    // Predicated region
    $region6: #{decoder_rnn_forward.2} parent=1 // pred_check
      _
    $region7: #{decoder_rnn_forward.2} parent=1 // pred_check_branch
      %15 = sbr.rel (0) target = $region9
    $region8: #{decoder_rnn_forward.2} parent=1 // pred_region
      %s17 = ssub.s32 16384, 16384
      %18 = vsyncadd [#allocation5], %s17
      %s19 = sshll.u32 [#allocation4], 4
      %s20 = int_to_ptr.vmem [resolvable:$true] %s19
      %25 = dma.hbm_to_vmem [thread:$0]  %s1, 16384, %s20, [#allocation5], 512, 512, 32
    $region9: #{decoder_rnn_forward.2} parent=1 // pred_fallthru
      _
    // Predicated region
    $region10: #{decoder_rnn_forward.2} parent=1 // pred_check
      _
    $region11: #{decoder_rnn_forward.2} parent=1 // pred_check_branch
      %27 = sbr.rel (0) target = $region13
    $region12: #{decoder_rnn_forward.2} parent=1 // pred_region
      _
    $region13: #{decoder_rnn_forward.2} parent=1 // pred_fallthru
      _
    // Predicated region
    $region14: #{decoder_rnn_forward.2} parent=1 // pred_check
      _
    $region15: #{decoder_rnn_forward.2} parent=1 // pred_check_branch
      %29 = sbr.rel (0) target = $region17
    $region16: #{decoder_rnn_forward.2} parent=1 // pred_region
      %s31 = ssub.s32 16384, 16384
      %32 = vsyncadd [#allocation7], %s31
      %s33 = sshll.u32 [#allocation6], 4
      %s34 = int_to_ptr.vmem [resolvable:$true] %s33
      %39 = dma.hbm_to_vmem [thread:$0]  %s3, 16384, %s34, [#allocation7], 512, 512, 32
    $region17: #{decoder_rnn_forward.2} parent=1 // pred_fallthru
      _
    // Predicated region
    $region18: #{decoder_rnn_forward.2} parent=1 // pred_check
      _
    $region19: #{decoder_rnn_forward.2} parent=1 // pred_check_branch
      %41 = sbr.rel (0) target = $region21
    $region20: #{decoder_rnn_forward.2} parent=1 // pred_region
      _
    $region21: #{decoder_rnn_forward.2} parent=1 // pred_fallthru
      _
    // Predicated region
    $region22: #{decoder_rnn_forward.2} parent=1 // pred_check
      _
    $region23: #{decoder_rnn_forward.2} parent=1 // pred_check_branch
      %43 = sbr.rel (0) target = $region25
    $region24: #{decoder_rnn_forward.2} parent=1 // pred_region
      %44 = dma.done [#allocation5], 16384
    $region25: #{decoder_rnn_forward.2} parent=1 // pred_fallthru
      _
    // Predicated region
    $region26: #{decoder_rnn_forward.2} parent=1 // pred_check
      _
    $region27: #{decoder_rnn_forward.2} parent=1 // pred_check_branch
      %46 = sbr.rel (0) target = $region29
    $region28: #{decoder_rnn_forward.2} parent=1 // pred_region
      %47 = dma.done [#allocation7], 16384
    $region29: #{decoder_rnn_forward.2} parent=1 // pred_fallthru
      _
    %v48 = vld [vmem:[#allocation4] sm:$0xff]
    %v49 = vld [vmem:[#allocation4 + $0x8] sm:$0xff]
    %v50 = vld [vmem:[#allocation4 + $0x10] sm:$0xff]
    %v51 = vld [vmem:[#allocation4 + $0x18] sm:$0xff]
    %v52 = vld [vmem:[#allocation4 + $0x20] sm:$0xff]
    %v53 = vld [vmem:[#allocation4 + $0x28] sm:$0xff]
    %v54 = vld [vmem:[#allocation4 + $0x30] sm:$0xff]
    %v55 = vld [vmem:[#allocation4 + $0x38] sm:$0xff]
    %v56 = vld [vmem:[#allocation4 + $0x40] sm:$0xff]
    %v57 = vld [vmem:[#allocation4 + $0x48] sm:$0xff]
    %v58 = vld [vmem:[#allocation4 + $0x50] sm:$0xff]
    %v59 = vld [vmem:[#allocation4 + $0x58] sm:$0xff]
    %v60 = vld [vmem:[#allocation4 + $0x60] sm:$0xff]
    %v61 = vld [vmem:[#allocation4 + $0x68] sm:$0xff]
    %v62 = vld [vmem:[#allocation4 + $0x70] sm:$0xff]
    %v63 = vld [vmem:[#allocation4 + $0x78] sm:$0xff]
    %v64 = vld [vmem:[#allocation4 + $0x80] sm:$0xff]
    %v65 = vld [vmem:[#allocation4 + $0x88] sm:$0xff]
    %v66 = vld [vmem:[#allocation4 + $0x90] sm:$0xff]
    %v67 = vld [vmem:[#allocation4 + $0x98] sm:$0xff]
    %v68 = vld [vmem:[#allocation4 + $0xa0] sm:$0xff]
    %v69 = vld [vmem:[#allocation4 + $0xa8] sm:$0xff]
    %v70 = vld [vmem:[#allocation4 + $0xb0] sm:$0xff]
    %v71 = vld [vmem:[#allocation4 + $0xb8] sm:$0xff]
    %v72 = vld [vmem:[#allocation4 + $0xc0] sm:$0xff]
    %v73 = vld [vmem:[#allocation4 + $0xc8] sm:$0xff]
    %v74 = vld [vmem:[#allocation4 + $0xd0] sm:$0xff]
    %v75 = vld [vmem:[#allocation4 + $0xd8] sm:$0xff]
    %v76 = vld [vmem:[#allocation4 + $0xe0] sm:$0xff]
    %v77 = vld [vmem:[#allocation4 + $0xe8] sm:$0xff]
    %v78 = vld [vmem:[#allocation4 + $0xf0] sm:$0xff]
    %v79 = vld [vmem:[#allocation4 + $0xf8] sm:$0xff]
    %v80 = vld [vmem:[#allocation4 + $0x100] sm:$0xff]
    %v81 = vld [vmem:[#allocation4 + $0x108] sm:$0xff]
    %v82 = vld [vmem:[#allocation4 + $0x110] sm:$0xff]
    %v83 = vld [vmem:[#allocation4 + $0x118] sm:$0xff]
    %v84 = vld [vmem:[#allocation4 + $0x120] sm:$0xff]
    %v85 = vld [vmem:[#allocation4 + $0x128] sm:$0xff]
    %v86 = vld [vmem:[#allocation4 + $0x130] sm:$0xff]
    %v87 = vld [vmem:[#allocation4 + $0x138] sm:$0xff]
    %v88 = vld [vmem:[#allocation4 + $0x140] sm:$0xff]
    %v89 = vld [vmem:[#allocation4 + $0x148] sm:$0xff]
    %v90 = vld [vmem:[#allocation4 + $0x150] sm:$0xff]
    %v91 = vld [vmem:[#allocation4 + $0x158] sm:$0xff]
    %v92 = vld [vmem:[#allocation4 + $0x160] sm:$0xff]
    %v93 = vld [vmem:[#allocation4 + $0x168] sm:$0xff]
    %v94 = vld [vmem:[#allocation4 + $0x170] sm:$0xff]
    %v95 = vld [vmem:[#allocation4 + $0x178] sm:$0xff]
    %v96 = vld [vmem:[#allocation4 + $0x180] sm:$0xff]
    %v97 = vld [vmem:[#allocation4 + $0x188] sm:$0xff]
    %v98 = vld [vmem:[#allocation4 + $0x190] sm:$0xff]
    %v99 = vld [vmem:[#allocation4 + $0x198] sm:$0xff]
    %v100 = vld [vmem:[#allocation4 + $0x1a0] sm:$0xff]
    %v101 = vld [vmem:[#allocation4 + $0x1a8] sm:$0xff]
    %v102 = vld [vmem:[#allocation4 + $0x1b0] sm:$0xff]
    %v103 = vld [vmem:[#allocation4 + $0x1b8] sm:$0xff]
    %v104 = vld [vmem:[#allocation4 + $0x1c0] sm:$0xff]
    %v105 = vld [vmem:[#allocation4 + $0x1c8] sm:$0xff]
    %v106 = vld [vmem:[#allocation4 + $0x1d0] sm:$0xff]
    %v107 = vld [vmem:[#allocation4 + $0x1d8] sm:$0xff]
    %v108 = vld [vmem:[#allocation4 + $0x1e0] sm:$0xff]
    %v109 = vld [vmem:[#allocation4 + $0x1e8] sm:$0xff]
    %v110 = vld [vmem:[#allocation4 + $0x1f0] sm:$0xff]
    %v111 = vld [vmem:[#allocation4 + $0x1f8] sm:$0xff]
    %v112 = vld [vmem:[#allocation4 + $0x200] sm:$0xff]
    %v113 = vld [vmem:[#allocation4 + $0x208] sm:$0xff]
    %v114 = vld [vmem:[#allocation4 + $0x210] sm:$0xff]
    %v115 = vld [vmem:[#allocation4 + $0x218] sm:$0xff]
    %v116 = vld [vmem:[#allocation4 + $0x220] sm:$0xff]
    %v117 = vld [vmem:[#allocation4 + $0x228] sm:$0xff]
    %v118 = vld [vmem:[#allocation4 + $0x230] sm:$0xff]
    %v119 = vld [vmem:[#allocation4 + $0x238] sm:$0xff]
    %v120 = vld [vmem:[#allocation4 + $0x240] sm:$0xff]
    %v121 = vld [vmem:[#allocation4 + $0x248] sm:$0xff]
    %v122 = vld [vmem:[#allocation4 + $0x250] sm:$0xff]
    %v123 = vld [vmem:[#allocation4 + $0x258] sm:$0xff]
    %v124 = vld [vmem:[#allocation4 + $0x260] sm:$0xff]
    %v125 = vld [vmem:[#allocation4 + $0x268] sm:$0xff]
    %v126 = vld [vmem:[#allocation4 + $0x270] sm:$0xff]
    %v127 = vld [vmem:[#allocation4 + $0x278] sm:$0xff]
    %v128 = vld [vmem:[#allocation4 + $0x280] sm:$0xff]
    %v129 = vld [vmem:[#allocation4 + $0x288] sm:$0xff]
    %v130 = vld [vmem:[#allocation4 + $0x290] sm:$0xff]
    %v131 = vld [vmem:[#allocation4 + $0x298] sm:$0xff]
    %v132 = vld [vmem:[#allocation4 + $0x2a0] sm:$0xff]
    %v133 = vld [vmem:[#allocation4 + $0x2a8] sm:$0xff]
    %v134 = vld [vmem:[#allocation4 + $0x2b0] sm:$0xff]
    %v135 = vld [vmem:[#allocation4 + $0x2b8] sm:$0xff]
    %v136 = vld [vmem:[#allocation4 + $0x2c0] sm:$0xff]
    %v137 = vld [vmem:[#allocation4 + $0x2c8] sm:$0xff]
    %v138 = vld [vmem:[#allocation4 + $0x2d0] sm:$0xff]
    %v139 = vld [vmem:[#allocation4 + $0x2d8] sm:$0xff]
    %v140 = vld [vmem:[#allocation4 + $0x2e0] sm:$0xff]
    %v141 = vld [vmem:[#allocation4 + $0x2e8] sm:$0xff]
    %v142 = vld [vmem:[#allocation4 + $0x2f0] sm:$0xff]
    %v143 = vld [vmem:[#allocation4 + $0x2f8] sm:$0xff]
    %v144 = vld [vmem:[#allocation4 + $0x300] sm:$0xff]
    %v145 = vld [vmem:[#allocation4 + $0x308] sm:$0xff]
    %v146 = vld [vmem:[#allocation4 + $0x310] sm:$0xff]
    %v147 = vld [vmem:[#allocation4 + $0x318] sm:$0xff]
    %v148 = vld [vmem:[#allocation4 + $0x320] sm:$0xff]
    %v149 = vld [vmem:[#allocation4 + $0x328] sm:$0xff]
    %v150 = vld [vmem:[#allocation4 + $0x330] sm:$0xff]
    %v151 = vld [vmem:[#allocation4 + $0x338] sm:$0xff]
    %v152 = vld [vmem:[#allocation4 + $0x340] sm:$0xff]
    %v153 = vld [vmem:[#allocation4 + $0x348] sm:$0xff]
    %v154 = vld [vmem:[#allocation4 + $0x350] sm:$0xff]
    %v155 = vld [vmem:[#allocation4 + $0x358] sm:$0xff]
    %v156 = vld [vmem:[#allocation4 + $0x360] sm:$0xff]
    %v157 = vld [vmem:[#allocation4 + $0x368] sm:$0xff]
    %v158 = vld [vmem:[#allocation4 + $0x370] sm:$0xff]
    %v159 = vld [vmem:[#allocation4 + $0x378] sm:$0xff]
    %v160 = vld [vmem:[#allocation4 + $0x380] sm:$0xff]
    %v161 = vld [vmem:[#allocation4 + $0x388] sm:$0xff]
    %v162 = vld [vmem:[#allocation4 + $0x390] sm:$0xff]
    %v163 = vld [vmem:[#allocation4 + $0x398] sm:$0xff]
    %v164 = vld [vmem:[#allocation4 + $0x3a0] sm:$0xff]
    %v165 = vld [vmem:[#allocation4 + $0x3a8] sm:$0xff]
    %v166 = vld [vmem:[#allocation4 + $0x3b0] sm:$0xff]
    %v167 = vld [vmem:[#allocation4 + $0x3b8] sm:$0xff]
    %v168 = vld [vmem:[#allocation4 + $0x3c0] sm:$0xff]
    %v169 = vld [vmem:[#allocation4 + $0x3c8] sm:$0xff]
    %v170 = vld [vmem:[#allocation4 + $0x3d0] sm:$0xff]
    %v171 = vld [vmem:[#allocation4 + $0x3d8] sm:$0xff]
    %v172 = vld [vmem:[#allocation4 + $0x3e0] sm:$0xff]
    %v173 = vld [vmem:[#allocation4 + $0x3e8] sm:$0xff]
    %v174 = vld [vmem:[#allocation4 + $0x3f0] sm:$0xff]
    %v175 = vld [vmem:[#allocation4 + $0x3f8] sm:$0xff]
    %v176 = vld [vmem:[#allocation6] sm:$0xff]
    %v177 = vld [vmem:[#allocation6 + $0x8] sm:$0xff]
    %v178 = vld [vmem:[#allocation6 + $0x10] sm:$0xff]
    %v179 = vld [vmem:[#allocation6 + $0x18] sm:$0xff]
    %v180 = vld [vmem:[#allocation6 + $0x20] sm:$0xff]
    %v181 = vld [vmem:[#allocation6 + $0x28] sm:$0xff]
    %v182 = vld [vmem:[#allocation6 + $0x30] sm:$0xff]
    %v183 = vld [vmem:[#allocation6 + $0x38] sm:$0xff]
    %v184 = vld [vmem:[#allocation6 + $0x40] sm:$0xff]
    %v185 = vld [vmem:[#allocation6 + $0x48] sm:$0xff]
    %v186 = vld [vmem:[#allocation6 + $0x50] sm:$0xff]
    %v187 = vld [vmem:[#allocation6 + $0x58] sm:$0xff]
    %v188 = vld [vmem:[#allocation6 + $0x60] sm:$0xff]
    %v189 = vld [vmem:[#allocation6 + $0x68] sm:$0xff]
    %v190 = vld [vmem:[#allocation6 + $0x70] sm:$0xff]
    %v191 = vld [vmem:[#allocation6 + $0x78] sm:$0xff]
    %v192 = vld [vmem:[#allocation6 + $0x80] sm:$0xff]
    %v193 = vld [vmem:[#allocation6 + $0x88] sm:$0xff]
    %v194 = vld [vmem:[#allocation6 + $0x90] sm:$0xff]
    %v195 = vld [vmem:[#allocation6 + $0x98] sm:$0xff]
    %v196 = vld [vmem:[#allocation6 + $0xa0] sm:$0xff]
    %v197 = vld [vmem:[#allocation6 + $0xa8] sm:$0xff]
    %v198 = vld [vmem:[#allocation6 + $0xb0] sm:$0xff]
    %v199 = vld [vmem:[#allocation6 + $0xb8] sm:$0xff]
    %v200 = vld [vmem:[#allocation6 + $0xc0] sm:$0xff]
    %v201 = vld [vmem:[#allocation6 + $0xc8] sm:$0xff]
    %v202 = vld [vmem:[#allocation6 + $0xd0] sm:$0xff]
    %v203 = vld [vmem:[#allocation6 + $0xd8] sm:$0xff]
    %v204 = vld [vmem:[#allocation6 + $0xe0] sm:$0xff]
    %v205 = vld [vmem:[#allocation6 + $0xe8] sm:$0xff]
    %v206 = vld [vmem:[#allocation6 + $0xf0] sm:$0xff]
    %v207 = vld [vmem:[#allocation6 + $0xf8] sm:$0xff]
    %v208 = vld [vmem:[#allocation6 + $0x100] sm:$0xff]
    %v209 = vld [vmem:[#allocation6 + $0x108] sm:$0xff]
    %v210 = vld [vmem:[#allocation6 + $0x110] sm:$0xff]
    %v211 = vld [vmem:[#allocation6 + $0x118] sm:$0xff]
    %v212 = vld [vmem:[#allocation6 + $0x120] sm:$0xff]
    %v213 = vld [vmem:[#allocation6 + $0x128] sm:$0xff]
    %v214 = vld [vmem:[#allocation6 + $0x130] sm:$0xff]
    %v215 = vld [vmem:[#allocation6 + $0x138] sm:$0xff]
    %v216 = vld [vmem:[#allocation6 + $0x140] sm:$0xff]
    %v217 = vld [vmem:[#allocation6 + $0x148] sm:$0xff]
    %v218 = vld [vmem:[#allocation6 + $0x150] sm:$0xff]
    %v219 = vld [vmem:[#allocation6 + $0x158] sm:$0xff]
    %v220 = vld [vmem:[#allocation6 + $0x160] sm:$0xff]
    %v221 = vld [vmem:[#allocation6 + $0x168] sm:$0xff]
    %v222 = vld [vmem:[#allocation6 + $0x170] sm:$0xff]
    %v223 = vld [vmem:[#allocation6 + $0x178] sm:$0xff]
    %v224 = vld [vmem:[#allocation6 + $0x180] sm:$0xff]
    %v225 = vld [vmem:[#allocation6 + $0x188] sm:$0xff]
    %v226 = vld [vmem:[#allocation6 + $0x190] sm:$0xff]
    %v227 = vld [vmem:[#allocation6 + $0x198] sm:$0xff]
    %v228 = vld [vmem:[#allocation6 + $0x1a0] sm:$0xff]
    %v229 = vld [vmem:[#allocation6 + $0x1a8] sm:$0xff]
    %v230 = vld [vmem:[#allocation6 + $0x1b0] sm:$0xff]
    %v231 = vld [vmem:[#allocation6 + $0x1b8] sm:$0xff]
    %v232 = vld [vmem:[#allocation6 + $0x1c0] sm:$0xff]
    %v233 = vld [vmem:[#allocation6 + $0x1c8] sm:$0xff]
    %v234 = vld [vmem:[#allocation6 + $0x1d0] sm:$0xff]
    %v235 = vld [vmem:[#allocation6 + $0x1d8] sm:$0xff]
    %v236 = vld [vmem:[#allocation6 + $0x1e0] sm:$0xff]
    %v237 = vld [vmem:[#allocation6 + $0x1e8] sm:$0xff]
    %v238 = vld [vmem:[#allocation6 + $0x1f0] sm:$0xff]
    %v239 = vld [vmem:[#allocation6 + $0x1f8] sm:$0xff]
    %v240 = vld [vmem:[#allocation6 + $0x200] sm:$0xff]
    %v241 = vld [vmem:[#allocation6 + $0x208] sm:$0xff]
    %v242 = vld [vmem:[#allocation6 + $0x210] sm:$0xff]
    %v243 = vld [vmem:[#allocation6 + $0x218] sm:$0xff]
    %v244 = vld [vmem:[#allocation6 + $0x220] sm:$0xff]
    %v245 = vld [vmem:[#allocation6 + $0x228] sm:$0xff]
    %v246 = vld [vmem:[#allocation6 + $0x230] sm:$0xff]
    %v247 = vld [vmem:[#allocation6 + $0x238] sm:$0xff]
    %v248 = vld [vmem:[#allocation6 + $0x240] sm:$0xff]
    %v249 = vld [vmem:[#allocation6 + $0x248] sm:$0xff]
    %v250 = vld [vmem:[#allocation6 + $0x250] sm:$0xff]
    %v251 = vld [vmem:[#allocation6 + $0x258] sm:$0xff]
    %v252 = vld [vmem:[#allocation6 + $0x260] sm:$0xff]
    %v253 = vld [vmem:[#allocation6 + $0x268] sm:$0xff]
    %v254 = vld [vmem:[#allocation6 + $0x270] sm:$0xff]
    %v255 = vld [vmem:[#allocation6 + $0x278] sm:$0xff]
    %v256 = vld [vmem:[#allocation6 + $0x280] sm:$0xff]
    %v257 = vld [vmem:[#allocation6 + $0x288] sm:$0xff]
    %v258 = vld [vmem:[#allocation6 + $0x290] sm:$0xff]
    %v259 = vld [vmem:[#allocation6 + $0x298] sm:$0xff]
    %v260 = vld [vmem:[#allocation6 + $0x2a0] sm:$0xff]
    %v261 = vld [vmem:[#allocation6 + $0x2a8] sm:$0xff]
    %v262 = vld [vmem:[#allocation6 + $0x2b0] sm:$0xff]
    %v263 = vld [vmem:[#allocation6 + $0x2b8] sm:$0xff]
    %v264 = vld [vmem:[#allocation6 + $0x2c0] sm:$0xff]
    %v265 = vld [vmem:[#allocation6 + $0x2c8] sm:$0xff]
    %v266 = vld [vmem:[#allocation6 + $0x2d0] sm:$0xff]
    %v267 = vld [vmem:[#allocation6 + $0x2d8] sm:$0xff]
    %v268 = vld [vmem:[#allocation6 + $0x2e0] sm:$0xff]
    %v269 = vld [vmem:[#allocation6 + $0x2e8] sm:$0xff]
    %v270 = vld [vmem:[#allocation6 + $0x2f0] sm:$0xff]
    %v271 = vld [vmem:[#allocation6 + $0x2f8] sm:$0xff]
    %v272 = vld [vmem:[#allocation6 + $0x300] sm:$0xff]
    %v273 = vld [vmem:[#allocation6 + $0x308] sm:$0xff]
    %v274 = vld [vmem:[#allocation6 + $0x310] sm:$0xff]
    %v275 = vld [vmem:[#allocation6 + $0x318] sm:$0xff]
    %v276 = vld [vmem:[#allocation6 + $0x320] sm:$0xff]
    %v277 = vld [vmem:[#allocation6 + $0x328] sm:$0xff]
    %v278 = vld [vmem:[#allocation6 + $0x330] sm:$0xff]
    %v279 = vld [vmem:[#allocation6 + $0x338] sm:$0xff]
    %v280 = vld [vmem:[#allocation6 + $0x340] sm:$0xff]
    %v281 = vld [vmem:[#allocation6 + $0x348] sm:$0xff]
    %v282 = vld [vmem:[#allocation6 + $0x350] sm:$0xff]
    %v283 = vld [vmem:[#allocation6 + $0x358] sm:$0xff]
    %v284 = vld [vmem:[#allocation6 + $0x360] sm:$0xff]
    %v285 = vld [vmem:[#allocation6 + $0x368] sm:$0xff]
    %v286 = vld [vmem:[#allocation6 + $0x370] sm:$0xff]
    %v287 = vld [vmem:[#allocation6 + $0x378] sm:$0xff]
    %v288 = vld [vmem:[#allocation6 + $0x380] sm:$0xff]
    %v289 = vld [vmem:[#allocation6 + $0x388] sm:$0xff]
    %v290 = vld [vmem:[#allocation6 + $0x390] sm:$0xff]
    %v291 = vld [vmem:[#allocation6 + $0x398] sm:$0xff]
    %v292 = vld [vmem:[#allocation6 + $0x3a0] sm:$0xff]
    %v293 = vld [vmem:[#allocation6 + $0x3a8] sm:$0xff]
    %v294 = vld [vmem:[#allocation6 + $0x3b0] sm:$0xff]
    %v295 = vld [vmem:[#allocation6 + $0x3b8] sm:$0xff]
    %v296 = vld [vmem:[#allocation6 + $0x3c0] sm:$0xff]
    %v297 = vld [vmem:[#allocation6 + $0x3c8] sm:$0xff]
    %v298 = vld [vmem:[#allocation6 + $0x3d0] sm:$0xff]
    %v299 = vld [vmem:[#allocation6 + $0x3d8] sm:$0xff]
    %v300 = vld [vmem:[#allocation6 + $0x3e0] sm:$0xff]
    %v301 = vld [vmem:[#allocation6 + $0x3e8] sm:$0xff]
    %v302 = vld [vmem:[#allocation6 + $0x3f0] sm:$0xff]
    %v303 = vld [vmem:[#allocation6 + $0x3f8] sm:$0xff]
    %v304 = vld [vmem:[%s2] sm:$0xf]
    %v305 = vld [vmem:[%s4] sm:$0xf]
    %v306 = vld [vmem:[%s0] sm:$0xff]
    %307 = vst [vmem:[#allocation2] sm:$0xff] %v306
    %308 = vst [vmem:[#allocation2 + $0x8] sm:$0xff] 0.0
    %v309 = vld [vmem:[#allocation2] sm:$0xff]
    %v310 = vld [vmem:[#allocation2 + $0x8] sm:$0xff]
    %v312 = vlaneseq
    %v313 = vshrl.u32 %v312, 7
    %v314 = vsub.s32 0, %v313
    %v315 = vrot.slane %v304, %v314
    %v316 = vlaneseq
    %v317 = vshrl.u32 %v316, 7
    %v318 = vsub.s32 1, %v317
    %v319 = vrot.slane %v304, %v318
    %v320 = vlaneseq
    %v321 = vshrl.u32 %v320, 7
    %v322 = vsub.s32 2, %v321
    %v323 = vrot.slane %v304, %v322
    %v324 = vlaneseq
    %v325 = vshrl.u32 %v324, 7
    %v326 = vsub.s32 3, %v325
    %v327 = vrot.slane %v304, %v326
    %332 = vmatprep.subr.mxu0 %v109
    %333 = vmatpush1.msra.mxu0 %v108
    %334 = vmatprep.subr.mxu0 %v105
    %335 = vmatpush1.msra.mxu0 %v104
    %336 = vmatprep.subr.mxu0 %v101
    %337 = vmatpush1.msra.mxu0 %v100
    %338 = vmatprep.subr.mxu0 %v97
    %339 = vmatpush1.msra.mxu0 %v96
    %340 = vmatprep.subr.mxu0 %v93
    %341 = vmatpush1.msra.mxu0 %v92
    %342 = vmatprep.subr.mxu0 %v89
    %343 = vmatpush1.msra.mxu0 %v88
    %344 = vmatprep.subr.mxu0 %v85
    %345 = vmatpush1.msra.mxu0 %v84
    %346 = vmatprep.subr.mxu0 %v81
    %347 = vmatpush1.msra.mxu0 %v80
    %348 = vmatprep.subr.mxu0 %v77
    %349 = vmatpush1.msra.mxu0 %v76
    %350 = vmatprep.subr.mxu0 %v73
    %351 = vmatpush1.msra.mxu0 %v72
    %352 = vmatprep.subr.mxu0 %v69
    %353 = vmatpush1.msra.mxu0 %v68
    %354 = vmatprep.subr.mxu0 %v65
    %355 = vmatpush1.msra.mxu0 %v64
    %356 = vmatprep.subr.mxu0 %v61
    %357 = vmatpush1.msra.mxu0 %v60
    %358 = vmatprep.subr.mxu0 %v57
    %359 = vmatpush1.msra.mxu0 %v56
    %360 = vmatprep.subr.mxu0 %v53
    %361 = vmatpush1.msra.mxu0 %v52
    %362 = vmatprep.subr.mxu0 %v49
    %363 = vmatpush1.msra.mxu0 %v48
    %364 = vmatprep.subr.mxu0 %v173
    %365 = vmatpush2.msra.mxu0 %v172
    %366 = vmatprep.subr.mxu0 %v169
    %367 = vmatpush2.msra.mxu0 %v168
    %368 = vmatprep.subr.mxu0 %v165
    %369 = vmatpush2.msra.mxu0 %v164
    %370 = vmatprep.subr.mxu0 %v161
    %371 = vmatpush2.msra.mxu0 %v160
    %372 = vmatprep.subr.mxu0 %v157
    %373 = vmatpush2.msra.mxu0 %v156
    %374 = vmatprep.subr.mxu0 %v153
    %375 = vmatpush2.msra.mxu0 %v152
    %376 = vmatprep.subr.mxu0 %v149
    %377 = vmatpush2.msra.mxu0 %v148
    %378 = vmatprep.subr.mxu0 %v145
    %379 = vmatpush2.msra.mxu0 %v144
    %380 = vmatprep.subr.mxu0 %v141
    %381 = vmatpush2.msra.mxu0 %v140
    %382 = vmatprep.subr.mxu0 %v137
    %383 = vmatpush2.msra.mxu0 %v136
    %384 = vmatprep.subr.mxu0 %v133
    %385 = vmatpush2.msra.mxu0 %v132
    %386 = vmatprep.subr.mxu0 %v129
    %387 = vmatpush2.msra.mxu0 %v128
    %388 = vmatprep.subr.mxu0 %v125
    %389 = vmatpush2.msra.mxu0 %v124
    %390 = vmatprep.subr.mxu0 %v121
    %391 = vmatpush2.msra.mxu0 %v120
    %392 = vmatprep.subr.mxu0 %v117
    %393 = vmatpush2.msra.mxu0 %v116
    %394 = vmatprep.subr.mxu0 %v113
    %395 = vmatpush2.msra.mxu0 %v112
    %396 = vmatprep.mubr.f32.mxu0 %v310
    %397 = vmatmul.mubr.f32.gmra.mxu0 %v309
    %v398 = vpop.f32.mrf.mxu0
    %v399 = vadd.f32 %v315, %v398
    %v400 = vpop.f32.mrf.mxu0
    %v401 = vadd.f32 %v319, %v400
    %402 = vdwg.mxu0
    %403 = vmatprep.subr.mxu0 %v111
    %404 = vmatpush1.msra.mxu0 %v110
    %405 = vmatprep.subr.mxu0 %v107
    %406 = vmatpush1.msra.mxu0 %v106
    %407 = vmatprep.subr.mxu0 %v103
    %408 = vmatpush1.msra.mxu0 %v102
    %409 = vmatprep.subr.mxu0 %v99
    %410 = vmatpush1.msra.mxu0 %v98
    %411 = vmatprep.subr.mxu0 %v95
    %412 = vmatpush1.msra.mxu0 %v94
    %413 = vmatprep.subr.mxu0 %v91
    %414 = vmatpush1.msra.mxu0 %v90
    %415 = vmatprep.subr.mxu0 %v87
    %416 = vmatpush1.msra.mxu0 %v86
    %417 = vmatprep.subr.mxu0 %v83
    %418 = vmatpush1.msra.mxu0 %v82
    %419 = vmatprep.subr.mxu0 %v79
    %420 = vmatpush1.msra.mxu0 %v78
    %421 = vmatprep.subr.mxu0 %v75
    %422 = vmatpush1.msra.mxu0 %v74
    %423 = vmatprep.subr.mxu0 %v71
    %424 = vmatpush1.msra.mxu0 %v70
    %425 = vmatprep.subr.mxu0 %v67
    %426 = vmatpush1.msra.mxu0 %v66
    %427 = vmatprep.subr.mxu0 %v63
    %428 = vmatpush1.msra.mxu0 %v62
    %429 = vmatprep.subr.mxu0 %v59
    %430 = vmatpush1.msra.mxu0 %v58
    %431 = vmatprep.subr.mxu0 %v55
    %432 = vmatpush1.msra.mxu0 %v54
    %433 = vmatprep.subr.mxu0 %v51
    %434 = vmatpush1.msra.mxu0 %v50
    %435 = vmatprep.subr.mxu0 %v175
    %436 = vmatpush2.msra.mxu0 %v174
    %437 = vmatprep.subr.mxu0 %v171
    %438 = vmatpush2.msra.mxu0 %v170
    %439 = vmatprep.subr.mxu0 %v167
    %440 = vmatpush2.msra.mxu0 %v166
    %441 = vmatprep.subr.mxu0 %v163
    %442 = vmatpush2.msra.mxu0 %v162
    %443 = vmatprep.subr.mxu0 %v159
    %444 = vmatpush2.msra.mxu0 %v158
    %445 = vmatprep.subr.mxu0 %v155
    %446 = vmatpush2.msra.mxu0 %v154
    %447 = vmatprep.subr.mxu0 %v151
    %448 = vmatpush2.msra.mxu0 %v150
    %449 = vmatprep.subr.mxu0 %v147
    %450 = vmatpush2.msra.mxu0 %v146
    %451 = vmatprep.subr.mxu0 %v143
    %452 = vmatpush2.msra.mxu0 %v142
    %453 = vmatprep.subr.mxu0 %v139
    %454 = vmatpush2.msra.mxu0 %v138
    %455 = vmatprep.subr.mxu0 %v135
    %456 = vmatpush2.msra.mxu0 %v134
    %457 = vmatprep.subr.mxu0 %v131
    %458 = vmatpush2.msra.mxu0 %v130
    %459 = vmatprep.subr.mxu0 %v127
    %460 = vmatpush2.msra.mxu0 %v126
    %461 = vmatprep.subr.mxu0 %v123
    %462 = vmatpush2.msra.mxu0 %v122
    %463 = vmatprep.subr.mxu0 %v119
    %464 = vmatpush2.msra.mxu0 %v118
    %465 = vmatprep.subr.mxu0 %v115
    %466 = vmatpush2.msra.mxu0 %v114
    %467 = vmatprep.mubr.f32.mxu0 %v310
    %468 = vmatmul.mubr.f32.gmra.mxu0 %v309
    %v469 = vpop.f32.mrf.mxu0
    %v470 = vadd.f32 %v323, %v469
    %v471 = vpop.f32.mrf.mxu0
    %v472 = vadd.f32 %v327, %v471
    %473 = vdwg.mxu0
    %v474 = vxor.u32 %v399, 2147483648
    %v475 = vmul.f32 %v474, 1.442695
    %v476 = vpow.pop %v475
    %v477 = vadd.f32 %v476, 1.0
    %v478 = vrcp.pop %v477
    %v479 = vmul.f32 1.0, %v478
    %v480 = vxor.u32 %v401, 2147483648
    %v481 = vmul.f32 %v480, 1.442695
    %v482 = vpow.pop %v481
    %v483 = vadd.f32 %v482, 1.0
    %v484 = vrcp.pop %v483
    %v485 = vmul.f32 1.0, %v484
    %v486 = vtanh.pop %v470
    %v487 = vxor.u32 %v472, 2147483648
    %v488 = vmul.f32 %v487, 1.442695
    %v489 = vpow.pop %v488
    %v490 = vadd.f32 %v489, 1.0
    %v491 = vrcp.pop %v490
    %v492 = vmul.f32 1.0, %v491
    %v493 = vmul.f32 %v485, 0.0
    %v494 = vmul.f32 %v479, %v486
    %v495 = vadd.f32 %v493, %v494
    %v496 = vtanh.pop %v495
    %v497 = vmul.f32 %v492, %v496
    %498 = vst [vmem:[#allocation3] sm:$0xff] %v497
    %499 = vst [vmem:[#allocation3 + $0x8] sm:$0xff] 0.0
    %v500 = vld [vmem:[#allocation3] sm:$0xff]
    %v501 = vld [vmem:[#allocation3 + $0x8] sm:$0xff]
    %v503 = vlaneseq
    %v504 = vshrl.u32 %v503, 7
    %v505 = vsub.s32 0, %v504
    %v506 = vrot.slane %v305, %v505
    %v507 = vlaneseq
    %v508 = vshrl.u32 %v507, 7
    %v509 = vsub.s32 1, %v508
    %v510 = vrot.slane %v305, %v509
    %v511 = vlaneseq
    %v512 = vshrl.u32 %v511, 7
    %v513 = vsub.s32 2, %v512
    %v514 = vrot.slane %v305, %v513
    %v515 = vlaneseq
    %v516 = vshrl.u32 %v515, 7
    %v517 = vsub.s32 3, %v516
    %v518 = vrot.slane %v305, %v517
    %523 = vmatprep.subr.mxu0 %v237
    %524 = vmatpush1.msra.mxu0 %v236
    %525 = vmatprep.subr.mxu0 %v233
    %526 = vmatpush1.msra.mxu0 %v232
    %527 = vmatprep.subr.mxu0 %v229
    %528 = vmatpush1.msra.mxu0 %v228
    %529 = vmatprep.subr.mxu0 %v225
    %530 = vmatpush1.msra.mxu0 %v224
    %531 = vmatprep.subr.mxu0 %v221
    %532 = vmatpush1.msra.mxu0 %v220
    %533 = vmatprep.subr.mxu0 %v217
    %534 = vmatpush1.msra.mxu0 %v216
    %535 = vmatprep.subr.mxu0 %v213
    %536 = vmatpush1.msra.mxu0 %v212
    %537 = vmatprep.subr.mxu0 %v209
    %538 = vmatpush1.msra.mxu0 %v208
    %539 = vmatprep.subr.mxu0 %v205
    %540 = vmatpush1.msra.mxu0 %v204
    %541 = vmatprep.subr.mxu0 %v201
    %542 = vmatpush1.msra.mxu0 %v200
    %543 = vmatprep.subr.mxu0 %v197
    %544 = vmatpush1.msra.mxu0 %v196
    %545 = vmatprep.subr.mxu0 %v193
    %546 = vmatpush1.msra.mxu0 %v192
    %547 = vmatprep.subr.mxu0 %v189
    %548 = vmatpush1.msra.mxu0 %v188
    %549 = vmatprep.subr.mxu0 %v185
    %550 = vmatpush1.msra.mxu0 %v184
    %551 = vmatprep.subr.mxu0 %v181
    %552 = vmatpush1.msra.mxu0 %v180
    %553 = vmatprep.subr.mxu0 %v177
    %554 = vmatpush1.msra.mxu0 %v176
    %555 = vmatprep.subr.mxu0 %v301
    %556 = vmatpush2.msra.mxu0 %v300
    %557 = vmatprep.subr.mxu0 %v297
    %558 = vmatpush2.msra.mxu0 %v296
    %559 = vmatprep.subr.mxu0 %v293
    %560 = vmatpush2.msra.mxu0 %v292
    %561 = vmatprep.subr.mxu0 %v289
    %562 = vmatpush2.msra.mxu0 %v288
    %563 = vmatprep.subr.mxu0 %v285
    %564 = vmatpush2.msra.mxu0 %v284
    %565 = vmatprep.subr.mxu0 %v281
    %566 = vmatpush2.msra.mxu0 %v280
    %567 = vmatprep.subr.mxu0 %v277
    %568 = vmatpush2.msra.mxu0 %v276
    %569 = vmatprep.subr.mxu0 %v273
    %570 = vmatpush2.msra.mxu0 %v272
    %571 = vmatprep.subr.mxu0 %v269
    %572 = vmatpush2.msra.mxu0 %v268
    %573 = vmatprep.subr.mxu0 %v265
    %574 = vmatpush2.msra.mxu0 %v264
    %575 = vmatprep.subr.mxu0 %v261
    %576 = vmatpush2.msra.mxu0 %v260
    %577 = vmatprep.subr.mxu0 %v257
    %578 = vmatpush2.msra.mxu0 %v256
    %579 = vmatprep.subr.mxu0 %v253
    %580 = vmatpush2.msra.mxu0 %v252
    %581 = vmatprep.subr.mxu0 %v249
    %582 = vmatpush2.msra.mxu0 %v248
    %583 = vmatprep.subr.mxu0 %v245
    %584 = vmatpush2.msra.mxu0 %v244
    %585 = vmatprep.subr.mxu0 %v241
    %586 = vmatpush2.msra.mxu0 %v240
    %587 = vmatprep.mubr.f32.mxu0 %v501
    %588 = vmatmul.mubr.f32.gmra.mxu0 %v500
    %v589 = vpop.f32.mrf.mxu0
    %v590 = vadd.f32 %v506, %v589
    %v591 = vpop.f32.mrf.mxu0
    %v592 = vadd.f32 %v510, %v591
    %593 = vdwg.mxu0
    %594 = vmatprep.subr.mxu0 %v239
    %595 = vmatpush1.msra.mxu0 %v238
    %596 = vmatprep.subr.mxu0 %v235
    %597 = vmatpush1.msra.mxu0 %v234
    %598 = vmatprep.subr.mxu0 %v231
    %599 = vmatpush1.msra.mxu0 %v230
    %600 = vmatprep.subr.mxu0 %v227
    %601 = vmatpush1.msra.mxu0 %v226
    %602 = vmatprep.subr.mxu0 %v223
    %603 = vmatpush1.msra.mxu0 %v222
    %604 = vmatprep.subr.mxu0 %v219
    %605 = vmatpush1.msra.mxu0 %v218
    %606 = vmatprep.subr.mxu0 %v215
    %607 = vmatpush1.msra.mxu0 %v214
    %608 = vmatprep.subr.mxu0 %v211
    %609 = vmatpush1.msra.mxu0 %v210
    %610 = vmatprep.subr.mxu0 %v207
    %611 = vmatpush1.msra.mxu0 %v206
    %612 = vmatprep.subr.mxu0 %v203
    %613 = vmatpush1.msra.mxu0 %v202
    %614 = vmatprep.subr.mxu0 %v199
    %615 = vmatpush1.msra.mxu0 %v198
    %616 = vmatprep.subr.mxu0 %v195
    %617 = vmatpush1.msra.mxu0 %v194
    %618 = vmatprep.subr.mxu0 %v191
    %619 = vmatpush1.msra.mxu0 %v190
    %620 = vmatprep.subr.mxu0 %v187
    %621 = vmatpush1.msra.mxu0 %v186
    %622 = vmatprep.subr.mxu0 %v183
    %623 = vmatpush1.msra.mxu0 %v182
    %624 = vmatprep.subr.mxu0 %v179
    %625 = vmatpush1.msra.mxu0 %v178
    %626 = vmatprep.subr.mxu0 %v303
    %627 = vmatpush2.msra.mxu0 %v302
    %628 = vmatprep.subr.mxu0 %v299
    %629 = vmatpush2.msra.mxu0 %v298
    %630 = vmatprep.subr.mxu0 %v295
    %631 = vmatpush2.msra.mxu0 %v294
    %632 = vmatprep.subr.mxu0 %v291
    %633 = vmatpush2.msra.mxu0 %v290
    %634 = vmatprep.subr.mxu0 %v287
    %635 = vmatpush2.msra.mxu0 %v286
    %636 = vmatprep.subr.mxu0 %v283
    %637 = vmatpush2.msra.mxu0 %v282
    %638 = vmatprep.subr.mxu0 %v279
    %639 = vmatpush2.msra.mxu0 %v278
    %640 = vmatprep.subr.mxu0 %v275
    %641 = vmatpush2.msra.mxu0 %v274
    %642 = vmatprep.subr.mxu0 %v271
    %643 = vmatpush2.msra.mxu0 %v270
    %644 = vmatprep.subr.mxu0 %v267
    %645 = vmatpush2.msra.mxu0 %v266
    %646 = vmatprep.subr.mxu0 %v263
    %647 = vmatpush2.msra.mxu0 %v262
    %648 = vmatprep.subr.mxu0 %v259
    %649 = vmatpush2.msra.mxu0 %v258
    %650 = vmatprep.subr.mxu0 %v255
    %651 = vmatpush2.msra.mxu0 %v254
    %652 = vmatprep.subr.mxu0 %v251
    %653 = vmatpush2.msra.mxu0 %v250
    %654 = vmatprep.subr.mxu0 %v247
    %655 = vmatpush2.msra.mxu0 %v246
    %656 = vmatprep.subr.mxu0 %v243
    %657 = vmatpush2.msra.mxu0 %v242
    %658 = vmatprep.mubr.f32.mxu0 %v501
    %659 = vmatmul.mubr.f32.gmra.mxu0 %v500
    %v660 = vpop.f32.mrf.mxu0
    %v661 = vadd.f32 %v514, %v660
    %v662 = vpop.f32.mrf.mxu0
    %v663 = vadd.f32 %v518, %v662
    %664 = vdwg.mxu0
    %v665 = vxor.u32 %v590, 2147483648
    %v666 = vmul.f32 %v665, 1.442695
    %v667 = vpow.pop %v666
    %v668 = vadd.f32 %v667, 1.0
    %v669 = vrcp.pop %v668
    %v670 = vmul.f32 1.0, %v669
    %v671 = vxor.u32 %v592, 2147483648
    %v672 = vmul.f32 %v671, 1.442695
    %v673 = vpow.pop %v672
    %v674 = vadd.f32 %v673, 1.0
    %v675 = vrcp.pop %v674
    %v676 = vmul.f32 1.0, %v675
    %v677 = vtanh.pop %v661
    %v678 = vxor.u32 %v663, 2147483648
    %v679 = vmul.f32 %v678, 1.442695
    %v680 = vpow.pop %v679
    %v681 = vadd.f32 %v680, 1.0
    %v682 = vrcp.pop %v681
    %v683 = vmul.f32 1.0, %v682
    %v684 = vmul.f32 %v676, 0.0
    %v685 = vmul.f32 %v670, %v677
    %v686 = vadd.f32 %v684, %v685
    %v687 = vtanh.pop %v686
    %v688 = vmul.f32 %v683, %v687
    %689 = vst [vmem:[%s5] sm:$0xff] %v688
    %s690 = scalar_lea.vmem %s0, 8
    %v691 = vld [vmem:[%s690] sm:$0xff]
    %692 = vst [vmem:[#allocation2] sm:$0xff] %v691
    %693 = vst [vmem:[#allocation2 + $0x8] sm:$0xff] %v497
    %v694 = vld [vmem:[#allocation2] sm:$0xff]
    %v695 = vld [vmem:[#allocation2 + $0x8] sm:$0xff]
    %696 = vmatprep.subr.mxu0 %v109
    %697 = vmatpush1.msra.mxu0 %v108
    %698 = vmatprep.subr.mxu0 %v105
    %699 = vmatpush1.msra.mxu0 %v104
    %700 = vmatprep.subr.mxu0 %v101
    %701 = vmatpush1.msra.mxu0 %v100
    %702 = vmatprep.subr.mxu0 %v97
    %703 = vmatpush1.msra.mxu0 %v96
    %704 = vmatprep.subr.mxu0 %v93
    %705 = vmatpush1.msra.mxu0 %v92
    %706 = vmatprep.subr.mxu0 %v89
    %707 = vmatpush1.msra.mxu0 %v88
    %708 = vmatprep.subr.mxu0 %v85
    %709 = vmatpush1.msra.mxu0 %v84
    %710 = vmatprep.subr.mxu0 %v81
    %711 = vmatpush1.msra.mxu0 %v80
    %712 = vmatprep.subr.mxu0 %v77
    %713 = vmatpush1.msra.mxu0 %v76
    %714 = vmatprep.subr.mxu0 %v73
    %715 = vmatpush1.msra.mxu0 %v72
    %716 = vmatprep.subr.mxu0 %v69
    %717 = vmatpush1.msra.mxu0 %v68
    %718 = vmatprep.subr.mxu0 %v65
    %719 = vmatpush1.msra.mxu0 %v64
    %720 = vmatprep.subr.mxu0 %v61
    %721 = vmatpush1.msra.mxu0 %v60
    %722 = vmatprep.subr.mxu0 %v57
    %723 = vmatpush1.msra.mxu0 %v56
    %724 = vmatprep.subr.mxu0 %v53
    %725 = vmatpush1.msra.mxu0 %v52
    %726 = vmatprep.subr.mxu0 %v49
    %727 = vmatpush1.msra.mxu0 %v48
    %728 = vmatprep.subr.mxu0 %v173
    %729 = vmatpush2.msra.mxu0 %v172
    %730 = vmatprep.subr.mxu0 %v169
    %731 = vmatpush2.msra.mxu0 %v168
    %732 = vmatprep.subr.mxu0 %v165
    %733 = vmatpush2.msra.mxu0 %v164
    %734 = vmatprep.subr.mxu0 %v161
    %735 = vmatpush2.msra.mxu0 %v160
    %736 = vmatprep.subr.mxu0 %v157
    %737 = vmatpush2.msra.mxu0 %v156
    %738 = vmatprep.subr.mxu0 %v153
    %739 = vmatpush2.msra.mxu0 %v152
    %740 = vmatprep.subr.mxu0 %v149
    %741 = vmatpush2.msra.mxu0 %v148
    %742 = vmatprep.subr.mxu0 %v145
    %743 = vmatpush2.msra.mxu0 %v144
    %744 = vmatprep.subr.mxu0 %v141
    %745 = vmatpush2.msra.mxu0 %v140
    %746 = vmatprep.subr.mxu0 %v137
    %747 = vmatpush2.msra.mxu0 %v136
    %748 = vmatprep.subr.mxu0 %v133
    %749 = vmatpush2.msra.mxu0 %v132
    %750 = vmatprep.subr.mxu0 %v129
    %751 = vmatpush2.msra.mxu0 %v128
    %752 = vmatprep.subr.mxu0 %v125
    %753 = vmatpush2.msra.mxu0 %v124
    %754 = vmatprep.subr.mxu0 %v121
    %755 = vmatpush2.msra.mxu0 %v120
    %756 = vmatprep.subr.mxu0 %v117
    %757 = vmatpush2.msra.mxu0 %v116
    %758 = vmatprep.subr.mxu0 %v113
    %759 = vmatpush2.msra.mxu0 %v112
    %760 = vmatprep.mubr.f32.mxu0 %v695
    %761 = vmatmul.mubr.f32.gmra.mxu0 %v694
    %v762 = vpop.f32.mrf.mxu0
    %v763 = vadd.f32 %v315, %v762
    %v764 = vpop.f32.mrf.mxu0
    %v765 = vadd.f32 %v319, %v764
    %766 = vdwg.mxu0
    %767 = vmatprep.subr.mxu0 %v111
    %768 = vmatpush1.msra.mxu0 %v110
    %769 = vmatprep.subr.mxu0 %v107
    %770 = vmatpush1.msra.mxu0 %v106
    %771 = vmatprep.subr.mxu0 %v103
    %772 = vmatpush1.msra.mxu0 %v102
    %773 = vmatprep.subr.mxu0 %v99
    %774 = vmatpush1.msra.mxu0 %v98
    %775 = vmatprep.subr.mxu0 %v95
    %776 = vmatpush1.msra.mxu0 %v94
    %777 = vmatprep.subr.mxu0 %v91
    %778 = vmatpush1.msra.mxu0 %v90
    %779 = vmatprep.subr.mxu0 %v87
    %780 = vmatpush1.msra.mxu0 %v86
    %781 = vmatprep.subr.mxu0 %v83
    %782 = vmatpush1.msra.mxu0 %v82
    %783 = vmatprep.subr.mxu0 %v79
    %784 = vmatpush1.msra.mxu0 %v78
    %785 = vmatprep.subr.mxu0 %v75
    %786 = vmatpush1.msra.mxu0 %v74
    %787 = vmatprep.subr.mxu0 %v71
    %788 = vmatpush1.msra.mxu0 %v70
    %789 = vmatprep.subr.mxu0 %v67
    %790 = vmatpush1.msra.mxu0 %v66
    %791 = vmatprep.subr.mxu0 %v63
    %792 = vmatpush1.msra.mxu0 %v62
    %793 = vmatprep.subr.mxu0 %v59
    %794 = vmatpush1.msra.mxu0 %v58
    %795 = vmatprep.subr.mxu0 %v55
    %796 = vmatpush1.msra.mxu0 %v54
    %797 = vmatprep.subr.mxu0 %v51
    %798 = vmatpush1.msra.mxu0 %v50
    %799 = vmatprep.subr.mxu0 %v175
    %800 = vmatpush2.msra.mxu0 %v174
    %801 = vmatprep.subr.mxu0 %v171
    %802 = vmatpush2.msra.mxu0 %v170
    %803 = vmatprep.subr.mxu0 %v167
    %804 = vmatpush2.msra.mxu0 %v166
    %805 = vmatprep.subr.mxu0 %v163
    %806 = vmatpush2.msra.mxu0 %v162
    %807 = vmatprep.subr.mxu0 %v159
    %808 = vmatpush2.msra.mxu0 %v158
    %809 = vmatprep.subr.mxu0 %v155
    %810 = vmatpush2.msra.mxu0 %v154
    %811 = vmatprep.subr.mxu0 %v151
    %812 = vmatpush2.msra.mxu0 %v150
    %813 = vmatprep.subr.mxu0 %v147
    %814 = vmatpush2.msra.mxu0 %v146
    %815 = vmatprep.subr.mxu0 %v143
    %816 = vmatpush2.msra.mxu0 %v142
    %817 = vmatprep.subr.mxu0 %v139
    %818 = vmatpush2.msra.mxu0 %v138
    %819 = vmatprep.subr.mxu0 %v135
    %820 = vmatpush2.msra.mxu0 %v134
    %821 = vmatprep.subr.mxu0 %v131
    %822 = vmatpush2.msra.mxu0 %v130
    %823 = vmatprep.subr.mxu0 %v127
    %824 = vmatpush2.msra.mxu0 %v126
    %825 = vmatprep.subr.mxu0 %v123
    %826 = vmatpush2.msra.mxu0 %v122
    %827 = vmatprep.subr.mxu0 %v119
    %828 = vmatpush2.msra.mxu0 %v118
    %829 = vmatprep.subr.mxu0 %v115
    %830 = vmatpush2.msra.mxu0 %v114
    %831 = vmatprep.mubr.f32.mxu0 %v695
    %832 = vmatmul.mubr.f32.gmra.mxu0 %v694
    %v833 = vpop.f32.mrf.mxu0
    %v834 = vadd.f32 %v323, %v833
    %v835 = vpop.f32.mrf.mxu0
    %v836 = vadd.f32 %v327, %v835
    %837 = vdwg.mxu0
    %v838 = vxor.u32 %v763, 2147483648
    %v839 = vmul.f32 %v838, 1.442695
    %v840 = vpow.pop %v839
    %v841 = vadd.f32 %v840, 1.0
    %v842 = vrcp.pop %v841
    %v843 = vmul.f32 1.0, %v842
    %v844 = vxor.u32 %v765, 2147483648
    %v845 = vmul.f32 %v844, 1.442695
    %v846 = vpow.pop %v845
    %v847 = vadd.f32 %v846, 1.0
    %v848 = vrcp.pop %v847
    %v849 = vmul.f32 1.0, %v848
    %v850 = vtanh.pop %v834
    %v851 = vxor.u32 %v836, 2147483648
    %v852 = vmul.f32 %v851, 1.442695
    %v853 = vpow.pop %v852
    %v854 = vadd.f32 %v853, 1.0
    %v855 = vrcp.pop %v854
    %v856 = vmul.f32 1.0, %v855
    %v857 = vmul.f32 %v849, %v495
    %v858 = vmul.f32 %v843, %v850
    %v859 = vadd.f32 %v857, %v858
    %v860 = vtanh.pop %v859
    %v861 = vmul.f32 %v856, %v860
    %862 = vst [vmem:[#allocation3] sm:$0xff] %v861
    %863 = vst [vmem:[#allocation3 + $0x8] sm:$0xff] %v688
    %v864 = vld [vmem:[#allocation3] sm:$0xff]
    %v865 = vld [vmem:[#allocation3 + $0x8] sm:$0xff]
    %866 = vmatprep.subr.mxu0 %v237
    %867 = vmatpush1.msra.mxu0 %v236
    %868 = vmatprep.subr.mxu0 %v233
    %869 = vmatpush1.msra.mxu0 %v232
    %870 = vmatprep.subr.mxu0 %v229
    %871 = vmatpush1.msra.mxu0 %v228
    %872 = vmatprep.subr.mxu0 %v225
    %873 = vmatpush1.msra.mxu0 %v224
    %874 = vmatprep.subr.mxu0 %v221
    %875 = vmatpush1.msra.mxu0 %v220
    %876 = vmatprep.subr.mxu0 %v217
    %877 = vmatpush1.msra.mxu0 %v216
    %878 = vmatprep.subr.mxu0 %v213
    %879 = vmatpush1.msra.mxu0 %v212
    %880 = vmatprep.subr.mxu0 %v209
    %881 = vmatpush1.msra.mxu0 %v208
    %882 = vmatprep.subr.mxu0 %v205
    %883 = vmatpush1.msra.mxu0 %v204
    %884 = vmatprep.subr.mxu0 %v201
    %885 = vmatpush1.msra.mxu0 %v200
    %886 = vmatprep.subr.mxu0 %v197
    %887 = vmatpush1.msra.mxu0 %v196
    %888 = vmatprep.subr.mxu0 %v193
    %889 = vmatpush1.msra.mxu0 %v192
    %890 = vmatprep.subr.mxu0 %v189
    %891 = vmatpush1.msra.mxu0 %v188
    %892 = vmatprep.subr.mxu0 %v185
    %893 = vmatpush1.msra.mxu0 %v184
    %894 = vmatprep.subr.mxu0 %v181
    %895 = vmatpush1.msra.mxu0 %v180
    %896 = vmatprep.subr.mxu0 %v177
    %897 = vmatpush1.msra.mxu0 %v176
    %898 = vmatprep.subr.mxu0 %v301
    %899 = vmatpush2.msra.mxu0 %v300
    %900 = vmatprep.subr.mxu0 %v297
    %901 = vmatpush2.msra.mxu0 %v296
    %902 = vmatprep.subr.mxu0 %v293
    %903 = vmatpush2.msra.mxu0 %v292
    %904 = vmatprep.subr.mxu0 %v289
    %905 = vmatpush2.msra.mxu0 %v288
    %906 = vmatprep.subr.mxu0 %v285
    %907 = vmatpush2.msra.mxu0 %v284
    %908 = vmatprep.subr.mxu0 %v281
    %909 = vmatpush2.msra.mxu0 %v280
    %910 = vmatprep.subr.mxu0 %v277
    %911 = vmatpush2.msra.mxu0 %v276
    %912 = vmatprep.subr.mxu0 %v273
    %913 = vmatpush2.msra.mxu0 %v272
    %914 = vmatprep.subr.mxu0 %v269
    %915 = vmatpush2.msra.mxu0 %v268
    %916 = vmatprep.subr.mxu0 %v265
    %917 = vmatpush2.msra.mxu0 %v264
    %918 = vmatprep.subr.mxu0 %v261
    %919 = vmatpush2.msra.mxu0 %v260
    %920 = vmatprep.subr.mxu0 %v257
    %921 = vmatpush2.msra.mxu0 %v256
    %922 = vmatprep.subr.mxu0 %v253
    %923 = vmatpush2.msra.mxu0 %v252
    %924 = vmatprep.subr.mxu0 %v249
    %925 = vmatpush2.msra.mxu0 %v248
    %926 = vmatprep.subr.mxu0 %v245
    %927 = vmatpush2.msra.mxu0 %v244
    %928 = vmatprep.subr.mxu0 %v241
    %929 = vmatpush2.msra.mxu0 %v240
    %930 = vmatprep.mubr.f32.mxu0 %v865
    %931 = vmatmul.mubr.f32.gmra.mxu0 %v864
    %v932 = vpop.f32.mrf.mxu0
    %v933 = vadd.f32 %v506, %v932
    %v934 = vpop.f32.mrf.mxu0
    %v935 = vadd.f32 %v510, %v934
    %936 = vdwg.mxu0
    %937 = vmatprep.subr.mxu0 %v239
    %938 = vmatpush1.msra.mxu0 %v238
    %939 = vmatprep.subr.mxu0 %v235
    %940 = vmatpush1.msra.mxu0 %v234
    %941 = vmatprep.subr.mxu0 %v231
    %942 = vmatpush1.msra.mxu0 %v230
    %943 = vmatprep.subr.mxu0 %v227
    %944 = vmatpush1.msra.mxu0 %v226
    %945 = vmatprep.subr.mxu0 %v223
    %946 = vmatpush1.msra.mxu0 %v222
    %947 = vmatprep.subr.mxu0 %v219
    %948 = vmatpush1.msra.mxu0 %v218
    %949 = vmatprep.subr.mxu0 %v215
    %950 = vmatpush1.msra.mxu0 %v214
    %951 = vmatprep.subr.mxu0 %v211
    %952 = vmatpush1.msra.mxu0 %v210
    %953 = vmatprep.subr.mxu0 %v207
    %954 = vmatpush1.msra.mxu0 %v206
    %955 = vmatprep.subr.mxu0 %v203
    %956 = vmatpush1.msra.mxu0 %v202
    %957 = vmatprep.subr.mxu0 %v199
    %958 = vmatpush1.msra.mxu0 %v198
    %959 = vmatprep.subr.mxu0 %v195
    %960 = vmatpush1.msra.mxu0 %v194
    %961 = vmatprep.subr.mxu0 %v191
    %962 = vmatpush1.msra.mxu0 %v190
    %963 = vmatprep.subr.mxu0 %v187
    %964 = vmatpush1.msra.mxu0 %v186
    %965 = vmatprep.subr.mxu0 %v183
    %966 = vmatpush1.msra.mxu0 %v182
    %967 = vmatprep.subr.mxu0 %v179
    %968 = vmatpush1.msra.mxu0 %v178
    %969 = vmatprep.subr.mxu0 %v303
    %970 = vmatpush2.msra.mxu0 %v302
    %971 = vmatprep.subr.mxu0 %v299
    %972 = vmatpush2.msra.mxu0 %v298
    %973 = vmatprep.subr.mxu0 %v295
    %974 = vmatpush2.msra.mxu0 %v294
    %975 = vmatprep.subr.mxu0 %v291
    %976 = vmatpush2.msra.mxu0 %v290
    %977 = vmatprep.subr.mxu0 %v287
    %978 = vmatpush2.msra.mxu0 %v286
    %979 = vmatprep.subr.mxu0 %v283
    %980 = vmatpush2.msra.mxu0 %v282
    %981 = vmatprep.subr.mxu0 %v279
    %982 = vmatpush2.msra.mxu0 %v278
    %983 = vmatprep.subr.mxu0 %v275
    %984 = vmatpush2.msra.mxu0 %v274
    %985 = vmatprep.subr.mxu0 %v271
    %986 = vmatpush2.msra.mxu0 %v270
    %987 = vmatprep.subr.mxu0 %v267
    %988 = vmatpush2.msra.mxu0 %v266
    %989 = vmatprep.subr.mxu0 %v263
    %990 = vmatpush2.msra.mxu0 %v262
    %991 = vmatprep.subr.mxu0 %v259
    %992 = vmatpush2.msra.mxu0 %v258
    %993 = vmatprep.subr.mxu0 %v255
    %994 = vmatpush2.msra.mxu0 %v254
    %995 = vmatprep.subr.mxu0 %v251
    %996 = vmatpush2.msra.mxu0 %v250
    %997 = vmatprep.subr.mxu0 %v247
    %998 = vmatpush2.msra.mxu0 %v246
    %999 = vmatprep.subr.mxu0 %v243
    %1000 = vmatpush2.msra.mxu0 %v242
    %1001 = vmatprep.mubr.f32.mxu0 %v865
    %1002 = vmatmul.mubr.f32.gmra.mxu0 %v864
    %v1003 = vpop.f32.mrf.mxu0
    %v1004 = vadd.f32 %v514, %v1003
    %v1005 = vpop.f32.mrf.mxu0
    %v1006 = vadd.f32 %v518, %v1005
    %1007 = vdwg.mxu0
    %v1008 = vxor.u32 %v933, 2147483648
    %v1009 = vmul.f32 %v1008, 1.442695
    %v1010 = vpow.pop %v1009
    %v1011 = vadd.f32 %v1010, 1.0
    %v1012 = vrcp.pop %v1011
    %v1013 = vmul.f32 1.0, %v1012
    %v1014 = vxor.u32 %v935, 2147483648
    %v1015 = vmul.f32 %v1014, 1.442695
    %v1016 = vpow.pop %v1015
    %v1017 = vadd.f32 %v1016, 1.0
    %v1018 = vrcp.pop %v1017
    %v1019 = vmul.f32 1.0, %v1018
    %v1020 = vtanh.pop %v1004
    %v1021 = vxor.u32 %v1006, 2147483648
    %v1022 = vmul.f32 %v1021, 1.442695
    %v1023 = vpow.pop %v1022
    %v1024 = vadd.f32 %v1023, 1.0
    %v1025 = vrcp.pop %v1024
    %v1026 = vmul.f32 1.0, %v1025
    %v1027 = vmul.f32 %v1019, %v686
    %v1028 = vmul.f32 %v1013, %v1020
    %v1029 = vadd.f32 %v1027, %v1028
    %v1030 = vtanh.pop %v1029
    %v1031 = vmul.f32 %v1026, %v1030
    %s1032 = scalar_lea.vmem %s5, 8
    %1033 = vst [vmem:[%s1032] sm:$0xff] %v1031
    %s1034 = scalar_lea.vmem %s0, 16
    %v1035 = vld [vmem:[%s1034] sm:$0xff]
    %1036 = vst [vmem:[#allocation2] sm:$0xff] %v1035
    %1037 = vst [vmem:[#allocation2 + $0x8] sm:$0xff] %v861
    %v1038 = vld [vmem:[#allocation2] sm:$0xff]
    %v1039 = vld [vmem:[#allocation2 + $0x8] sm:$0xff]
    %1040 = vmatprep.subr.mxu0 %v109
    %1041 = vmatpush1.msra.mxu0 %v108
    %1042 = vmatprep.subr.mxu0 %v105
    %1043 = vmatpush1.msra.mxu0 %v104
    %1044 = vmatprep.subr.mxu0 %v101
    %1045 = vmatpush1.msra.mxu0 %v100
    %1046 = vmatprep.subr.mxu0 %v97
    %1047 = vmatpush1.msra.mxu0 %v96
    %1048 = vmatprep.subr.mxu0 %v93
    %1049 = vmatpush1.msra.mxu0 %v92
    %1050 = vmatprep.subr.mxu0 %v89
    %1051 = vmatpush1.msra.mxu0 %v88
    %1052 = vmatprep.subr.mxu0 %v85
    %1053 = vmatpush1.msra.mxu0 %v84
    %1054 = vmatprep.subr.mxu0 %v81
    %1055 = vmatpush1.msra.mxu0 %v80
    %1056 = vmatprep.subr.mxu0 %v77
    %1057 = vmatpush1.msra.mxu0 %v76
    %1058 = vmatprep.subr.mxu0 %v73
    %1059 = vmatpush1.msra.mxu0 %v72
    %1060 = vmatprep.subr.mxu0 %v69
    %1061 = vmatpush1.msra.mxu0 %v68
    %1062 = vmatprep.subr.mxu0 %v65
    %1063 = vmatpush1.msra.mxu0 %v64
    %1064 = vmatprep.subr.mxu0 %v61
    %1065 = vmatpush1.msra.mxu0 %v60
    %1066 = vmatprep.subr.mxu0 %v57
    %1067 = vmatpush1.msra.mxu0 %v56
    %1068 = vmatprep.subr.mxu0 %v53
    %1069 = vmatpush1.msra.mxu0 %v52
    %1070 = vmatprep.subr.mxu0 %v49
    %1071 = vmatpush1.msra.mxu0 %v48
    %1072 = vmatprep.subr.mxu0 %v173
    %1073 = vmatpush2.msra.mxu0 %v172
    %1074 = vmatprep.subr.mxu0 %v169
    %1075 = vmatpush2.msra.mxu0 %v168
    %1076 = vmatprep.subr.mxu0 %v165
    %1077 = vmatpush2.msra.mxu0 %v164
    %1078 = vmatprep.subr.mxu0 %v161
    %1079 = vmatpush2.msra.mxu0 %v160
    %1080 = vmatprep.subr.mxu0 %v157
    %1081 = vmatpush2.msra.mxu0 %v156
    %1082 = vmatprep.subr.mxu0 %v153
    %1083 = vmatpush2.msra.mxu0 %v152
    %1084 = vmatprep.subr.mxu0 %v149
    %1085 = vmatpush2.msra.mxu0 %v148
    %1086 = vmatprep.subr.mxu0 %v145
    %1087 = vmatpush2.msra.mxu0 %v144
    %1088 = vmatprep.subr.mxu0 %v141
    %1089 = vmatpush2.msra.mxu0 %v140
    %1090 = vmatprep.subr.mxu0 %v137
    %1091 = vmatpush2.msra.mxu0 %v136
    %1092 = vmatprep.subr.mxu0 %v133
    %1093 = vmatpush2.msra.mxu0 %v132
    %1094 = vmatprep.subr.mxu0 %v129
    %1095 = vmatpush2.msra.mxu0 %v128
    %1096 = vmatprep.subr.mxu0 %v125
    %1097 = vmatpush2.msra.mxu0 %v124
    %1098 = vmatprep.subr.mxu0 %v121
    %1099 = vmatpush2.msra.mxu0 %v120
    %1100 = vmatprep.subr.mxu0 %v117
    %1101 = vmatpush2.msra.mxu0 %v116
    %1102 = vmatprep.subr.mxu0 %v113
    %1103 = vmatpush2.msra.mxu0 %v112
    %1104 = vmatprep.mubr.f32.mxu0 %v1039
    %1105 = vmatmul.mubr.f32.gmra.mxu0 %v1038
    %v1106 = vpop.f32.mrf.mxu0
    %v1107 = vadd.f32 %v315, %v1106
    %v1108 = vpop.f32.mrf.mxu0
    %v1109 = vadd.f32 %v319, %v1108
    %1110 = vdwg.mxu0
    %1111 = vmatprep.subr.mxu0 %v111
    %1112 = vmatpush1.msra.mxu0 %v110
    %1113 = vmatprep.subr.mxu0 %v107
    %1114 = vmatpush1.msra.mxu0 %v106
    %1115 = vmatprep.subr.mxu0 %v103
    %1116 = vmatpush1.msra.mxu0 %v102
    %1117 = vmatprep.subr.mxu0 %v99
    %1118 = vmatpush1.msra.mxu0 %v98
    %1119 = vmatprep.subr.mxu0 %v95
    %1120 = vmatpush1.msra.mxu0 %v94
    %1121 = vmatprep.subr.mxu0 %v91
    %1122 = vmatpush1.msra.mxu0 %v90
    %1123 = vmatprep.subr.mxu0 %v87
    %1124 = vmatpush1.msra.mxu0 %v86
    %1125 = vmatprep.subr.mxu0 %v83
    %1126 = vmatpush1.msra.mxu0 %v82
    %1127 = vmatprep.subr.mxu0 %v79
    %1128 = vmatpush1.msra.mxu0 %v78
    %1129 = vmatprep.subr.mxu0 %v75
    %1130 = vmatpush1.msra.mxu0 %v74
    %1131 = vmatprep.subr.mxu0 %v71
    %1132 = vmatpush1.msra.mxu0 %v70
    %1133 = vmatprep.subr.mxu0 %v67
    %1134 = vmatpush1.msra.mxu0 %v66
    %1135 = vmatprep.subr.mxu0 %v63
    %1136 = vmatpush1.msra.mxu0 %v62
    %1137 = vmatprep.subr.mxu0 %v59
    %1138 = vmatpush1.msra.mxu0 %v58
    %1139 = vmatprep.subr.mxu0 %v55
    %1140 = vmatpush1.msra.mxu0 %v54
    %1141 = vmatprep.subr.mxu0 %v51
    %1142 = vmatpush1.msra.mxu0 %v50
    %1143 = vmatprep.subr.mxu0 %v175
    %1144 = vmatpush2.msra.mxu0 %v174
    %1145 = vmatprep.subr.mxu0 %v171
    %1146 = vmatpush2.msra.mxu0 %v170
    %1147 = vmatprep.subr.mxu0 %v167
    %1148 = vmatpush2.msra.mxu0 %v166
    %1149 = vmatprep.subr.mxu0 %v163
    %1150 = vmatpush2.msra.mxu0 %v162
    %1151 = vmatprep.subr.mxu0 %v159
    %1152 = vmatpush2.msra.mxu0 %v158
    %1153 = vmatprep.subr.mxu0 %v155
    %1154 = vmatpush2.msra.mxu0 %v154
    %1155 = vmatprep.subr.mxu0 %v151
    %1156 = vmatpush2.msra.mxu0 %v150
    %1157 = vmatprep.subr.mxu0 %v147
    %1158 = vmatpush2.msra.mxu0 %v146
    %1159 = vmatprep.subr.mxu0 %v143
    %1160 = vmatpush2.msra.mxu0 %v142
    %1161 = vmatprep.subr.mxu0 %v139
    %1162 = vmatpush2.msra.mxu0 %v138
    %1163 = vmatprep.subr.mxu0 %v135
    %1164 = vmatpush2.msra.mxu0 %v134
    %1165 = vmatprep.subr.mxu0 %v131
    %1166 = vmatpush2.msra.mxu0 %v130
    %1167 = vmatprep.subr.mxu0 %v127
    %1168 = vmatpush2.msra.mxu0 %v126
    %1169 = vmatprep.subr.mxu0 %v123
    %1170 = vmatpush2.msra.mxu0 %v122
    %1171 = vmatprep.subr.mxu0 %v119
    %1172 = vmatpush2.msra.mxu0 %v118
    %1173 = vmatprep.subr.mxu0 %v115
    %1174 = vmatpush2.msra.mxu0 %v114
    %1175 = vmatprep.mubr.f32.mxu0 %v1039
    %1176 = vmatmul.mubr.f32.gmra.mxu0 %v1038
    %v1177 = vpop.f32.mrf.mxu0
    %v1178 = vadd.f32 %v323, %v1177
    %v1179 = vpop.f32.mrf.mxu0
    %v1180 = vadd.f32 %v327, %v1179
    %1181 = vdwg.mxu0
    %v1182 = vxor.u32 %v1107, 2147483648
    %v1183 = vmul.f32 %v1182, 1.442695
    %v1184 = vpow.pop %v1183
    %v1185 = vadd.f32 %v1184, 1.0
    %v1186 = vrcp.pop %v1185
    %v1187 = vmul.f32 1.0, %v1186
    %v1188 = vxor.u32 %v1109, 2147483648
    %v1189 = vmul.f32 %v1188, 1.442695
    %v1190 = vpow.pop %v1189
    %v1191 = vadd.f32 %v1190, 1.0
    %v1192 = vrcp.pop %v1191
    %v1193 = vmul.f32 1.0, %v1192
    %v1194 = vtanh.pop %v1178
    %v1195 = vxor.u32 %v1180, 2147483648
    %v1196 = vmul.f32 %v1195, 1.442695
    %v1197 = vpow.pop %v1196
    %v1198 = vadd.f32 %v1197, 1.0
    %v1199 = vrcp.pop %v1198
    %v1200 = vmul.f32 1.0, %v1199
    %v1201 = vmul.f32 %v1193, %v859
    %v1202 = vmul.f32 %v1187, %v1194
    %v1203 = vadd.f32 %v1201, %v1202
    %v1204 = vtanh.pop %v1203
    %v1205 = vmul.f32 %v1200, %v1204
    %1206 = vst [vmem:[#allocation3] sm:$0xff] %v1205
    %1207 = vst [vmem:[#allocation3 + $0x8] sm:$0xff] %v1031
    %v1208 = vld [vmem:[#allocation3] sm:$0xff]
    %v1209 = vld [vmem:[#allocation3 + $0x8] sm:$0xff]
    %1210 = vmatprep.subr.mxu0 %v237
    %1211 = vmatpush1.msra.mxu0 %v236
    %1212 = vmatprep.subr.mxu0 %v233
    %1213 = vmatpush1.msra.mxu0 %v232
    %1214 = vmatprep.subr.mxu0 %v229
    %1215 = vmatpush1.msra.mxu0 %v228
    %1216 = vmatprep.subr.mxu0 %v225
    %1217 = vmatpush1.msra.mxu0 %v224
    %1218 = vmatprep.subr.mxu0 %v221
    %1219 = vmatpush1.msra.mxu0 %v220
    %1220 = vmatprep.subr.mxu0 %v217
    %1221 = vmatpush1.msra.mxu0 %v216
    %1222 = vmatprep.subr.mxu0 %v213
    %1223 = vmatpush1.msra.mxu0 %v212
    %1224 = vmatprep.subr.mxu0 %v209
    %1225 = vmatpush1.msra.mxu0 %v208
    %1226 = vmatprep.subr.mxu0 %v205
    %1227 = vmatpush1.msra.mxu0 %v204
    %1228 = vmatprep.subr.mxu0 %v201
    %1229 = vmatpush1.msra.mxu0 %v200
    %1230 = vmatprep.subr.mxu0 %v197
    %1231 = vmatpush1.msra.mxu0 %v196
    %1232 = vmatprep.subr.mxu0 %v193
    %1233 = vmatpush1.msra.mxu0 %v192
    %1234 = vmatprep.subr.mxu0 %v189
    %1235 = vmatpush1.msra.mxu0 %v188
    %1236 = vmatprep.subr.mxu0 %v185
    %1237 = vmatpush1.msra.mxu0 %v184
    %1238 = vmatprep.subr.mxu0 %v181
    %1239 = vmatpush1.msra.mxu0 %v180
    %1240 = vmatprep.subr.mxu0 %v177
    %1241 = vmatpush1.msra.mxu0 %v176
    %1242 = vmatprep.subr.mxu0 %v301
    %1243 = vmatpush2.msra.mxu0 %v300
    %1244 = vmatprep.subr.mxu0 %v297
    %1245 = vmatpush2.msra.mxu0 %v296
    %1246 = vmatprep.subr.mxu0 %v293
    %1247 = vmatpush2.msra.mxu0 %v292
    %1248 = vmatprep.subr.mxu0 %v289
    %1249 = vmatpush2.msra.mxu0 %v288
    %1250 = vmatprep.subr.mxu0 %v285
    %1251 = vmatpush2.msra.mxu0 %v284
    %1252 = vmatprep.subr.mxu0 %v281
    %1253 = vmatpush2.msra.mxu0 %v280
    %1254 = vmatprep.subr.mxu0 %v277
    %1255 = vmatpush2.msra.mxu0 %v276
    %1256 = vmatprep.subr.mxu0 %v273
    %1257 = vmatpush2.msra.mxu0 %v272
    %1258 = vmatprep.subr.mxu0 %v269
    %1259 = vmatpush2.msra.mxu0 %v268
    %1260 = vmatprep.subr.mxu0 %v265
    %1261 = vmatpush2.msra.mxu0 %v264
    %1262 = vmatprep.subr.mxu0 %v261
    %1263 = vmatpush2.msra.mxu0 %v260
    %1264 = vmatprep.subr.mxu0 %v257
    %1265 = vmatpush2.msra.mxu0 %v256
    %1266 = vmatprep.subr.mxu0 %v253
    %1267 = vmatpush2.msra.mxu0 %v252
    %1268 = vmatprep.subr.mxu0 %v249
    %1269 = vmatpush2.msra.mxu0 %v248
    %1270 = vmatprep.subr.mxu0 %v245
    %1271 = vmatpush2.msra.mxu0 %v244
    %1272 = vmatprep.subr.mxu0 %v241
    %1273 = vmatpush2.msra.mxu0 %v240
    %1274 = vmatprep.mubr.f32.mxu0 %v1209
    %1275 = vmatmul.mubr.f32.gmra.mxu0 %v1208
    %v1276 = vpop.f32.mrf.mxu0
    %v1277 = vadd.f32 %v506, %v1276
    %v1278 = vpop.f32.mrf.mxu0
    %v1279 = vadd.f32 %v510, %v1278
    %1280 = vdwg.mxu0
    %1281 = vmatprep.subr.mxu0 %v239
    %1282 = vmatpush1.msra.mxu0 %v238
    %1283 = vmatprep.subr.mxu0 %v235
    %1284 = vmatpush1.msra.mxu0 %v234
    %1285 = vmatprep.subr.mxu0 %v231
    %1286 = vmatpush1.msra.mxu0 %v230
    %1287 = vmatprep.subr.mxu0 %v227
    %1288 = vmatpush1.msra.mxu0 %v226
    %1289 = vmatprep.subr.mxu0 %v223
    %1290 = vmatpush1.msra.mxu0 %v222
    %1291 = vmatprep.subr.mxu0 %v219
    %1292 = vmatpush1.msra.mxu0 %v218
    %1293 = vmatprep.subr.mxu0 %v215
    %1294 = vmatpush1.msra.mxu0 %v214
    %1295 = vmatprep.subr.mxu0 %v211
    %1296 = vmatpush1.msra.mxu0 %v210
    %1297 = vmatprep.subr.mxu0 %v207
    %1298 = vmatpush1.msra.mxu0 %v206
    %1299 = vmatprep.subr.mxu0 %v203
    %1300 = vmatpush1.msra.mxu0 %v202
    %1301 = vmatprep.subr.mxu0 %v199
    %1302 = vmatpush1.msra.mxu0 %v198
    %1303 = vmatprep.subr.mxu0 %v195
    %1304 = vmatpush1.msra.mxu0 %v194
    %1305 = vmatprep.subr.mxu0 %v191
    %1306 = vmatpush1.msra.mxu0 %v190
    %1307 = vmatprep.subr.mxu0 %v187
    %1308 = vmatpush1.msra.mxu0 %v186
    %1309 = vmatprep.subr.mxu0 %v183
    %1310 = vmatpush1.msra.mxu0 %v182
    %1311 = vmatprep.subr.mxu0 %v179
    %1312 = vmatpush1.msra.mxu0 %v178
    %1313 = vmatprep.subr.mxu0 %v303
    %1314 = vmatpush2.msra.mxu0 %v302
    %1315 = vmatprep.subr.mxu0 %v299
    %1316 = vmatpush2.msra.mxu0 %v298
    %1317 = vmatprep.subr.mxu0 %v295
    %1318 = vmatpush2.msra.mxu0 %v294
    %1319 = vmatprep.subr.mxu0 %v291
    %1320 = vmatpush2.msra.mxu0 %v290
    %1321 = vmatprep.subr.mxu0 %v287
    %1322 = vmatpush2.msra.mxu0 %v286
    %1323 = vmatprep.subr.mxu0 %v283
    %1324 = vmatpush2.msra.mxu0 %v282
    %1325 = vmatprep.subr.mxu0 %v279
    %1326 = vmatpush2.msra.mxu0 %v278
    %1327 = vmatprep.subr.mxu0 %v275
    %1328 = vmatpush2.msra.mxu0 %v274
    %1329 = vmatprep.subr.mxu0 %v271
    %1330 = vmatpush2.msra.mxu0 %v270
    %1331 = vmatprep.subr.mxu0 %v267
    %1332 = vmatpush2.msra.mxu0 %v266
    %1333 = vmatprep.subr.mxu0 %v263
    %1334 = vmatpush2.msra.mxu0 %v262
    %1335 = vmatprep.subr.mxu0 %v259
    %1336 = vmatpush2.msra.mxu0 %v258
    %1337 = vmatprep.subr.mxu0 %v255
    %1338 = vmatpush2.msra.mxu0 %v254
    %1339 = vmatprep.subr.mxu0 %v251
    %1340 = vmatpush2.msra.mxu0 %v250
    %1341 = vmatprep.subr.mxu0 %v247
    %1342 = vmatpush2.msra.mxu0 %v246
    %1343 = vmatprep.subr.mxu0 %v243
    %1344 = vmatpush2.msra.mxu0 %v242
    %1345 = vmatprep.mubr.f32.mxu0 %v1209
    %1346 = vmatmul.mubr.f32.gmra.mxu0 %v1208
    %v1347 = vpop.f32.mrf.mxu0
    %v1348 = vadd.f32 %v514, %v1347
    %v1349 = vpop.f32.mrf.mxu0
    %v1350 = vadd.f32 %v518, %v1349
    %1351 = vdwg.mxu0
    %v1352 = vxor.u32 %v1277, 2147483648
    %v1353 = vmul.f32 %v1352, 1.442695
    %v1354 = vpow.pop %v1353
    %v1355 = vadd.f32 %v1354, 1.0
    %v1356 = vrcp.pop %v1355
    %v1357 = vmul.f32 1.0, %v1356
    %v1358 = vxor.u32 %v1279, 2147483648
    %v1359 = vmul.f32 %v1358, 1.442695
    %v1360 = vpow.pop %v1359
    %v1361 = vadd.f32 %v1360, 1.0
    %v1362 = vrcp.pop %v1361
    %v1363 = vmul.f32 1.0, %v1362
    %v1364 = vtanh.pop %v1348
    %v1365 = vxor.u32 %v1350, 2147483648
    %v1366 = vmul.f32 %v1365, 1.442695
    %v1367 = vpow.pop %v1366
    %v1368 = vadd.f32 %v1367, 1.0
    %v1369 = vrcp.pop %v1368
    %v1370 = vmul.f32 1.0, %v1369
    %v1371 = vmul.f32 %v1363, %v1029
    %v1372 = vmul.f32 %v1357, %v1364
    %v1373 = vadd.f32 %v1371, %v1372
    %v1374 = vtanh.pop %v1373
    %v1375 = vmul.f32 %v1370, %v1374
    %s1376 = scalar_lea.vmem %s5, 16
    %1377 = vst [vmem:[%s1376] sm:$0xff] %v1375
    %s1378 = scalar_lea.vmem %s0, 24
    %v1379 = vld [vmem:[%s1378] sm:$0xff]
    %1380 = vst [vmem:[#allocation2] sm:$0xff] %v1379
    %1381 = vst [vmem:[#allocation2 + $0x8] sm:$0xff] %v1205
    %v1382 = vld [vmem:[#allocation2] sm:$0xff]
    %v1383 = vld [vmem:[#allocation2 + $0x8] sm:$0xff]
    %1384 = vmatprep.subr.mxu0 %v109
    %1385 = vmatpush1.msra.mxu0 %v108
    %1386 = vmatprep.subr.mxu0 %v105
    %1387 = vmatpush1.msra.mxu0 %v104
    %1388 = vmatprep.subr.mxu0 %v101
    %1389 = vmatpush1.msra.mxu0 %v100
    %1390 = vmatprep.subr.mxu0 %v97
    %1391 = vmatpush1.msra.mxu0 %v96
    %1392 = vmatprep.subr.mxu0 %v93
    %1393 = vmatpush1.msra.mxu0 %v92
    %1394 = vmatprep.subr.mxu0 %v89
    %1395 = vmatpush1.msra.mxu0 %v88
    %1396 = vmatprep.subr.mxu0 %v85
    %1397 = vmatpush1.msra.mxu0 %v84
    %1398 = vmatprep.subr.mxu0 %v81
    %1399 = vmatpush1.msra.mxu0 %v80
    %1400 = vmatprep.subr.mxu0 %v77
    %1401 = vmatpush1.msra.mxu0 %v76
    %1402 = vmatprep.subr.mxu0 %v73
    %1403 = vmatpush1.msra.mxu0 %v72
    %1404 = vmatprep.subr.mxu0 %v69
    %1405 = vmatpush1.msra.mxu0 %v68
    %1406 = vmatprep.subr.mxu0 %v65
    %1407 = vmatpush1.msra.mxu0 %v64
    %1408 = vmatprep.subr.mxu0 %v61
    %1409 = vmatpush1.msra.mxu0 %v60
    %1410 = vmatprep.subr.mxu0 %v57
    %1411 = vmatpush1.msra.mxu0 %v56
    %1412 = vmatprep.subr.mxu0 %v53
    %1413 = vmatpush1.msra.mxu0 %v52
    %1414 = vmatprep.subr.mxu0 %v49
    %1415 = vmatpush1.msra.mxu0 %v48
    %1416 = vmatprep.subr.mxu0 %v173
    %1417 = vmatpush2.msra.mxu0 %v172
    %1418 = vmatprep.subr.mxu0 %v169
    %1419 = vmatpush2.msra.mxu0 %v168
    %1420 = vmatprep.subr.mxu0 %v165
    %1421 = vmatpush2.msra.mxu0 %v164
    %1422 = vmatprep.subr.mxu0 %v161
    %1423 = vmatpush2.msra.mxu0 %v160
    %1424 = vmatprep.subr.mxu0 %v157
    %1425 = vmatpush2.msra.mxu0 %v156
    %1426 = vmatprep.subr.mxu0 %v153
    %1427 = vmatpush2.msra.mxu0 %v152
    %1428 = vmatprep.subr.mxu0 %v149
    %1429 = vmatpush2.msra.mxu0 %v148
    %1430 = vmatprep.subr.mxu0 %v145
    %1431 = vmatpush2.msra.mxu0 %v144
    %1432 = vmatprep.subr.mxu0 %v141
    %1433 = vmatpush2.msra.mxu0 %v140
    %1434 = vmatprep.subr.mxu0 %v137
    %1435 = vmatpush2.msra.mxu0 %v136
    %1436 = vmatprep.subr.mxu0 %v133
    %1437 = vmatpush2.msra.mxu0 %v132
    %1438 = vmatprep.subr.mxu0 %v129
    %1439 = vmatpush2.msra.mxu0 %v128
    %1440 = vmatprep.subr.mxu0 %v125
    %1441 = vmatpush2.msra.mxu0 %v124
    %1442 = vmatprep.subr.mxu0 %v121
    %1443 = vmatpush2.msra.mxu0 %v120
    %1444 = vmatprep.subr.mxu0 %v117
    %1445 = vmatpush2.msra.mxu0 %v116
    %1446 = vmatprep.subr.mxu0 %v113
    %1447 = vmatpush2.msra.mxu0 %v112
    %1448 = vmatprep.mubr.f32.mxu0 %v1383
    %1449 = vmatmul.mubr.f32.gmra.mxu0 %v1382
    %v1450 = vpop.f32.mrf.mxu0
    %v1451 = vadd.f32 %v315, %v1450
    %v1452 = vpop.f32.mrf.mxu0
    %v1453 = vadd.f32 %v319, %v1452
    %1454 = vdwg.mxu0
    %1455 = vmatprep.subr.mxu0 %v111
    %1456 = vmatpush1.msra.mxu0 %v110
    %1457 = vmatprep.subr.mxu0 %v107
    %1458 = vmatpush1.msra.mxu0 %v106
    %1459 = vmatprep.subr.mxu0 %v103
    %1460 = vmatpush1.msra.mxu0 %v102
    %1461 = vmatprep.subr.mxu0 %v99
    %1462 = vmatpush1.msra.mxu0 %v98
    %1463 = vmatprep.subr.mxu0 %v95
    %1464 = vmatpush1.msra.mxu0 %v94
    %1465 = vmatprep.subr.mxu0 %v91
    %1466 = vmatpush1.msra.mxu0 %v90
    %1467 = vmatprep.subr.mxu0 %v87
    %1468 = vmatpush1.msra.mxu0 %v86
    %1469 = vmatprep.subr.mxu0 %v83
    %1470 = vmatpush1.msra.mxu0 %v82
    %1471 = vmatprep.subr.mxu0 %v79
    %1472 = vmatpush1.msra.mxu0 %v78
    %1473 = vmatprep.subr.mxu0 %v75
    %1474 = vmatpush1.msra.mxu0 %v74
    %1475 = vmatprep.subr.mxu0 %v71
    %1476 = vmatpush1.msra.mxu0 %v70
    %1477 = vmatprep.subr.mxu0 %v67
    %1478 = vmatpush1.msra.mxu0 %v66
    %1479 = vmatprep.subr.mxu0 %v63
    %1480 = vmatpush1.msra.mxu0 %v62
    %1481 = vmatprep.subr.mxu0 %v59
    %1482 = vmatpush1.msra.mxu0 %v58
    %1483 = vmatprep.subr.mxu0 %v55
    %1484 = vmatpush1.msra.mxu0 %v54
    %1485 = vmatprep.subr.mxu0 %v51
    %1486 = vmatpush1.msra.mxu0 %v50
    %1487 = vmatprep.subr.mxu0 %v175
    %1488 = vmatpush2.msra.mxu0 %v174
    %1489 = vmatprep.subr.mxu0 %v171
    %1490 = vmatpush2.msra.mxu0 %v170
    %1491 = vmatprep.subr.mxu0 %v167
    %1492 = vmatpush2.msra.mxu0 %v166
    %1493 = vmatprep.subr.mxu0 %v163
    %1494 = vmatpush2.msra.mxu0 %v162
    %1495 = vmatprep.subr.mxu0 %v159
    %1496 = vmatpush2.msra.mxu0 %v158
    %1497 = vmatprep.subr.mxu0 %v155
    %1498 = vmatpush2.msra.mxu0 %v154
    %1499 = vmatprep.subr.mxu0 %v151
    %1500 = vmatpush2.msra.mxu0 %v150
    %1501 = vmatprep.subr.mxu0 %v147
    %1502 = vmatpush2.msra.mxu0 %v146
    %1503 = vmatprep.subr.mxu0 %v143
    %1504 = vmatpush2.msra.mxu0 %v142
    %1505 = vmatprep.subr.mxu0 %v139
    %1506 = vmatpush2.msra.mxu0 %v138
    %1507 = vmatprep.subr.mxu0 %v135
    %1508 = vmatpush2.msra.mxu0 %v134
    %1509 = vmatprep.subr.mxu0 %v131
    %1510 = vmatpush2.msra.mxu0 %v130
    %1511 = vmatprep.subr.mxu0 %v127
    %1512 = vmatpush2.msra.mxu0 %v126
    %1513 = vmatprep.subr.mxu0 %v123
    %1514 = vmatpush2.msra.mxu0 %v122
    %1515 = vmatprep.subr.mxu0 %v119
    %1516 = vmatpush2.msra.mxu0 %v118
    %1517 = vmatprep.subr.mxu0 %v115
    %1518 = vmatpush2.msra.mxu0 %v114
    %1519 = vmatprep.mubr.f32.mxu0 %v1383
    %1520 = vmatmul.mubr.f32.gmra.mxu0 %v1382
    %v1521 = vpop.f32.mrf.mxu0
    %v1522 = vadd.f32 %v323, %v1521
    %v1523 = vpop.f32.mrf.mxu0
    %v1524 = vadd.f32 %v327, %v1523
    %1525 = vdwg.mxu0
    %v1526 = vxor.u32 %v1451, 2147483648
    %v1527 = vmul.f32 %v1526, 1.442695
    %v1528 = vpow.pop %v1527
    %v1529 = vadd.f32 %v1528, 1.0
    %v1530 = vrcp.pop %v1529
    %v1531 = vmul.f32 1.0, %v1530
    %v1532 = vxor.u32 %v1453, 2147483648
    %v1533 = vmul.f32 %v1532, 1.442695
    %v1534 = vpow.pop %v1533
    %v1535 = vadd.f32 %v1534, 1.0
    %v1536 = vrcp.pop %v1535
    %v1537 = vmul.f32 1.0, %v1536
    %v1538 = vtanh.pop %v1522
    %v1539 = vxor.u32 %v1524, 2147483648
    %v1540 = vmul.f32 %v1539, 1.442695
    %v1541 = vpow.pop %v1540
    %v1542 = vadd.f32 %v1541, 1.0
    %v1543 = vrcp.pop %v1542
    %v1544 = vmul.f32 1.0, %v1543
    %v1545 = vmul.f32 %v1537, %v1203
    %v1546 = vmul.f32 %v1531, %v1538
    %v1547 = vadd.f32 %v1545, %v1546
    %v1548 = vtanh.pop %v1547
    %v1549 = vmul.f32 %v1544, %v1548
    %1550 = vst [vmem:[#allocation3] sm:$0xff] %v1549
    %1551 = vst [vmem:[#allocation3 + $0x8] sm:$0xff] %v1375
    %v1552 = vld [vmem:[#allocation3] sm:$0xff]
    %v1553 = vld [vmem:[#allocation3 + $0x8] sm:$0xff]
    %1554 = vmatprep.subr.mxu0 %v237
    %1555 = vmatpush1.msra.mxu0 %v236
    %1556 = vmatprep.subr.mxu0 %v233
    %1557 = vmatpush1.msra.mxu0 %v232
    %1558 = vmatprep.subr.mxu0 %v229
    %1559 = vmatpush1.msra.mxu0 %v228
    %1560 = vmatprep.subr.mxu0 %v225
    %1561 = vmatpush1.msra.mxu0 %v224
    %1562 = vmatprep.subr.mxu0 %v221
    %1563 = vmatpush1.msra.mxu0 %v220
    %1564 = vmatprep.subr.mxu0 %v217
    %1565 = vmatpush1.msra.mxu0 %v216
    %1566 = vmatprep.subr.mxu0 %v213
    %1567 = vmatpush1.msra.mxu0 %v212
    %1568 = vmatprep.subr.mxu0 %v209
    %1569 = vmatpush1.msra.mxu0 %v208
    %1570 = vmatprep.subr.mxu0 %v205
    %1571 = vmatpush1.msra.mxu0 %v204
    %1572 = vmatprep.subr.mxu0 %v201
    %1573 = vmatpush1.msra.mxu0 %v200
    %1574 = vmatprep.subr.mxu0 %v197
    %1575 = vmatpush1.msra.mxu0 %v196
    %1576 = vmatprep.subr.mxu0 %v193
    %1577 = vmatpush1.msra.mxu0 %v192
    %1578 = vmatprep.subr.mxu0 %v189
    %1579 = vmatpush1.msra.mxu0 %v188
    %1580 = vmatprep.subr.mxu0 %v185
    %1581 = vmatpush1.msra.mxu0 %v184
    %1582 = vmatprep.subr.mxu0 %v181
    %1583 = vmatpush1.msra.mxu0 %v180
    %1584 = vmatprep.subr.mxu0 %v177
    %1585 = vmatpush1.msra.mxu0 %v176
    %1586 = vmatprep.subr.mxu0 %v301
    %1587 = vmatpush2.msra.mxu0 %v300
    %1588 = vmatprep.subr.mxu0 %v297
    %1589 = vmatpush2.msra.mxu0 %v296
    %1590 = vmatprep.subr.mxu0 %v293
    %1591 = vmatpush2.msra.mxu0 %v292
    %1592 = vmatprep.subr.mxu0 %v289
    %1593 = vmatpush2.msra.mxu0 %v288
    %1594 = vmatprep.subr.mxu0 %v285
    %1595 = vmatpush2.msra.mxu0 %v284
    %1596 = vmatprep.subr.mxu0 %v281
    %1597 = vmatpush2.msra.mxu0 %v280
    %1598 = vmatprep.subr.mxu0 %v277
    %1599 = vmatpush2.msra.mxu0 %v276
    %1600 = vmatprep.subr.mxu0 %v273
    %1601 = vmatpush2.msra.mxu0 %v272
    %1602 = vmatprep.subr.mxu0 %v269
    %1603 = vmatpush2.msra.mxu0 %v268
    %1604 = vmatprep.subr.mxu0 %v265
    %1605 = vmatpush2.msra.mxu0 %v264
    %1606 = vmatprep.subr.mxu0 %v261
    %1607 = vmatpush2.msra.mxu0 %v260
    %1608 = vmatprep.subr.mxu0 %v257
    %1609 = vmatpush2.msra.mxu0 %v256
    %1610 = vmatprep.subr.mxu0 %v253
    %1611 = vmatpush2.msra.mxu0 %v252
    %1612 = vmatprep.subr.mxu0 %v249
    %1613 = vmatpush2.msra.mxu0 %v248
    %1614 = vmatprep.subr.mxu0 %v245
    %1615 = vmatpush2.msra.mxu0 %v244
    %1616 = vmatprep.subr.mxu0 %v241
    %1617 = vmatpush2.msra.mxu0 %v240
    %1618 = vmatprep.mubr.f32.mxu0 %v1553
    %1619 = vmatmul.mubr.f32.gmra.mxu0 %v1552
    %v1620 = vpop.f32.mrf.mxu0
    %v1621 = vadd.f32 %v506, %v1620
    %v1622 = vpop.f32.mrf.mxu0
    %v1623 = vadd.f32 %v510, %v1622
    %1624 = vdwg.mxu0
    %1625 = vmatprep.subr.mxu0 %v239
    %1626 = vmatpush1.msra.mxu0 %v238
    %1627 = vmatprep.subr.mxu0 %v235
    %1628 = vmatpush1.msra.mxu0 %v234
    %1629 = vmatprep.subr.mxu0 %v231
    %1630 = vmatpush1.msra.mxu0 %v230
    %1631 = vmatprep.subr.mxu0 %v227
    %1632 = vmatpush1.msra.mxu0 %v226
    %1633 = vmatprep.subr.mxu0 %v223
    %1634 = vmatpush1.msra.mxu0 %v222
    %1635 = vmatprep.subr.mxu0 %v219
    %1636 = vmatpush1.msra.mxu0 %v218
    %1637 = vmatprep.subr.mxu0 %v215
    %1638 = vmatpush1.msra.mxu0 %v214
    %1639 = vmatprep.subr.mxu0 %v211
    %1640 = vmatpush1.msra.mxu0 %v210
    %1641 = vmatprep.subr.mxu0 %v207
    %1642 = vmatpush1.msra.mxu0 %v206
    %1643 = vmatprep.subr.mxu0 %v203
    %1644 = vmatpush1.msra.mxu0 %v202
    %1645 = vmatprep.subr.mxu0 %v199
    %1646 = vmatpush1.msra.mxu0 %v198
    %1647 = vmatprep.subr.mxu0 %v195
    %1648 = vmatpush1.msra.mxu0 %v194
    %1649 = vmatprep.subr.mxu0 %v191
    %1650 = vmatpush1.msra.mxu0 %v190
    %1651 = vmatprep.subr.mxu0 %v187
    %1652 = vmatpush1.msra.mxu0 %v186
    %1653 = vmatprep.subr.mxu0 %v183
    %1654 = vmatpush1.msra.mxu0 %v182
    %1655 = vmatprep.subr.mxu0 %v179
    %1656 = vmatpush1.msra.mxu0 %v178
    %1657 = vmatprep.subr.mxu0 %v303
    %1658 = vmatpush2.msra.mxu0 %v302
    %1659 = vmatprep.subr.mxu0 %v299
    %1660 = vmatpush2.msra.mxu0 %v298
    %1661 = vmatprep.subr.mxu0 %v295
    %1662 = vmatpush2.msra.mxu0 %v294
    %1663 = vmatprep.subr.mxu0 %v291
    %1664 = vmatpush2.msra.mxu0 %v290
    %1665 = vmatprep.subr.mxu0 %v287
    %1666 = vmatpush2.msra.mxu0 %v286
    %1667 = vmatprep.subr.mxu0 %v283
    %1668 = vmatpush2.msra.mxu0 %v282
    %1669 = vmatprep.subr.mxu0 %v279
    %1670 = vmatpush2.msra.mxu0 %v278
    %1671 = vmatprep.subr.mxu0 %v275
    %1672 = vmatpush2.msra.mxu0 %v274
    %1673 = vmatprep.subr.mxu0 %v271
    %1674 = vmatpush2.msra.mxu0 %v270
    %1675 = vmatprep.subr.mxu0 %v267
    %1676 = vmatpush2.msra.mxu0 %v266
    %1677 = vmatprep.subr.mxu0 %v263
    %1678 = vmatpush2.msra.mxu0 %v262
    %1679 = vmatprep.subr.mxu0 %v259
    %1680 = vmatpush2.msra.mxu0 %v258
    %1681 = vmatprep.subr.mxu0 %v255
    %1682 = vmatpush2.msra.mxu0 %v254
    %1683 = vmatprep.subr.mxu0 %v251
    %1684 = vmatpush2.msra.mxu0 %v250
    %1685 = vmatprep.subr.mxu0 %v247
    %1686 = vmatpush2.msra.mxu0 %v246
    %1687 = vmatprep.subr.mxu0 %v243
    %1688 = vmatpush2.msra.mxu0 %v242
    %1689 = vmatprep.mubr.f32.mxu0 %v1553
    %1690 = vmatmul.mubr.f32.gmra.mxu0 %v1552
    %v1691 = vpop.f32.mrf.mxu0
    %v1692 = vadd.f32 %v514, %v1691
    %v1693 = vpop.f32.mrf.mxu0
    %v1694 = vadd.f32 %v518, %v1693
    %1695 = vdwg.mxu0
    %v1696 = vxor.u32 %v1621, 2147483648
    %v1697 = vmul.f32 %v1696, 1.442695
    %v1698 = vpow.pop %v1697
    %v1699 = vadd.f32 %v1698, 1.0
    %v1700 = vrcp.pop %v1699
    %v1701 = vmul.f32 1.0, %v1700
    %v1702 = vxor.u32 %v1623, 2147483648
    %v1703 = vmul.f32 %v1702, 1.442695
    %v1704 = vpow.pop %v1703
    %v1705 = vadd.f32 %v1704, 1.0
    %v1706 = vrcp.pop %v1705
    %v1707 = vmul.f32 1.0, %v1706
    %v1708 = vtanh.pop %v1692
    %v1709 = vxor.u32 %v1694, 2147483648
    %v1710 = vmul.f32 %v1709, 1.442695
    %v1711 = vpow.pop %v1710
    %v1712 = vadd.f32 %v1711, 1.0
    %v1713 = vrcp.pop %v1712
    %v1714 = vmul.f32 1.0, %v1713
    %v1715 = vmul.f32 %v1707, %v1373
    %v1716 = vmul.f32 %v1701, %v1708
    %v1717 = vadd.f32 %v1715, %v1716
    %v1718 = vtanh.pop %v1717
    %v1719 = vmul.f32 %v1714, %v1718
    %s1720 = scalar_lea.vmem %s5, 24
    %1721 = vst [vmem:[%s1720] sm:$0xff] %v1719
    %s1722 = scalar_lea.vmem %s0, 32
    %v1723 = vld [vmem:[%s1722] sm:$0xff]
    %1724 = vst [vmem:[#allocation2] sm:$0xff] %v1723
    %1725 = vst [vmem:[#allocation2 + $0x8] sm:$0xff] %v1549
    %v1726 = vld [vmem:[#allocation2] sm:$0xff]
    %v1727 = vld [vmem:[#allocation2 + $0x8] sm:$0xff]
    %1728 = vmatprep.subr.mxu0 %v109
    %1729 = vmatpush1.msra.mxu0 %v108
    %1730 = vmatprep.subr.mxu0 %v105
    %1731 = vmatpush1.msra.mxu0 %v104
    %1732 = vmatprep.subr.mxu0 %v101
    %1733 = vmatpush1.msra.mxu0 %v100
    %1734 = vmatprep.subr.mxu0 %v97
    %1735 = vmatpush1.msra.mxu0 %v96
    %1736 = vmatprep.subr.mxu0 %v93
    %1737 = vmatpush1.msra.mxu0 %v92
    %1738 = vmatprep.subr.mxu0 %v89
    %1739 = vmatpush1.msra.mxu0 %v88
    %1740 = vmatprep.subr.mxu0 %v85
    %1741 = vmatpush1.msra.mxu0 %v84
    %1742 = vmatprep.subr.mxu0 %v81
    %1743 = vmatpush1.msra.mxu0 %v80
    %1744 = vmatprep.subr.mxu0 %v77
    %1745 = vmatpush1.msra.mxu0 %v76
    %1746 = vmatprep.subr.mxu0 %v73
    %1747 = vmatpush1.msra.mxu0 %v72
    %1748 = vmatprep.subr.mxu0 %v69
    %1749 = vmatpush1.msra.mxu0 %v68
    %1750 = vmatprep.subr.mxu0 %v65
    %1751 = vmatpush1.msra.mxu0 %v64
    %1752 = vmatprep.subr.mxu0 %v61
    %1753 = vmatpush1.msra.mxu0 %v60
    %1754 = vmatprep.subr.mxu0 %v57
    %1755 = vmatpush1.msra.mxu0 %v56
    %1756 = vmatprep.subr.mxu0 %v53
    %1757 = vmatpush1.msra.mxu0 %v52
    %1758 = vmatprep.subr.mxu0 %v49
    %1759 = vmatpush1.msra.mxu0 %v48
    %1760 = vmatprep.subr.mxu0 %v173
    %1761 = vmatpush2.msra.mxu0 %v172
    %1762 = vmatprep.subr.mxu0 %v169
    %1763 = vmatpush2.msra.mxu0 %v168
    %1764 = vmatprep.subr.mxu0 %v165
    %1765 = vmatpush2.msra.mxu0 %v164
    %1766 = vmatprep.subr.mxu0 %v161
    %1767 = vmatpush2.msra.mxu0 %v160
    %1768 = vmatprep.subr.mxu0 %v157
    %1769 = vmatpush2.msra.mxu0 %v156
    %1770 = vmatprep.subr.mxu0 %v153
    %1771 = vmatpush2.msra.mxu0 %v152
    %1772 = vmatprep.subr.mxu0 %v149
    %1773 = vmatpush2.msra.mxu0 %v148
    %1774 = vmatprep.subr.mxu0 %v145
    %1775 = vmatpush2.msra.mxu0 %v144
    %1776 = vmatprep.subr.mxu0 %v141
    %1777 = vmatpush2.msra.mxu0 %v140
    %1778 = vmatprep.subr.mxu0 %v137
    %1779 = vmatpush2.msra.mxu0 %v136
    %1780 = vmatprep.subr.mxu0 %v133
    %1781 = vmatpush2.msra.mxu0 %v132
    %1782 = vmatprep.subr.mxu0 %v129
    %1783 = vmatpush2.msra.mxu0 %v128
    %1784 = vmatprep.subr.mxu0 %v125
    %1785 = vmatpush2.msra.mxu0 %v124
    %1786 = vmatprep.subr.mxu0 %v121
    %1787 = vmatpush2.msra.mxu0 %v120
    %1788 = vmatprep.subr.mxu0 %v117
    %1789 = vmatpush2.msra.mxu0 %v116
    %1790 = vmatprep.subr.mxu0 %v113
    %1791 = vmatpush2.msra.mxu0 %v112
    %1792 = vmatprep.mubr.f32.mxu0 %v1727
    %1793 = vmatmul.mubr.f32.gmra.mxu0 %v1726
    %v1794 = vpop.f32.mrf.mxu0
    %v1795 = vadd.f32 %v315, %v1794
    %v1796 = vpop.f32.mrf.mxu0
    %v1797 = vadd.f32 %v319, %v1796
    %1798 = vdwg.mxu0
    %1799 = vmatprep.subr.mxu0 %v111
    %1800 = vmatpush1.msra.mxu0 %v110
    %1801 = vmatprep.subr.mxu0 %v107
    %1802 = vmatpush1.msra.mxu0 %v106
    %1803 = vmatprep.subr.mxu0 %v103
    %1804 = vmatpush1.msra.mxu0 %v102
    %1805 = vmatprep.subr.mxu0 %v99
    %1806 = vmatpush1.msra.mxu0 %v98
    %1807 = vmatprep.subr.mxu0 %v95
    %1808 = vmatpush1.msra.mxu0 %v94
    %1809 = vmatprep.subr.mxu0 %v91
    %1810 = vmatpush1.msra.mxu0 %v90
    %1811 = vmatprep.subr.mxu0 %v87
    %1812 = vmatpush1.msra.mxu0 %v86
    %1813 = vmatprep.subr.mxu0 %v83
    %1814 = vmatpush1.msra.mxu0 %v82
    %1815 = vmatprep.subr.mxu0 %v79
    %1816 = vmatpush1.msra.mxu0 %v78
    %1817 = vmatprep.subr.mxu0 %v75
    %1818 = vmatpush1.msra.mxu0 %v74
    %1819 = vmatprep.subr.mxu0 %v71
    %1820 = vmatpush1.msra.mxu0 %v70
    %1821 = vmatprep.subr.mxu0 %v67
    %1822 = vmatpush1.msra.mxu0 %v66
    %1823 = vmatprep.subr.mxu0 %v63
    %1824 = vmatpush1.msra.mxu0 %v62
    %1825 = vmatprep.subr.mxu0 %v59
    %1826 = vmatpush1.msra.mxu0 %v58
    %1827 = vmatprep.subr.mxu0 %v55
    %1828 = vmatpush1.msra.mxu0 %v54
    %1829 = vmatprep.subr.mxu0 %v51
    %1830 = vmatpush1.msra.mxu0 %v50
    %1831 = vmatprep.subr.mxu0 %v175
    %1832 = vmatpush2.msra.mxu0 %v174
    %1833 = vmatprep.subr.mxu0 %v171
    %1834 = vmatpush2.msra.mxu0 %v170
    %1835 = vmatprep.subr.mxu0 %v167
    %1836 = vmatpush2.msra.mxu0 %v166
    %1837 = vmatprep.subr.mxu0 %v163
    %1838 = vmatpush2.msra.mxu0 %v162
    %1839 = vmatprep.subr.mxu0 %v159
    %1840 = vmatpush2.msra.mxu0 %v158
    %1841 = vmatprep.subr.mxu0 %v155
    %1842 = vmatpush2.msra.mxu0 %v154
    %1843 = vmatprep.subr.mxu0 %v151
    %1844 = vmatpush2.msra.mxu0 %v150
    %1845 = vmatprep.subr.mxu0 %v147
    %1846 = vmatpush2.msra.mxu0 %v146
    %1847 = vmatprep.subr.mxu0 %v143
    %1848 = vmatpush2.msra.mxu0 %v142
    %1849 = vmatprep.subr.mxu0 %v139
    %1850 = vmatpush2.msra.mxu0 %v138
    %1851 = vmatprep.subr.mxu0 %v135
    %1852 = vmatpush2.msra.mxu0 %v134
    %1853 = vmatprep.subr.mxu0 %v131
    %1854 = vmatpush2.msra.mxu0 %v130
    %1855 = vmatprep.subr.mxu0 %v127
    %1856 = vmatpush2.msra.mxu0 %v126
    %1857 = vmatprep.subr.mxu0 %v123
    %1858 = vmatpush2.msra.mxu0 %v122
    %1859 = vmatprep.subr.mxu0 %v119
    %1860 = vmatpush2.msra.mxu0 %v118
    %1861 = vmatprep.subr.mxu0 %v115
    %1862 = vmatpush2.msra.mxu0 %v114
    %1863 = vmatprep.mubr.f32.mxu0 %v1727
    %1864 = vmatmul.mubr.f32.gmra.mxu0 %v1726
    %v1865 = vpop.f32.mrf.mxu0
    %v1866 = vadd.f32 %v323, %v1865
    %v1867 = vpop.f32.mrf.mxu0
    %v1868 = vadd.f32 %v327, %v1867
    %1869 = vdwg.mxu0
    %v1870 = vxor.u32 %v1795, 2147483648
    %v1871 = vmul.f32 %v1870, 1.442695
    %v1872 = vpow.pop %v1871
    %v1873 = vadd.f32 %v1872, 1.0
    %v1874 = vrcp.pop %v1873
    %v1875 = vmul.f32 1.0, %v1874
    %v1876 = vxor.u32 %v1797, 2147483648
    %v1877 = vmul.f32 %v1876, 1.442695
    %v1878 = vpow.pop %v1877
    %v1879 = vadd.f32 %v1878, 1.0
    %v1880 = vrcp.pop %v1879
    %v1881 = vmul.f32 1.0, %v1880
    %v1882 = vtanh.pop %v1866
    %v1883 = vxor.u32 %v1868, 2147483648
    %v1884 = vmul.f32 %v1883, 1.442695
    %v1885 = vpow.pop %v1884
    %v1886 = vadd.f32 %v1885, 1.0
    %v1887 = vrcp.pop %v1886
    %v1888 = vmul.f32 1.0, %v1887
    %v1889 = vmul.f32 %v1881, %v1547
    %v1890 = vmul.f32 %v1875, %v1882
    %v1891 = vadd.f32 %v1889, %v1890
    %v1892 = vtanh.pop %v1891
    %v1893 = vmul.f32 %v1888, %v1892
    %1894 = vst [vmem:[#allocation3] sm:$0xff] %v1893
    %1895 = vst [vmem:[#allocation3 + $0x8] sm:$0xff] %v1719
    %v1896 = vld [vmem:[#allocation3] sm:$0xff]
    %v1897 = vld [vmem:[#allocation3 + $0x8] sm:$0xff]
    %1898 = vmatprep.subr.mxu0 %v237
    %1899 = vmatpush1.msra.mxu0 %v236
    %1900 = vmatprep.subr.mxu0 %v233
    %1901 = vmatpush1.msra.mxu0 %v232
    %1902 = vmatprep.subr.mxu0 %v229
    %1903 = vmatpush1.msra.mxu0 %v228
    %1904 = vmatprep.subr.mxu0 %v225
    %1905 = vmatpush1.msra.mxu0 %v224
    %1906 = vmatprep.subr.mxu0 %v221
    %1907 = vmatpush1.msra.mxu0 %v220
    %1908 = vmatprep.subr.mxu0 %v217
    %1909 = vmatpush1.msra.mxu0 %v216
    %1910 = vmatprep.subr.mxu0 %v213
    %1911 = vmatpush1.msra.mxu0 %v212
    %1912 = vmatprep.subr.mxu0 %v209
    %1913 = vmatpush1.msra.mxu0 %v208
    %1914 = vmatprep.subr.mxu0 %v205
    %1915 = vmatpush1.msra.mxu0 %v204
    %1916 = vmatprep.subr.mxu0 %v201
    %1917 = vmatpush1.msra.mxu0 %v200
    %1918 = vmatprep.subr.mxu0 %v197
    %1919 = vmatpush1.msra.mxu0 %v196
    %1920 = vmatprep.subr.mxu0 %v193
    %1921 = vmatpush1.msra.mxu0 %v192
    %1922 = vmatprep.subr.mxu0 %v189
    %1923 = vmatpush1.msra.mxu0 %v188
    %1924 = vmatprep.subr.mxu0 %v185
    %1925 = vmatpush1.msra.mxu0 %v184
    %1926 = vmatprep.subr.mxu0 %v181
    %1927 = vmatpush1.msra.mxu0 %v180
    %1928 = vmatprep.subr.mxu0 %v177
    %1929 = vmatpush1.msra.mxu0 %v176
    %1930 = vmatprep.subr.mxu0 %v301
    %1931 = vmatpush2.msra.mxu0 %v300
    %1932 = vmatprep.subr.mxu0 %v297
    %1933 = vmatpush2.msra.mxu0 %v296
    %1934 = vmatprep.subr.mxu0 %v293
    %1935 = vmatpush2.msra.mxu0 %v292
    %1936 = vmatprep.subr.mxu0 %v289
    %1937 = vmatpush2.msra.mxu0 %v288
    %1938 = vmatprep.subr.mxu0 %v285
    %1939 = vmatpush2.msra.mxu0 %v284
    %1940 = vmatprep.subr.mxu0 %v281
    %1941 = vmatpush2.msra.mxu0 %v280
    %1942 = vmatprep.subr.mxu0 %v277
    %1943 = vmatpush2.msra.mxu0 %v276
    %1944 = vmatprep.subr.mxu0 %v273
    %1945 = vmatpush2.msra.mxu0 %v272
    %1946 = vmatprep.subr.mxu0 %v269
    %1947 = vmatpush2.msra.mxu0 %v268
    %1948 = vmatprep.subr.mxu0 %v265
    %1949 = vmatpush2.msra.mxu0 %v264
    %1950 = vmatprep.subr.mxu0 %v261
    %1951 = vmatpush2.msra.mxu0 %v260
    %1952 = vmatprep.subr.mxu0 %v257
    %1953 = vmatpush2.msra.mxu0 %v256
    %1954 = vmatprep.subr.mxu0 %v253
    %1955 = vmatpush2.msra.mxu0 %v252
    %1956 = vmatprep.subr.mxu0 %v249
    %1957 = vmatpush2.msra.mxu0 %v248
    %1958 = vmatprep.subr.mxu0 %v245
    %1959 = vmatpush2.msra.mxu0 %v244
    %1960 = vmatprep.subr.mxu0 %v241
    %1961 = vmatpush2.msra.mxu0 %v240
    %1962 = vmatprep.mubr.f32.mxu0 %v1897
    %1963 = vmatmul.mubr.f32.gmra.mxu0 %v1896
    %v1964 = vpop.f32.mrf.mxu0
    %v1965 = vadd.f32 %v506, %v1964
    %v1966 = vpop.f32.mrf.mxu0
    %v1967 = vadd.f32 %v510, %v1966
    %1968 = vdwg.mxu0
    %1969 = vmatprep.subr.mxu0 %v239
    %1970 = vmatpush1.msra.mxu0 %v238
    %1971 = vmatprep.subr.mxu0 %v235
    %1972 = vmatpush1.msra.mxu0 %v234
    %1973 = vmatprep.subr.mxu0 %v231
    %1974 = vmatpush1.msra.mxu0 %v230
    %1975 = vmatprep.subr.mxu0 %v227
    %1976 = vmatpush1.msra.mxu0 %v226
    %1977 = vmatprep.subr.mxu0 %v223
    %1978 = vmatpush1.msra.mxu0 %v222
    %1979 = vmatprep.subr.mxu0 %v219
    %1980 = vmatpush1.msra.mxu0 %v218
    %1981 = vmatprep.subr.mxu0 %v215
    %1982 = vmatpush1.msra.mxu0 %v214
    %1983 = vmatprep.subr.mxu0 %v211
    %1984 = vmatpush1.msra.mxu0 %v210
    %1985 = vmatprep.subr.mxu0 %v207
    %1986 = vmatpush1.msra.mxu0 %v206
    %1987 = vmatprep.subr.mxu0 %v203
    %1988 = vmatpush1.msra.mxu0 %v202
    %1989 = vmatprep.subr.mxu0 %v199
    %1990 = vmatpush1.msra.mxu0 %v198
    %1991 = vmatprep.subr.mxu0 %v195
    %1992 = vmatpush1.msra.mxu0 %v194
    %1993 = vmatprep.subr.mxu0 %v191
    %1994 = vmatpush1.msra.mxu0 %v190
    %1995 = vmatprep.subr.mxu0 %v187
    %1996 = vmatpush1.msra.mxu0 %v186
    %1997 = vmatprep.subr.mxu0 %v183
    %1998 = vmatpush1.msra.mxu0 %v182
    %1999 = vmatprep.subr.mxu0 %v179
    %2000 = vmatpush1.msra.mxu0 %v178
    %2001 = vmatprep.subr.mxu0 %v303
    %2002 = vmatpush2.msra.mxu0 %v302
    %2003 = vmatprep.subr.mxu0 %v299
    %2004 = vmatpush2.msra.mxu0 %v298
    %2005 = vmatprep.subr.mxu0 %v295
    %2006 = vmatpush2.msra.mxu0 %v294
    %2007 = vmatprep.subr.mxu0 %v291
    %2008 = vmatpush2.msra.mxu0 %v290
    %2009 = vmatprep.subr.mxu0 %v287
    %2010 = vmatpush2.msra.mxu0 %v286
    %2011 = vmatprep.subr.mxu0 %v283
    %2012 = vmatpush2.msra.mxu0 %v282
    %2013 = vmatprep.subr.mxu0 %v279
    %2014 = vmatpush2.msra.mxu0 %v278
    %2015 = vmatprep.subr.mxu0 %v275
    %2016 = vmatpush2.msra.mxu0 %v274
    %2017 = vmatprep.subr.mxu0 %v271
    %2018 = vmatpush2.msra.mxu0 %v270
    %2019 = vmatprep.subr.mxu0 %v267
    %2020 = vmatpush2.msra.mxu0 %v266
    %2021 = vmatprep.subr.mxu0 %v263
    %2022 = vmatpush2.msra.mxu0 %v262
    %2023 = vmatprep.subr.mxu0 %v259
    %2024 = vmatpush2.msra.mxu0 %v258
    %2025 = vmatprep.subr.mxu0 %v255
    %2026 = vmatpush2.msra.mxu0 %v254
    %2027 = vmatprep.subr.mxu0 %v251
    %2028 = vmatpush2.msra.mxu0 %v250
    %2029 = vmatprep.subr.mxu0 %v247
    %2030 = vmatpush2.msra.mxu0 %v246
    %2031 = vmatprep.subr.mxu0 %v243
    %2032 = vmatpush2.msra.mxu0 %v242
    %2033 = vmatprep.mubr.f32.mxu0 %v1897
    %2034 = vmatmul.mubr.f32.gmra.mxu0 %v1896
    %v2035 = vpop.f32.mrf.mxu0
    %v2036 = vadd.f32 %v514, %v2035
    %v2037 = vpop.f32.mrf.mxu0
    %v2038 = vadd.f32 %v518, %v2037
    %2039 = vdwg.mxu0
    %v2040 = vxor.u32 %v1965, 2147483648
    %v2041 = vmul.f32 %v2040, 1.442695
    %v2042 = vpow.pop %v2041
    %v2043 = vadd.f32 %v2042, 1.0
    %v2044 = vrcp.pop %v2043
    %v2045 = vmul.f32 1.0, %v2044
    %v2046 = vxor.u32 %v1967, 2147483648
    %v2047 = vmul.f32 %v2046, 1.442695
    %v2048 = vpow.pop %v2047
    %v2049 = vadd.f32 %v2048, 1.0
    %v2050 = vrcp.pop %v2049
    %v2051 = vmul.f32 1.0, %v2050
    %v2052 = vtanh.pop %v2036
    %v2053 = vxor.u32 %v2038, 2147483648
    %v2054 = vmul.f32 %v2053, 1.442695
    %v2055 = vpow.pop %v2054
    %v2056 = vadd.f32 %v2055, 1.0
    %v2057 = vrcp.pop %v2056
    %v2058 = vmul.f32 1.0, %v2057
    %v2059 = vmul.f32 %v2051, %v1717
    %v2060 = vmul.f32 %v2045, %v2052
    %v2061 = vadd.f32 %v2059, %v2060
    %v2062 = vtanh.pop %v2061
    %v2063 = vmul.f32 %v2058, %v2062
    %s2064 = scalar_lea.vmem %s5, 32
    %2065 = vst [vmem:[%s2064] sm:$0xff] %v2063
    %s2066 = scalar_lea.vmem %s0, 40
    %v2067 = vld [vmem:[%s2066] sm:$0xff]
    %2068 = vst [vmem:[#allocation2] sm:$0xff] %v2067
    %2069 = vst [vmem:[#allocation2 + $0x8] sm:$0xff] %v1893
    %v2070 = vld [vmem:[#allocation2] sm:$0xff]
    %v2071 = vld [vmem:[#allocation2 + $0x8] sm:$0xff]
    %2072 = vmatprep.subr.mxu0 %v109
    %2073 = vmatpush1.msra.mxu0 %v108
    %2074 = vmatprep.subr.mxu0 %v105
    %2075 = vmatpush1.msra.mxu0 %v104
    %2076 = vmatprep.subr.mxu0 %v101
    %2077 = vmatpush1.msra.mxu0 %v100
    %2078 = vmatprep.subr.mxu0 %v97
    %2079 = vmatpush1.msra.mxu0 %v96
    %2080 = vmatprep.subr.mxu0 %v93
    %2081 = vmatpush1.msra.mxu0 %v92
    %2082 = vmatprep.subr.mxu0 %v89
    %2083 = vmatpush1.msra.mxu0 %v88
    %2084 = vmatprep.subr.mxu0 %v85
    %2085 = vmatpush1.msra.mxu0 %v84
    %2086 = vmatprep.subr.mxu0 %v81
    %2087 = vmatpush1.msra.mxu0 %v80
    %2088 = vmatprep.subr.mxu0 %v77
    %2089 = vmatpush1.msra.mxu0 %v76
    %2090 = vmatprep.subr.mxu0 %v73
    %2091 = vmatpush1.msra.mxu0 %v72
    %2092 = vmatprep.subr.mxu0 %v69
    %2093 = vmatpush1.msra.mxu0 %v68
    %2094 = vmatprep.subr.mxu0 %v65
    %2095 = vmatpush1.msra.mxu0 %v64
    %2096 = vmatprep.subr.mxu0 %v61
    %2097 = vmatpush1.msra.mxu0 %v60
    %2098 = vmatprep.subr.mxu0 %v57
    %2099 = vmatpush1.msra.mxu0 %v56
    %2100 = vmatprep.subr.mxu0 %v53
    %2101 = vmatpush1.msra.mxu0 %v52
    %2102 = vmatprep.subr.mxu0 %v49
    %2103 = vmatpush1.msra.mxu0 %v48
    %2104 = vmatprep.subr.mxu0 %v173
    %2105 = vmatpush2.msra.mxu0 %v172
    %2106 = vmatprep.subr.mxu0 %v169
    %2107 = vmatpush2.msra.mxu0 %v168
    %2108 = vmatprep.subr.mxu0 %v165
    %2109 = vmatpush2.msra.mxu0 %v164
    %2110 = vmatprep.subr.mxu0 %v161
    %2111 = vmatpush2.msra.mxu0 %v160
    %2112 = vmatprep.subr.mxu0 %v157
    %2113 = vmatpush2.msra.mxu0 %v156
    %2114 = vmatprep.subr.mxu0 %v153
    %2115 = vmatpush2.msra.mxu0 %v152
    %2116 = vmatprep.subr.mxu0 %v149
    %2117 = vmatpush2.msra.mxu0 %v148
    %2118 = vmatprep.subr.mxu0 %v145
    %2119 = vmatpush2.msra.mxu0 %v144
    %2120 = vmatprep.subr.mxu0 %v141
    %2121 = vmatpush2.msra.mxu0 %v140
    %2122 = vmatprep.subr.mxu0 %v137
    %2123 = vmatpush2.msra.mxu0 %v136
    %2124 = vmatprep.subr.mxu0 %v133
    %2125 = vmatpush2.msra.mxu0 %v132
    %2126 = vmatprep.subr.mxu0 %v129
    %2127 = vmatpush2.msra.mxu0 %v128
    %2128 = vmatprep.subr.mxu0 %v125
    %2129 = vmatpush2.msra.mxu0 %v124
    %2130 = vmatprep.subr.mxu0 %v121
    %2131 = vmatpush2.msra.mxu0 %v120
    %2132 = vmatprep.subr.mxu0 %v117
    %2133 = vmatpush2.msra.mxu0 %v116
    %2134 = vmatprep.subr.mxu0 %v113
    %2135 = vmatpush2.msra.mxu0 %v112
    %2136 = vmatprep.mubr.f32.mxu0 %v2071
    %2137 = vmatmul.mubr.f32.gmra.mxu0 %v2070
    %v2138 = vpop.f32.mrf.mxu0
    %v2139 = vadd.f32 %v315, %v2138
    %v2140 = vpop.f32.mrf.mxu0
    %v2141 = vadd.f32 %v319, %v2140
    %2142 = vdwg.mxu0
    %2143 = vmatprep.subr.mxu0 %v111
    %2144 = vmatpush1.msra.mxu0 %v110
    %2145 = vmatprep.subr.mxu0 %v107
    %2146 = vmatpush1.msra.mxu0 %v106
    %2147 = vmatprep.subr.mxu0 %v103
    %2148 = vmatpush1.msra.mxu0 %v102
    %2149 = vmatprep.subr.mxu0 %v99
    %2150 = vmatpush1.msra.mxu0 %v98
    %2151 = vmatprep.subr.mxu0 %v95
    %2152 = vmatpush1.msra.mxu0 %v94
    %2153 = vmatprep.subr.mxu0 %v91
    %2154 = vmatpush1.msra.mxu0 %v90
    %2155 = vmatprep.subr.mxu0 %v87
    %2156 = vmatpush1.msra.mxu0 %v86
    %2157 = vmatprep.subr.mxu0 %v83
    %2158 = vmatpush1.msra.mxu0 %v82
    %2159 = vmatprep.subr.mxu0 %v79
    %2160 = vmatpush1.msra.mxu0 %v78
    %2161 = vmatprep.subr.mxu0 %v75
    %2162 = vmatpush1.msra.mxu0 %v74
    %2163 = vmatprep.subr.mxu0 %v71
    %2164 = vmatpush1.msra.mxu0 %v70
    %2165 = vmatprep.subr.mxu0 %v67
    %2166 = vmatpush1.msra.mxu0 %v66
    %2167 = vmatprep.subr.mxu0 %v63
    %2168 = vmatpush1.msra.mxu0 %v62
    %2169 = vmatprep.subr.mxu0 %v59
    %2170 = vmatpush1.msra.mxu0 %v58
    %2171 = vmatprep.subr.mxu0 %v55
    %2172 = vmatpush1.msra.mxu0 %v54
    %2173 = vmatprep.subr.mxu0 %v51
    %2174 = vmatpush1.msra.mxu0 %v50
    %2175 = vmatprep.subr.mxu0 %v175
    %2176 = vmatpush2.msra.mxu0 %v174
    %2177 = vmatprep.subr.mxu0 %v171
    %2178 = vmatpush2.msra.mxu0 %v170
    %2179 = vmatprep.subr.mxu0 %v167
    %2180 = vmatpush2.msra.mxu0 %v166
    %2181 = vmatprep.subr.mxu0 %v163
    %2182 = vmatpush2.msra.mxu0 %v162
    %2183 = vmatprep.subr.mxu0 %v159
    %2184 = vmatpush2.msra.mxu0 %v158
    %2185 = vmatprep.subr.mxu0 %v155
    %2186 = vmatpush2.msra.mxu0 %v154
    %2187 = vmatprep.subr.mxu0 %v151
    %2188 = vmatpush2.msra.mxu0 %v150
    %2189 = vmatprep.subr.mxu0 %v147
    %2190 = vmatpush2.msra.mxu0 %v146
    %2191 = vmatprep.subr.mxu0 %v143
    %2192 = vmatpush2.msra.mxu0 %v142
    %2193 = vmatprep.subr.mxu0 %v139
    %2194 = vmatpush2.msra.mxu0 %v138
    %2195 = vmatprep.subr.mxu0 %v135
    %2196 = vmatpush2.msra.mxu0 %v134
    %2197 = vmatprep.subr.mxu0 %v131
    %2198 = vmatpush2.msra.mxu0 %v130
    %2199 = vmatprep.subr.mxu0 %v127
    %2200 = vmatpush2.msra.mxu0 %v126
    %2201 = vmatprep.subr.mxu0 %v123
    %2202 = vmatpush2.msra.mxu0 %v122
    %2203 = vmatprep.subr.mxu0 %v119
    %2204 = vmatpush2.msra.mxu0 %v118
    %2205 = vmatprep.subr.mxu0 %v115
    %2206 = vmatpush2.msra.mxu0 %v114
    %2207 = vmatprep.mubr.f32.mxu0 %v2071
    %2208 = vmatmul.mubr.f32.gmra.mxu0 %v2070
    %v2209 = vpop.f32.mrf.mxu0
    %v2210 = vadd.f32 %v323, %v2209
    %v2211 = vpop.f32.mrf.mxu0
    %v2212 = vadd.f32 %v327, %v2211
    %2213 = vdwg.mxu0
    %v2214 = vxor.u32 %v2139, 2147483648
    %v2215 = vmul.f32 %v2214, 1.442695
    %v2216 = vpow.pop %v2215
    %v2217 = vadd.f32 %v2216, 1.0
    %v2218 = vrcp.pop %v2217
    %v2219 = vmul.f32 1.0, %v2218
    %v2220 = vxor.u32 %v2141, 2147483648
    %v2221 = vmul.f32 %v2220, 1.442695
    %v2222 = vpow.pop %v2221
    %v2223 = vadd.f32 %v2222, 1.0
    %v2224 = vrcp.pop %v2223
    %v2225 = vmul.f32 1.0, %v2224
    %v2226 = vtanh.pop %v2210
    %v2227 = vxor.u32 %v2212, 2147483648
    %v2228 = vmul.f32 %v2227, 1.442695
    %v2229 = vpow.pop %v2228
    %v2230 = vadd.f32 %v2229, 1.0
    %v2231 = vrcp.pop %v2230
    %v2232 = vmul.f32 1.0, %v2231
    %v2233 = vmul.f32 %v2225, %v1891
    %v2234 = vmul.f32 %v2219, %v2226
    %v2235 = vadd.f32 %v2233, %v2234
    %v2236 = vtanh.pop %v2235
    %v2237 = vmul.f32 %v2232, %v2236
    %2238 = vst [vmem:[#allocation3] sm:$0xff] %v2237
    %2239 = vst [vmem:[#allocation3 + $0x8] sm:$0xff] %v2063
    %v2240 = vld [vmem:[#allocation3] sm:$0xff]
    %v2241 = vld [vmem:[#allocation3 + $0x8] sm:$0xff]
    %2242 = vmatprep.subr.mxu0 %v237
    %2243 = vmatpush1.msra.mxu0 %v236
    %2244 = vmatprep.subr.mxu0 %v233
    %2245 = vmatpush1.msra.mxu0 %v232
    %2246 = vmatprep.subr.mxu0 %v229
    %2247 = vmatpush1.msra.mxu0 %v228
    %2248 = vmatprep.subr.mxu0 %v225
    %2249 = vmatpush1.msra.mxu0 %v224
    %2250 = vmatprep.subr.mxu0 %v221
    %2251 = vmatpush1.msra.mxu0 %v220
    %2252 = vmatprep.subr.mxu0 %v217
    %2253 = vmatpush1.msra.mxu0 %v216
    %2254 = vmatprep.subr.mxu0 %v213
    %2255 = vmatpush1.msra.mxu0 %v212
    %2256 = vmatprep.subr.mxu0 %v209
    %2257 = vmatpush1.msra.mxu0 %v208
    %2258 = vmatprep.subr.mxu0 %v205
    %2259 = vmatpush1.msra.mxu0 %v204
    %2260 = vmatprep.subr.mxu0 %v201
    %2261 = vmatpush1.msra.mxu0 %v200
    %2262 = vmatprep.subr.mxu0 %v197
    %2263 = vmatpush1.msra.mxu0 %v196
    %2264 = vmatprep.subr.mxu0 %v193
    %2265 = vmatpush1.msra.mxu0 %v192
    %2266 = vmatprep.subr.mxu0 %v189
    %2267 = vmatpush1.msra.mxu0 %v188
    %2268 = vmatprep.subr.mxu0 %v185
    %2269 = vmatpush1.msra.mxu0 %v184
    %2270 = vmatprep.subr.mxu0 %v181
    %2271 = vmatpush1.msra.mxu0 %v180
    %2272 = vmatprep.subr.mxu0 %v177
    %2273 = vmatpush1.msra.mxu0 %v176
    %2274 = vmatprep.subr.mxu0 %v301
    %2275 = vmatpush2.msra.mxu0 %v300
    %2276 = vmatprep.subr.mxu0 %v297
    %2277 = vmatpush2.msra.mxu0 %v296
    %2278 = vmatprep.subr.mxu0 %v293
    %2279 = vmatpush2.msra.mxu0 %v292
    %2280 = vmatprep.subr.mxu0 %v289
    %2281 = vmatpush2.msra.mxu0 %v288
    %2282 = vmatprep.subr.mxu0 %v285
    %2283 = vmatpush2.msra.mxu0 %v284
    %2284 = vmatprep.subr.mxu0 %v281
    %2285 = vmatpush2.msra.mxu0 %v280
    %2286 = vmatprep.subr.mxu0 %v277
    %2287 = vmatpush2.msra.mxu0 %v276
    %2288 = vmatprep.subr.mxu0 %v273
    %2289 = vmatpush2.msra.mxu0 %v272
    %2290 = vmatprep.subr.mxu0 %v269
    %2291 = vmatpush2.msra.mxu0 %v268
    %2292 = vmatprep.subr.mxu0 %v265
    %2293 = vmatpush2.msra.mxu0 %v264
    %2294 = vmatprep.subr.mxu0 %v261
    %2295 = vmatpush2.msra.mxu0 %v260
    %2296 = vmatprep.subr.mxu0 %v257
    %2297 = vmatpush2.msra.mxu0 %v256
    %2298 = vmatprep.subr.mxu0 %v253
    %2299 = vmatpush2.msra.mxu0 %v252
    %2300 = vmatprep.subr.mxu0 %v249
    %2301 = vmatpush2.msra.mxu0 %v248
    %2302 = vmatprep.subr.mxu0 %v245
    %2303 = vmatpush2.msra.mxu0 %v244
    %2304 = vmatprep.subr.mxu0 %v241
    %2305 = vmatpush2.msra.mxu0 %v240
    %2306 = vmatprep.mubr.f32.mxu0 %v2241
    %2307 = vmatmul.mubr.f32.gmra.mxu0 %v2240
    %v2308 = vpop.f32.mrf.mxu0
    %v2309 = vadd.f32 %v506, %v2308
    %v2310 = vpop.f32.mrf.mxu0
    %v2311 = vadd.f32 %v510, %v2310
    %2312 = vdwg.mxu0
    %2313 = vmatprep.subr.mxu0 %v239
    %2314 = vmatpush1.msra.mxu0 %v238
    %2315 = vmatprep.subr.mxu0 %v235
    %2316 = vmatpush1.msra.mxu0 %v234
    %2317 = vmatprep.subr.mxu0 %v231
    %2318 = vmatpush1.msra.mxu0 %v230
    %2319 = vmatprep.subr.mxu0 %v227
    %2320 = vmatpush1.msra.mxu0 %v226
    %2321 = vmatprep.subr.mxu0 %v223
    %2322 = vmatpush1.msra.mxu0 %v222
    %2323 = vmatprep.subr.mxu0 %v219
    %2324 = vmatpush1.msra.mxu0 %v218
    %2325 = vmatprep.subr.mxu0 %v215
    %2326 = vmatpush1.msra.mxu0 %v214
    %2327 = vmatprep.subr.mxu0 %v211
    %2328 = vmatpush1.msra.mxu0 %v210
    %2329 = vmatprep.subr.mxu0 %v207
    %2330 = vmatpush1.msra.mxu0 %v206
    %2331 = vmatprep.subr.mxu0 %v203
    %2332 = vmatpush1.msra.mxu0 %v202
    %2333 = vmatprep.subr.mxu0 %v199
    %2334 = vmatpush1.msra.mxu0 %v198
    %2335 = vmatprep.subr.mxu0 %v195
    %2336 = vmatpush1.msra.mxu0 %v194
    %2337 = vmatprep.subr.mxu0 %v191
    %2338 = vmatpush1.msra.mxu0 %v190
    %2339 = vmatprep.subr.mxu0 %v187
    %2340 = vmatpush1.msra.mxu0 %v186
    %2341 = vmatprep.subr.mxu0 %v183
    %2342 = vmatpush1.msra.mxu0 %v182
    %2343 = vmatprep.subr.mxu0 %v179
    %2344 = vmatpush1.msra.mxu0 %v178
    %2345 = vmatprep.subr.mxu0 %v303
    %2346 = vmatpush2.msra.mxu0 %v302
    %2347 = vmatprep.subr.mxu0 %v299
    %2348 = vmatpush2.msra.mxu0 %v298
    %2349 = vmatprep.subr.mxu0 %v295
    %2350 = vmatpush2.msra.mxu0 %v294
    %2351 = vmatprep.subr.mxu0 %v291
    %2352 = vmatpush2.msra.mxu0 %v290
    %2353 = vmatprep.subr.mxu0 %v287
    %2354 = vmatpush2.msra.mxu0 %v286
    %2355 = vmatprep.subr.mxu0 %v283
    %2356 = vmatpush2.msra.mxu0 %v282
    %2357 = vmatprep.subr.mxu0 %v279
    %2358 = vmatpush2.msra.mxu0 %v278
    %2359 = vmatprep.subr.mxu0 %v275
    %2360 = vmatpush2.msra.mxu0 %v274
    %2361 = vmatprep.subr.mxu0 %v271
    %2362 = vmatpush2.msra.mxu0 %v270
    %2363 = vmatprep.subr.mxu0 %v267
    %2364 = vmatpush2.msra.mxu0 %v266
    %2365 = vmatprep.subr.mxu0 %v263
    %2366 = vmatpush2.msra.mxu0 %v262
    %2367 = vmatprep.subr.mxu0 %v259
    %2368 = vmatpush2.msra.mxu0 %v258
    %2369 = vmatprep.subr.mxu0 %v255
    %2370 = vmatpush2.msra.mxu0 %v254
    %2371 = vmatprep.subr.mxu0 %v251
    %2372 = vmatpush2.msra.mxu0 %v250
    %2373 = vmatprep.subr.mxu0 %v247
    %2374 = vmatpush2.msra.mxu0 %v246
    %2375 = vmatprep.subr.mxu0 %v243
    %2376 = vmatpush2.msra.mxu0 %v242
    %2377 = vmatprep.mubr.f32.mxu0 %v2241
    %2378 = vmatmul.mubr.f32.gmra.mxu0 %v2240
    %v2379 = vpop.f32.mrf.mxu0
    %v2380 = vadd.f32 %v514, %v2379
    %v2381 = vpop.f32.mrf.mxu0
    %v2382 = vadd.f32 %v518, %v2381
    %2383 = vdwg.mxu0
    %v2384 = vxor.u32 %v2309, 2147483648
    %v2385 = vmul.f32 %v2384, 1.442695
    %v2386 = vpow.pop %v2385
    %v2387 = vadd.f32 %v2386, 1.0
    %v2388 = vrcp.pop %v2387
    %v2389 = vmul.f32 1.0, %v2388
    %v2390 = vxor.u32 %v2311, 2147483648
    %v2391 = vmul.f32 %v2390, 1.442695
    %v2392 = vpow.pop %v2391
    %v2393 = vadd.f32 %v2392, 1.0
    %v2394 = vrcp.pop %v2393
    %v2395 = vmul.f32 1.0, %v2394
    %v2396 = vtanh.pop %v2380
    %v2397 = vxor.u32 %v2382, 2147483648
    %v2398 = vmul.f32 %v2397, 1.442695
    %v2399 = vpow.pop %v2398
    %v2400 = vadd.f32 %v2399, 1.0
    %v2401 = vrcp.pop %v2400
    %v2402 = vmul.f32 1.0, %v2401
    %v2403 = vmul.f32 %v2395, %v2061
    %v2404 = vmul.f32 %v2389, %v2396
    %v2405 = vadd.f32 %v2403, %v2404
    %v2406 = vtanh.pop %v2405
    %v2407 = vmul.f32 %v2402, %v2406
    %s2408 = scalar_lea.vmem %s5, 40
    %2409 = vst [vmem:[%s2408] sm:$0xff] %v2407
    %s2410 = scalar_lea.vmem %s0, 48
    %v2411 = vld [vmem:[%s2410] sm:$0xff]
    %2412 = vst [vmem:[#allocation2] sm:$0xff] %v2411
    %2413 = vst [vmem:[#allocation2 + $0x8] sm:$0xff] %v2237
    %v2414 = vld [vmem:[#allocation2] sm:$0xff]
    %v2415 = vld [vmem:[#allocation2 + $0x8] sm:$0xff]
    %2416 = vmatprep.subr.mxu0 %v109
    %2417 = vmatpush1.msra.mxu0 %v108
    %2418 = vmatprep.subr.mxu0 %v105
    %2419 = vmatpush1.msra.mxu0 %v104
    %2420 = vmatprep.subr.mxu0 %v101
    %2421 = vmatpush1.msra.mxu0 %v100
    %2422 = vmatprep.subr.mxu0 %v97
    %2423 = vmatpush1.msra.mxu0 %v96
    %2424 = vmatprep.subr.mxu0 %v93
    %2425 = vmatpush1.msra.mxu0 %v92
    %2426 = vmatprep.subr.mxu0 %v89
    %2427 = vmatpush1.msra.mxu0 %v88
    %2428 = vmatprep.subr.mxu0 %v85
    %2429 = vmatpush1.msra.mxu0 %v84
    %2430 = vmatprep.subr.mxu0 %v81
    %2431 = vmatpush1.msra.mxu0 %v80
    %2432 = vmatprep.subr.mxu0 %v77
    %2433 = vmatpush1.msra.mxu0 %v76
    %2434 = vmatprep.subr.mxu0 %v73
    %2435 = vmatpush1.msra.mxu0 %v72
    %2436 = vmatprep.subr.mxu0 %v69
    %2437 = vmatpush1.msra.mxu0 %v68
    %2438 = vmatprep.subr.mxu0 %v65
    %2439 = vmatpush1.msra.mxu0 %v64
    %2440 = vmatprep.subr.mxu0 %v61
    %2441 = vmatpush1.msra.mxu0 %v60
    %2442 = vmatprep.subr.mxu0 %v57
    %2443 = vmatpush1.msra.mxu0 %v56
    %2444 = vmatprep.subr.mxu0 %v53
    %2445 = vmatpush1.msra.mxu0 %v52
    %2446 = vmatprep.subr.mxu0 %v49
    %2447 = vmatpush1.msra.mxu0 %v48
    %2448 = vmatprep.subr.mxu0 %v173
    %2449 = vmatpush2.msra.mxu0 %v172
    %2450 = vmatprep.subr.mxu0 %v169
    %2451 = vmatpush2.msra.mxu0 %v168
    %2452 = vmatprep.subr.mxu0 %v165
    %2453 = vmatpush2.msra.mxu0 %v164
    %2454 = vmatprep.subr.mxu0 %v161
    %2455 = vmatpush2.msra.mxu0 %v160
    %2456 = vmatprep.subr.mxu0 %v157
    %2457 = vmatpush2.msra.mxu0 %v156
    %2458 = vmatprep.subr.mxu0 %v153
    %2459 = vmatpush2.msra.mxu0 %v152
    %2460 = vmatprep.subr.mxu0 %v149
    %2461 = vmatpush2.msra.mxu0 %v148
    %2462 = vmatprep.subr.mxu0 %v145
    %2463 = vmatpush2.msra.mxu0 %v144
    %2464 = vmatprep.subr.mxu0 %v141
    %2465 = vmatpush2.msra.mxu0 %v140
    %2466 = vmatprep.subr.mxu0 %v137
    %2467 = vmatpush2.msra.mxu0 %v136
    %2468 = vmatprep.subr.mxu0 %v133
    %2469 = vmatpush2.msra.mxu0 %v132
    %2470 = vmatprep.subr.mxu0 %v129
    %2471 = vmatpush2.msra.mxu0 %v128
    %2472 = vmatprep.subr.mxu0 %v125
    %2473 = vmatpush2.msra.mxu0 %v124
    %2474 = vmatprep.subr.mxu0 %v121
    %2475 = vmatpush2.msra.mxu0 %v120
    %2476 = vmatprep.subr.mxu0 %v117
    %2477 = vmatpush2.msra.mxu0 %v116
    %2478 = vmatprep.subr.mxu0 %v113
    %2479 = vmatpush2.msra.mxu0 %v112
    %2480 = vmatprep.mubr.f32.mxu0 %v2415
    %2481 = vmatmul.mubr.f32.gmra.mxu0 %v2414
    %v2482 = vpop.f32.mrf.mxu0
    %v2483 = vadd.f32 %v315, %v2482
    %v2484 = vpop.f32.mrf.mxu0
    %v2485 = vadd.f32 %v319, %v2484
    %2486 = vdwg.mxu0
    %2487 = vmatprep.subr.mxu0 %v111
    %2488 = vmatpush1.msra.mxu0 %v110
    %2489 = vmatprep.subr.mxu0 %v107
    %2490 = vmatpush1.msra.mxu0 %v106
    %2491 = vmatprep.subr.mxu0 %v103
    %2492 = vmatpush1.msra.mxu0 %v102
    %2493 = vmatprep.subr.mxu0 %v99
    %2494 = vmatpush1.msra.mxu0 %v98
    %2495 = vmatprep.subr.mxu0 %v95
    %2496 = vmatpush1.msra.mxu0 %v94
    %2497 = vmatprep.subr.mxu0 %v91
    %2498 = vmatpush1.msra.mxu0 %v90
    %2499 = vmatprep.subr.mxu0 %v87
    %2500 = vmatpush1.msra.mxu0 %v86
    %2501 = vmatprep.subr.mxu0 %v83
    %2502 = vmatpush1.msra.mxu0 %v82
    %2503 = vmatprep.subr.mxu0 %v79
    %2504 = vmatpush1.msra.mxu0 %v78
    %2505 = vmatprep.subr.mxu0 %v75
    %2506 = vmatpush1.msra.mxu0 %v74
    %2507 = vmatprep.subr.mxu0 %v71
    %2508 = vmatpush1.msra.mxu0 %v70
    %2509 = vmatprep.subr.mxu0 %v67
    %2510 = vmatpush1.msra.mxu0 %v66
    %2511 = vmatprep.subr.mxu0 %v63
    %2512 = vmatpush1.msra.mxu0 %v62
    %2513 = vmatprep.subr.mxu0 %v59
    %2514 = vmatpush1.msra.mxu0 %v58
    %2515 = vmatprep.subr.mxu0 %v55
    %2516 = vmatpush1.msra.mxu0 %v54
    %2517 = vmatprep.subr.mxu0 %v51
    %2518 = vmatpush1.msra.mxu0 %v50
    %2519 = vmatprep.subr.mxu0 %v175
    %2520 = vmatpush2.msra.mxu0 %v174
    %2521 = vmatprep.subr.mxu0 %v171
    %2522 = vmatpush2.msra.mxu0 %v170
    %2523 = vmatprep.subr.mxu0 %v167
    %2524 = vmatpush2.msra.mxu0 %v166
    %2525 = vmatprep.subr.mxu0 %v163
    %2526 = vmatpush2.msra.mxu0 %v162
    %2527 = vmatprep.subr.mxu0 %v159
    %2528 = vmatpush2.msra.mxu0 %v158
    %2529 = vmatprep.subr.mxu0 %v155
    %2530 = vmatpush2.msra.mxu0 %v154
    %2531 = vmatprep.subr.mxu0 %v151
    %2532 = vmatpush2.msra.mxu0 %v150
    %2533 = vmatprep.subr.mxu0 %v147
    %2534 = vmatpush2.msra.mxu0 %v146
    %2535 = vmatprep.subr.mxu0 %v143
    %2536 = vmatpush2.msra.mxu0 %v142
    %2537 = vmatprep.subr.mxu0 %v139
    %2538 = vmatpush2.msra.mxu0 %v138
    %2539 = vmatprep.subr.mxu0 %v135
    %2540 = vmatpush2.msra.mxu0 %v134
    %2541 = vmatprep.subr.mxu0 %v131
    %2542 = vmatpush2.msra.mxu0 %v130
    %2543 = vmatprep.subr.mxu0 %v127
    %2544 = vmatpush2.msra.mxu0 %v126
    %2545 = vmatprep.subr.mxu0 %v123
    %2546 = vmatpush2.msra.mxu0 %v122
    %2547 = vmatprep.subr.mxu0 %v119
    %2548 = vmatpush2.msra.mxu0 %v118
    %2549 = vmatprep.subr.mxu0 %v115
    %2550 = vmatpush2.msra.mxu0 %v114
    %2551 = vmatprep.mubr.f32.mxu0 %v2415
    %2552 = vmatmul.mubr.f32.gmra.mxu0 %v2414
    %v2553 = vpop.f32.mrf.mxu0
    %v2554 = vadd.f32 %v323, %v2553
    %v2555 = vpop.f32.mrf.mxu0
    %v2556 = vadd.f32 %v327, %v2555
    %2557 = vdwg.mxu0
    %v2558 = vxor.u32 %v2483, 2147483648
    %v2559 = vmul.f32 %v2558, 1.442695
    %v2560 = vpow.pop %v2559
    %v2561 = vadd.f32 %v2560, 1.0
    %v2562 = vrcp.pop %v2561
    %v2563 = vmul.f32 1.0, %v2562
    %v2564 = vxor.u32 %v2485, 2147483648
    %v2565 = vmul.f32 %v2564, 1.442695
    %v2566 = vpow.pop %v2565
    %v2567 = vadd.f32 %v2566, 1.0
    %v2568 = vrcp.pop %v2567
    %v2569 = vmul.f32 1.0, %v2568
    %v2570 = vtanh.pop %v2554
    %v2571 = vxor.u32 %v2556, 2147483648
    %v2572 = vmul.f32 %v2571, 1.442695
    %v2573 = vpow.pop %v2572
    %v2574 = vadd.f32 %v2573, 1.0
    %v2575 = vrcp.pop %v2574
    %v2576 = vmul.f32 1.0, %v2575
    %v2577 = vmul.f32 %v2569, %v2235
    %v2578 = vmul.f32 %v2563, %v2570
    %v2579 = vadd.f32 %v2577, %v2578
    %v2580 = vtanh.pop %v2579
    %v2581 = vmul.f32 %v2576, %v2580
    %2582 = vst [vmem:[#allocation3] sm:$0xff] %v2581
    %2583 = vst [vmem:[#allocation3 + $0x8] sm:$0xff] %v2407
    %v2584 = vld [vmem:[#allocation3] sm:$0xff]
    %v2585 = vld [vmem:[#allocation3 + $0x8] sm:$0xff]
    %2586 = vmatprep.subr.mxu0 %v237
    %2587 = vmatpush1.msra.mxu0 %v236
    %2588 = vmatprep.subr.mxu0 %v233
    %2589 = vmatpush1.msra.mxu0 %v232
    %2590 = vmatprep.subr.mxu0 %v229
    %2591 = vmatpush1.msra.mxu0 %v228
    %2592 = vmatprep.subr.mxu0 %v225
    %2593 = vmatpush1.msra.mxu0 %v224
    %2594 = vmatprep.subr.mxu0 %v221
    %2595 = vmatpush1.msra.mxu0 %v220
    %2596 = vmatprep.subr.mxu0 %v217
    %2597 = vmatpush1.msra.mxu0 %v216
    %2598 = vmatprep.subr.mxu0 %v213
    %2599 = vmatpush1.msra.mxu0 %v212
    %2600 = vmatprep.subr.mxu0 %v209
    %2601 = vmatpush1.msra.mxu0 %v208
    %2602 = vmatprep.subr.mxu0 %v205
    %2603 = vmatpush1.msra.mxu0 %v204
    %2604 = vmatprep.subr.mxu0 %v201
    %2605 = vmatpush1.msra.mxu0 %v200
    %2606 = vmatprep.subr.mxu0 %v197
    %2607 = vmatpush1.msra.mxu0 %v196
    %2608 = vmatprep.subr.mxu0 %v193
    %2609 = vmatpush1.msra.mxu0 %v192
    %2610 = vmatprep.subr.mxu0 %v189
    %2611 = vmatpush1.msra.mxu0 %v188
    %2612 = vmatprep.subr.mxu0 %v185
    %2613 = vmatpush1.msra.mxu0 %v184
    %2614 = vmatprep.subr.mxu0 %v181
    %2615 = vmatpush1.msra.mxu0 %v180
    %2616 = vmatprep.subr.mxu0 %v177
    %2617 = vmatpush1.msra.mxu0 %v176
    %2618 = vmatprep.subr.mxu0 %v301
    %2619 = vmatpush2.msra.mxu0 %v300
    %2620 = vmatprep.subr.mxu0 %v297
    %2621 = vmatpush2.msra.mxu0 %v296
    %2622 = vmatprep.subr.mxu0 %v293
    %2623 = vmatpush2.msra.mxu0 %v292
    %2624 = vmatprep.subr.mxu0 %v289
    %2625 = vmatpush2.msra.mxu0 %v288
    %2626 = vmatprep.subr.mxu0 %v285
    %2627 = vmatpush2.msra.mxu0 %v284
    %2628 = vmatprep.subr.mxu0 %v281
    %2629 = vmatpush2.msra.mxu0 %v280
    %2630 = vmatprep.subr.mxu0 %v277
    %2631 = vmatpush2.msra.mxu0 %v276
    %2632 = vmatprep.subr.mxu0 %v273
    %2633 = vmatpush2.msra.mxu0 %v272
    %2634 = vmatprep.subr.mxu0 %v269
    %2635 = vmatpush2.msra.mxu0 %v268
    %2636 = vmatprep.subr.mxu0 %v265
    %2637 = vmatpush2.msra.mxu0 %v264
    %2638 = vmatprep.subr.mxu0 %v261
    %2639 = vmatpush2.msra.mxu0 %v260
    %2640 = vmatprep.subr.mxu0 %v257
    %2641 = vmatpush2.msra.mxu0 %v256
    %2642 = vmatprep.subr.mxu0 %v253
    %2643 = vmatpush2.msra.mxu0 %v252
    %2644 = vmatprep.subr.mxu0 %v249
    %2645 = vmatpush2.msra.mxu0 %v248
    %2646 = vmatprep.subr.mxu0 %v245
    %2647 = vmatpush2.msra.mxu0 %v244
    %2648 = vmatprep.subr.mxu0 %v241
    %2649 = vmatpush2.msra.mxu0 %v240
    %2650 = vmatprep.mubr.f32.mxu0 %v2585
    %2651 = vmatmul.mubr.f32.gmra.mxu0 %v2584
    %v2652 = vpop.f32.mrf.mxu0
    %v2653 = vadd.f32 %v506, %v2652
    %v2654 = vpop.f32.mrf.mxu0
    %v2655 = vadd.f32 %v510, %v2654
    %2656 = vdwg.mxu0
    %2657 = vmatprep.subr.mxu0 %v239
    %2658 = vmatpush1.msra.mxu0 %v238
    %2659 = vmatprep.subr.mxu0 %v235
    %2660 = vmatpush1.msra.mxu0 %v234
    %2661 = vmatprep.subr.mxu0 %v231
    %2662 = vmatpush1.msra.mxu0 %v230
    %2663 = vmatprep.subr.mxu0 %v227
    %2664 = vmatpush1.msra.mxu0 %v226
    %2665 = vmatprep.subr.mxu0 %v223
    %2666 = vmatpush1.msra.mxu0 %v222
    %2667 = vmatprep.subr.mxu0 %v219
    %2668 = vmatpush1.msra.mxu0 %v218
    %2669 = vmatprep.subr.mxu0 %v215
    %2670 = vmatpush1.msra.mxu0 %v214
    %2671 = vmatprep.subr.mxu0 %v211
    %2672 = vmatpush1.msra.mxu0 %v210
    %2673 = vmatprep.subr.mxu0 %v207
    %2674 = vmatpush1.msra.mxu0 %v206
    %2675 = vmatprep.subr.mxu0 %v203
    %2676 = vmatpush1.msra.mxu0 %v202
    %2677 = vmatprep.subr.mxu0 %v199
    %2678 = vmatpush1.msra.mxu0 %v198
    %2679 = vmatprep.subr.mxu0 %v195
    %2680 = vmatpush1.msra.mxu0 %v194
    %2681 = vmatprep.subr.mxu0 %v191
    %2682 = vmatpush1.msra.mxu0 %v190
    %2683 = vmatprep.subr.mxu0 %v187
    %2684 = vmatpush1.msra.mxu0 %v186
    %2685 = vmatprep.subr.mxu0 %v183
    %2686 = vmatpush1.msra.mxu0 %v182
    %2687 = vmatprep.subr.mxu0 %v179
    %2688 = vmatpush1.msra.mxu0 %v178
    %2689 = vmatprep.subr.mxu0 %v303
    %2690 = vmatpush2.msra.mxu0 %v302
    %2691 = vmatprep.subr.mxu0 %v299
    %2692 = vmatpush2.msra.mxu0 %v298
    %2693 = vmatprep.subr.mxu0 %v295
    %2694 = vmatpush2.msra.mxu0 %v294
    %2695 = vmatprep.subr.mxu0 %v291
    %2696 = vmatpush2.msra.mxu0 %v290
    %2697 = vmatprep.subr.mxu0 %v287
    %2698 = vmatpush2.msra.mxu0 %v286
    %2699 = vmatprep.subr.mxu0 %v283
    %2700 = vmatpush2.msra.mxu0 %v282
    %2701 = vmatprep.subr.mxu0 %v279
    %2702 = vmatpush2.msra.mxu0 %v278
    %2703 = vmatprep.subr.mxu0 %v275
    %2704 = vmatpush2.msra.mxu0 %v274
    %2705 = vmatprep.subr.mxu0 %v271
    %2706 = vmatpush2.msra.mxu0 %v270
    %2707 = vmatprep.subr.mxu0 %v267
    %2708 = vmatpush2.msra.mxu0 %v266
    %2709 = vmatprep.subr.mxu0 %v263
    %2710 = vmatpush2.msra.mxu0 %v262
    %2711 = vmatprep.subr.mxu0 %v259
    %2712 = vmatpush2.msra.mxu0 %v258
    %2713 = vmatprep.subr.mxu0 %v255
    %2714 = vmatpush2.msra.mxu0 %v254
    %2715 = vmatprep.subr.mxu0 %v251
    %2716 = vmatpush2.msra.mxu0 %v250
    %2717 = vmatprep.subr.mxu0 %v247
    %2718 = vmatpush2.msra.mxu0 %v246
    %2719 = vmatprep.subr.mxu0 %v243
    %2720 = vmatpush2.msra.mxu0 %v242
    %2721 = vmatprep.mubr.f32.mxu0 %v2585
    %2722 = vmatmul.mubr.f32.gmra.mxu0 %v2584
    %v2723 = vpop.f32.mrf.mxu0
    %v2724 = vadd.f32 %v514, %v2723
    %v2725 = vpop.f32.mrf.mxu0
    %v2726 = vadd.f32 %v518, %v2725
    %2727 = vdwg.mxu0
    %v2728 = vxor.u32 %v2653, 2147483648
    %v2729 = vmul.f32 %v2728, 1.442695
    %v2730 = vpow.pop %v2729
    %v2731 = vadd.f32 %v2730, 1.0
    %v2732 = vrcp.pop %v2731
    %v2733 = vmul.f32 1.0, %v2732
    %v2734 = vxor.u32 %v2655, 2147483648
    %v2735 = vmul.f32 %v2734, 1.442695
    %v2736 = vpow.pop %v2735
    %v2737 = vadd.f32 %v2736, 1.0
    %v2738 = vrcp.pop %v2737
    %v2739 = vmul.f32 1.0, %v2738
    %v2740 = vtanh.pop %v2724
    %v2741 = vxor.u32 %v2726, 2147483648
    %v2742 = vmul.f32 %v2741, 1.442695
    %v2743 = vpow.pop %v2742
    %v2744 = vadd.f32 %v2743, 1.0
    %v2745 = vrcp.pop %v2744
    %v2746 = vmul.f32 1.0, %v2745
    %v2747 = vmul.f32 %v2739, %v2405
    %v2748 = vmul.f32 %v2733, %v2740
    %v2749 = vadd.f32 %v2747, %v2748
    %v2750 = vtanh.pop %v2749
    %v2751 = vmul.f32 %v2746, %v2750
    %s2752 = scalar_lea.vmem %s5, 48
    %2753 = vst [vmem:[%s2752] sm:$0xff] %v2751
    %s2754 = scalar_lea.vmem %s0, 56
    %v2755 = vld [vmem:[%s2754] sm:$0xff]
    %2756 = vst [vmem:[#allocation2] sm:$0xff] %v2755
    %2757 = vst [vmem:[#allocation2 + $0x8] sm:$0xff] %v2581
    %v2758 = vld [vmem:[#allocation2] sm:$0xff]
    %v2759 = vld [vmem:[#allocation2 + $0x8] sm:$0xff]
    %2760 = vmatprep.subr.mxu0 %v109
    %2761 = vmatpush1.msra.mxu0 %v108
    %2762 = vmatprep.subr.mxu0 %v105
    %2763 = vmatpush1.msra.mxu0 %v104
    %2764 = vmatprep.subr.mxu0 %v101
    %2765 = vmatpush1.msra.mxu0 %v100
    %2766 = vmatprep.subr.mxu0 %v97
    %2767 = vmatpush1.msra.mxu0 %v96
    %2768 = vmatprep.subr.mxu0 %v93
    %2769 = vmatpush1.msra.mxu0 %v92
    %2770 = vmatprep.subr.mxu0 %v89
    %2771 = vmatpush1.msra.mxu0 %v88
    %2772 = vmatprep.subr.mxu0 %v85
    %2773 = vmatpush1.msra.mxu0 %v84
    %2774 = vmatprep.subr.mxu0 %v81
    %2775 = vmatpush1.msra.mxu0 %v80
    %2776 = vmatprep.subr.mxu0 %v77
    %2777 = vmatpush1.msra.mxu0 %v76
    %2778 = vmatprep.subr.mxu0 %v73
    %2779 = vmatpush1.msra.mxu0 %v72
    %2780 = vmatprep.subr.mxu0 %v69
    %2781 = vmatpush1.msra.mxu0 %v68
    %2782 = vmatprep.subr.mxu0 %v65
    %2783 = vmatpush1.msra.mxu0 %v64
    %2784 = vmatprep.subr.mxu0 %v61
    %2785 = vmatpush1.msra.mxu0 %v60
    %2786 = vmatprep.subr.mxu0 %v57
    %2787 = vmatpush1.msra.mxu0 %v56
    %2788 = vmatprep.subr.mxu0 %v53
    %2789 = vmatpush1.msra.mxu0 %v52
    %2790 = vmatprep.subr.mxu0 %v49
    %2791 = vmatpush1.msra.mxu0 %v48
    %2792 = vmatprep.subr.mxu0 %v173
    %2793 = vmatpush2.msra.mxu0 %v172
    %2794 = vmatprep.subr.mxu0 %v169
    %2795 = vmatpush2.msra.mxu0 %v168
    %2796 = vmatprep.subr.mxu0 %v165
    %2797 = vmatpush2.msra.mxu0 %v164
    %2798 = vmatprep.subr.mxu0 %v161
    %2799 = vmatpush2.msra.mxu0 %v160
    %2800 = vmatprep.subr.mxu0 %v157
    %2801 = vmatpush2.msra.mxu0 %v156
    %2802 = vmatprep.subr.mxu0 %v153
    %2803 = vmatpush2.msra.mxu0 %v152
    %2804 = vmatprep.subr.mxu0 %v149
    %2805 = vmatpush2.msra.mxu0 %v148
    %2806 = vmatprep.subr.mxu0 %v145
    %2807 = vmatpush2.msra.mxu0 %v144
    %2808 = vmatprep.subr.mxu0 %v141
    %2809 = vmatpush2.msra.mxu0 %v140
    %2810 = vmatprep.subr.mxu0 %v137
    %2811 = vmatpush2.msra.mxu0 %v136
    %2812 = vmatprep.subr.mxu0 %v133
    %2813 = vmatpush2.msra.mxu0 %v132
    %2814 = vmatprep.subr.mxu0 %v129
    %2815 = vmatpush2.msra.mxu0 %v128
    %2816 = vmatprep.subr.mxu0 %v125
    %2817 = vmatpush2.msra.mxu0 %v124
    %2818 = vmatprep.subr.mxu0 %v121
    %2819 = vmatpush2.msra.mxu0 %v120
    %2820 = vmatprep.subr.mxu0 %v117
    %2821 = vmatpush2.msra.mxu0 %v116
    %2822 = vmatprep.subr.mxu0 %v113
    %2823 = vmatpush2.msra.mxu0 %v112
    %2824 = vmatprep.mubr.f32.mxu0 %v2759
    %2825 = vmatmul.mubr.f32.gmra.mxu0 %v2758
    %v2826 = vpop.f32.mrf.mxu0
    %v2827 = vadd.f32 %v315, %v2826
    %v2828 = vpop.f32.mrf.mxu0
    %v2829 = vadd.f32 %v319, %v2828
    %2830 = vdwg.mxu0
    %2831 = vmatprep.subr.mxu0 %v111
    %2832 = vmatpush1.msra.mxu0 %v110
    %2833 = vmatprep.subr.mxu0 %v107
    %2834 = vmatpush1.msra.mxu0 %v106
    %2835 = vmatprep.subr.mxu0 %v103
    %2836 = vmatpush1.msra.mxu0 %v102
    %2837 = vmatprep.subr.mxu0 %v99
    %2838 = vmatpush1.msra.mxu0 %v98
    %2839 = vmatprep.subr.mxu0 %v95
    %2840 = vmatpush1.msra.mxu0 %v94
    %2841 = vmatprep.subr.mxu0 %v91
    %2842 = vmatpush1.msra.mxu0 %v90
    %2843 = vmatprep.subr.mxu0 %v87
    %2844 = vmatpush1.msra.mxu0 %v86
    %2845 = vmatprep.subr.mxu0 %v83
    %2846 = vmatpush1.msra.mxu0 %v82
    %2847 = vmatprep.subr.mxu0 %v79
    %2848 = vmatpush1.msra.mxu0 %v78
    %2849 = vmatprep.subr.mxu0 %v75
    %2850 = vmatpush1.msra.mxu0 %v74
    %2851 = vmatprep.subr.mxu0 %v71
    %2852 = vmatpush1.msra.mxu0 %v70
    %2853 = vmatprep.subr.mxu0 %v67
    %2854 = vmatpush1.msra.mxu0 %v66
    %2855 = vmatprep.subr.mxu0 %v63
    %2856 = vmatpush1.msra.mxu0 %v62
    %2857 = vmatprep.subr.mxu0 %v59
    %2858 = vmatpush1.msra.mxu0 %v58
    %2859 = vmatprep.subr.mxu0 %v55
    %2860 = vmatpush1.msra.mxu0 %v54
    %2861 = vmatprep.subr.mxu0 %v51
    %2862 = vmatpush1.msra.mxu0 %v50
    %2863 = vmatprep.subr.mxu0 %v175
    %2864 = vmatpush2.msra.mxu0 %v174
    %2865 = vmatprep.subr.mxu0 %v171
    %2866 = vmatpush2.msra.mxu0 %v170
    %2867 = vmatprep.subr.mxu0 %v167
    %2868 = vmatpush2.msra.mxu0 %v166
    %2869 = vmatprep.subr.mxu0 %v163
    %2870 = vmatpush2.msra.mxu0 %v162
    %2871 = vmatprep.subr.mxu0 %v159
    %2872 = vmatpush2.msra.mxu0 %v158
    %2873 = vmatprep.subr.mxu0 %v155
    %2874 = vmatpush2.msra.mxu0 %v154
    %2875 = vmatprep.subr.mxu0 %v151
    %2876 = vmatpush2.msra.mxu0 %v150
    %2877 = vmatprep.subr.mxu0 %v147
    %2878 = vmatpush2.msra.mxu0 %v146
    %2879 = vmatprep.subr.mxu0 %v143
    %2880 = vmatpush2.msra.mxu0 %v142
    %2881 = vmatprep.subr.mxu0 %v139
    %2882 = vmatpush2.msra.mxu0 %v138
    %2883 = vmatprep.subr.mxu0 %v135
    %2884 = vmatpush2.msra.mxu0 %v134
    %2885 = vmatprep.subr.mxu0 %v131
    %2886 = vmatpush2.msra.mxu0 %v130
    %2887 = vmatprep.subr.mxu0 %v127
    %2888 = vmatpush2.msra.mxu0 %v126
    %2889 = vmatprep.subr.mxu0 %v123
    %2890 = vmatpush2.msra.mxu0 %v122
    %2891 = vmatprep.subr.mxu0 %v119
    %2892 = vmatpush2.msra.mxu0 %v118
    %2893 = vmatprep.subr.mxu0 %v115
    %2894 = vmatpush2.msra.mxu0 %v114
    %2895 = vmatprep.mubr.f32.mxu0 %v2759
    %2896 = vmatmul.mubr.f32.gmra.mxu0 %v2758
    %v2897 = vpop.f32.mrf.mxu0
    %v2898 = vadd.f32 %v323, %v2897
    %v2899 = vpop.f32.mrf.mxu0
    %v2900 = vadd.f32 %v327, %v2899
    %2901 = vdwg.mxu0
    %v2902 = vxor.u32 %v2827, 2147483648
    %v2903 = vmul.f32 %v2902, 1.442695
    %v2904 = vpow.pop %v2903
    %v2905 = vadd.f32 %v2904, 1.0
    %v2906 = vrcp.pop %v2905
    %v2907 = vmul.f32 1.0, %v2906
    %v2908 = vxor.u32 %v2829, 2147483648
    %v2909 = vmul.f32 %v2908, 1.442695
    %v2910 = vpow.pop %v2909
    %v2911 = vadd.f32 %v2910, 1.0
    %v2912 = vrcp.pop %v2911
    %v2913 = vmul.f32 1.0, %v2912
    %v2914 = vtanh.pop %v2898
    %v2915 = vxor.u32 %v2900, 2147483648
    %v2916 = vmul.f32 %v2915, 1.442695
    %v2917 = vpow.pop %v2916
    %v2918 = vadd.f32 %v2917, 1.0
    %v2919 = vrcp.pop %v2918
    %v2920 = vmul.f32 1.0, %v2919
    %v2921 = vmul.f32 %v2913, %v2579
    %v2922 = vmul.f32 %v2907, %v2914
    %v2923 = vadd.f32 %v2921, %v2922
    %v2924 = vtanh.pop %v2923
    %v2925 = vmul.f32 %v2920, %v2924
    %2926 = vst [vmem:[#allocation3] sm:$0xff] %v2925
    %2927 = vst [vmem:[#allocation3 + $0x8] sm:$0xff] %v2751
    %v2928 = vld [vmem:[#allocation3] sm:$0xff]
    %v2929 = vld [vmem:[#allocation3 + $0x8] sm:$0xff]
    %2930 = vmatprep.subr.mxu0 %v237
    %2931 = vmatpush1.msra.mxu0 %v236
    %2932 = vmatprep.subr.mxu0 %v233
    %2933 = vmatpush1.msra.mxu0 %v232
    %2934 = vmatprep.subr.mxu0 %v229
    %2935 = vmatpush1.msra.mxu0 %v228
    %2936 = vmatprep.subr.mxu0 %v225
    %2937 = vmatpush1.msra.mxu0 %v224
    %2938 = vmatprep.subr.mxu0 %v221
    %2939 = vmatpush1.msra.mxu0 %v220
    %2940 = vmatprep.subr.mxu0 %v217
    %2941 = vmatpush1.msra.mxu0 %v216
    %2942 = vmatprep.subr.mxu0 %v213
    %2943 = vmatpush1.msra.mxu0 %v212
    %2944 = vmatprep.subr.mxu0 %v209
    %2945 = vmatpush1.msra.mxu0 %v208
    %2946 = vmatprep.subr.mxu0 %v205
    %2947 = vmatpush1.msra.mxu0 %v204
    %2948 = vmatprep.subr.mxu0 %v201
    %2949 = vmatpush1.msra.mxu0 %v200
    %2950 = vmatprep.subr.mxu0 %v197
    %2951 = vmatpush1.msra.mxu0 %v196
    %2952 = vmatprep.subr.mxu0 %v193
    %2953 = vmatpush1.msra.mxu0 %v192
    %2954 = vmatprep.subr.mxu0 %v189
    %2955 = vmatpush1.msra.mxu0 %v188
    %2956 = vmatprep.subr.mxu0 %v185
    %2957 = vmatpush1.msra.mxu0 %v184
    %2958 = vmatprep.subr.mxu0 %v181
    %2959 = vmatpush1.msra.mxu0 %v180
    %2960 = vmatprep.subr.mxu0 %v177
    %2961 = vmatpush1.msra.mxu0 %v176
    %2962 = vmatprep.subr.mxu0 %v301
    %2963 = vmatpush2.msra.mxu0 %v300
    %2964 = vmatprep.subr.mxu0 %v297
    %2965 = vmatpush2.msra.mxu0 %v296
    %2966 = vmatprep.subr.mxu0 %v293
    %2967 = vmatpush2.msra.mxu0 %v292
    %2968 = vmatprep.subr.mxu0 %v289
    %2969 = vmatpush2.msra.mxu0 %v288
    %2970 = vmatprep.subr.mxu0 %v285
    %2971 = vmatpush2.msra.mxu0 %v284
    %2972 = vmatprep.subr.mxu0 %v281
    %2973 = vmatpush2.msra.mxu0 %v280
    %2974 = vmatprep.subr.mxu0 %v277
    %2975 = vmatpush2.msra.mxu0 %v276
    %2976 = vmatprep.subr.mxu0 %v273
    %2977 = vmatpush2.msra.mxu0 %v272
    %2978 = vmatprep.subr.mxu0 %v269
    %2979 = vmatpush2.msra.mxu0 %v268
    %2980 = vmatprep.subr.mxu0 %v265
    %2981 = vmatpush2.msra.mxu0 %v264
    %2982 = vmatprep.subr.mxu0 %v261
    %2983 = vmatpush2.msra.mxu0 %v260
    %2984 = vmatprep.subr.mxu0 %v257
    %2985 = vmatpush2.msra.mxu0 %v256
    %2986 = vmatprep.subr.mxu0 %v253
    %2987 = vmatpush2.msra.mxu0 %v252
    %2988 = vmatprep.subr.mxu0 %v249
    %2989 = vmatpush2.msra.mxu0 %v248
    %2990 = vmatprep.subr.mxu0 %v245
    %2991 = vmatpush2.msra.mxu0 %v244
    %2992 = vmatprep.subr.mxu0 %v241
    %2993 = vmatpush2.msra.mxu0 %v240
    %2994 = vmatprep.mubr.f32.mxu0 %v2929
    %2995 = vmatmul.mubr.f32.gmra.mxu0 %v2928
    %v2996 = vpop.f32.mrf.mxu0
    %v2997 = vadd.f32 %v506, %v2996
    %v2998 = vpop.f32.mrf.mxu0
    %v2999 = vadd.f32 %v510, %v2998
    %3000 = vdwg.mxu0
    %3001 = vmatprep.subr.mxu0 %v239
    %3002 = vmatpush1.msra.mxu0 %v238
    %3003 = vmatprep.subr.mxu0 %v235
    %3004 = vmatpush1.msra.mxu0 %v234
    %3005 = vmatprep.subr.mxu0 %v231
    %3006 = vmatpush1.msra.mxu0 %v230
    %3007 = vmatprep.subr.mxu0 %v227
    %3008 = vmatpush1.msra.mxu0 %v226
    %3009 = vmatprep.subr.mxu0 %v223
    %3010 = vmatpush1.msra.mxu0 %v222
    %3011 = vmatprep.subr.mxu0 %v219
    %3012 = vmatpush1.msra.mxu0 %v218
    %3013 = vmatprep.subr.mxu0 %v215
    %3014 = vmatpush1.msra.mxu0 %v214
    %3015 = vmatprep.subr.mxu0 %v211
    %3016 = vmatpush1.msra.mxu0 %v210
    %3017 = vmatprep.subr.mxu0 %v207
    %3018 = vmatpush1.msra.mxu0 %v206
    %3019 = vmatprep.subr.mxu0 %v203
    %3020 = vmatpush1.msra.mxu0 %v202
    %3021 = vmatprep.subr.mxu0 %v199
    %3022 = vmatpush1.msra.mxu0 %v198
    %3023 = vmatprep.subr.mxu0 %v195
    %3024 = vmatpush1.msra.mxu0 %v194
    %3025 = vmatprep.subr.mxu0 %v191
    %3026 = vmatpush1.msra.mxu0 %v190
    %3027 = vmatprep.subr.mxu0 %v187
    %3028 = vmatpush1.msra.mxu0 %v186
    %3029 = vmatprep.subr.mxu0 %v183
    %3030 = vmatpush1.msra.mxu0 %v182
    %3031 = vmatprep.subr.mxu0 %v179
    %3032 = vmatpush1.msra.mxu0 %v178
    %3033 = vmatprep.subr.mxu0 %v303
    %3034 = vmatpush2.msra.mxu0 %v302
    %3035 = vmatprep.subr.mxu0 %v299
    %3036 = vmatpush2.msra.mxu0 %v298
    %3037 = vmatprep.subr.mxu0 %v295
    %3038 = vmatpush2.msra.mxu0 %v294
    %3039 = vmatprep.subr.mxu0 %v291
    %3040 = vmatpush2.msra.mxu0 %v290
    %3041 = vmatprep.subr.mxu0 %v287
    %3042 = vmatpush2.msra.mxu0 %v286
    %3043 = vmatprep.subr.mxu0 %v283
    %3044 = vmatpush2.msra.mxu0 %v282
    %3045 = vmatprep.subr.mxu0 %v279
    %3046 = vmatpush2.msra.mxu0 %v278
    %3047 = vmatprep.subr.mxu0 %v275
    %3048 = vmatpush2.msra.mxu0 %v274
    %3049 = vmatprep.subr.mxu0 %v271
    %3050 = vmatpush2.msra.mxu0 %v270
    %3051 = vmatprep.subr.mxu0 %v267
    %3052 = vmatpush2.msra.mxu0 %v266
    %3053 = vmatprep.subr.mxu0 %v263
    %3054 = vmatpush2.msra.mxu0 %v262
    %3055 = vmatprep.subr.mxu0 %v259
    %3056 = vmatpush2.msra.mxu0 %v258
    %3057 = vmatprep.subr.mxu0 %v255
    %3058 = vmatpush2.msra.mxu0 %v254
    %3059 = vmatprep.subr.mxu0 %v251
    %3060 = vmatpush2.msra.mxu0 %v250
    %3061 = vmatprep.subr.mxu0 %v247
    %3062 = vmatpush2.msra.mxu0 %v246
    %3063 = vmatprep.subr.mxu0 %v243
    %3064 = vmatpush2.msra.mxu0 %v242
    %3065 = vmatprep.mubr.f32.mxu0 %v2929
    %3066 = vmatmul.mubr.f32.gmra.mxu0 %v2928
    %v3067 = vpop.f32.mrf.mxu0
    %v3068 = vadd.f32 %v514, %v3067
    %v3069 = vpop.f32.mrf.mxu0
    %v3070 = vadd.f32 %v518, %v3069
    %3071 = vdwg.mxu0
    %v3072 = vxor.u32 %v2997, 2147483648
    %v3073 = vmul.f32 %v3072, 1.442695
    %v3074 = vpow.pop %v3073
    %v3075 = vadd.f32 %v3074, 1.0
    %v3076 = vrcp.pop %v3075
    %v3077 = vmul.f32 1.0, %v3076
    %v3078 = vxor.u32 %v2999, 2147483648
    %v3079 = vmul.f32 %v3078, 1.442695
    %v3080 = vpow.pop %v3079
    %v3081 = vadd.f32 %v3080, 1.0
    %v3082 = vrcp.pop %v3081
    %v3083 = vmul.f32 1.0, %v3082
    %v3084 = vtanh.pop %v3068
    %v3085 = vxor.u32 %v3070, 2147483648
    %v3086 = vmul.f32 %v3085, 1.442695
    %v3087 = vpow.pop %v3086
    %v3088 = vadd.f32 %v3087, 1.0
    %v3089 = vrcp.pop %v3088
    %v3090 = vmul.f32 1.0, %v3089
    %v3091 = vmul.f32 %v3083, %v2749
    %v3092 = vmul.f32 %v3077, %v3084
    %v3093 = vadd.f32 %v3091, %v3092
    %v3094 = vtanh.pop %v3093
    %v3095 = vmul.f32 %v3090, %v3094
    %s3096 = scalar_lea.vmem %s5, 56
    %3097 = vst [vmem:[%s3096] sm:$0xff] %v3095
    // Predicated region
    $region30: #{decoder_rnn_forward.2} parent=1 // pred_check
      _
    $region31: #{decoder_rnn_forward.2} parent=1 // pred_check_branch
      %3099 = sbr.rel (0) target = $region33
    $region32: #{decoder_rnn_forward.2} parent=1 // pred_region
      _
    $region33: #{decoder_rnn_forward.2} parent=1 // pred_fallthru
      _
    // Predicated region
    $region34: #{decoder_rnn_forward.2} parent=1 // pred_check
      _
    $region35: #{decoder_rnn_forward.2} parent=1 // pred_check_branch
      %3101 = sbr.rel (0) target = $region37
    $region36: #{decoder_rnn_forward.2} parent=1 // pred_region
      _
    $region37: #{decoder_rnn_forward.2} parent=1 // pred_fallthru
      _
    %3102 = vsyncpa [#allocation5], 1
    %3103 = vsyncpa [#allocation7], 1

</llo_original>
